<compile_context>
chip_gen: v5e
topology: v5e:2x2
jax: 0.10.0
libtpu: 0.0.40
codegen_flags: <defaults>
</compile_context>

<pallas_src>
import functools

import jax
import jax.numpy as jnp
from jax.experimental import pallas as pl
from jax.experimental.pallas import tpu as pltpu

# Static architecture constants (pinned by the PyTorch module).
C_IN, H_IN, W_IN = 4, 84, 84
C1, K1, S1 = 16, 8, 4            # conv1: 4 -> 16, k8 s4  => 20x20
C2, K2, S2 = 32, 4, 2            # conv2: 16 -> 32, k4 s2 => 9x9
OH2 = 9                          # conv2 output edge
P2 = OH2 * OH2                   # 81 conv2 output positions (kept UNPADDED)
Q2 = K2 * K2                     # 16 conv2 taps (kh2, kw2)
KF1 = C_IN * K1 * K1             # 256 conv1 patch features (c, kh1, kw1)
FC1_OUT = 256
LANE = 128                       # TPU lane width (fc2 output padded to this)
N_STEPS = 2                      # fc1 weight streamed in 2 chunks (keep "arbitrary")
CH_PER_STEP = C2 // N_STEPS      # 16 conv2 channels of fc1 handled per grid step


# ----------------------------------------------------------------------------
# Fused kernel: conv1 + conv2 + fc1 + fc2, everything VMEM-resident.
# ----------------------------------------------------------------------------
def _policy_cnn_kernel(cols_ref, wpack_ref, b12_ref, bfc_ref, wf1_ref,
                       out_ref, x2_scr, acc_scr):
    step = pl.program_id(0)

    # ---- step 0: conv1 (16 per-tap matmuls) + conv2 (single matmul) ---------
    @pl.when(step == 0)
    def _convs():
        w1 = wpack_ref[0:C1, :]                         # (16, 256) bf16
        b1 = b12_ref[0:C1, :]                           # (16, 1)   f32
        taps = []
        for q in range(Q2):
            # conv1 patches of the conv1-output pixels that conv2 tap q reads.
            hq = jnp.dot(w1, cols_ref[q],               # (16,256)@(256,81)
                         preferred_element_type=jnp.float32)
            taps.append(jnp.maximum(hq + b1, 0.0).astype(jnp.bfloat16))
        h = jnp.concatenate(taps, axis=0)               # (256, 81) bf16, row = q*16+c1

        w2 = wpack_ref[C1:C1 + C2, :]                   # (32, 256) bf16
        b2 = b12_ref[C1:C1 + C2, :]                     # (32, 1)   f32
        x2 = jnp.dot(w2, h, preferred_element_type=jnp.float32)   # (32, 81)
        x2_scr[...] = jnp.maximum(x2 + b2, 0.0)         # relu(conv2), (c2, p)
        acc_scr[...] = jnp.zeros_like(acc_scr)

    # ---- fc1 partial: CH_PER_STEP conv2 channels per grid step --------------
    # (the matching bf16 weight slab wf1_ref is streamed in by the BlockSpec)
    c0 = pl.multiple_of(step * CH_PER_STEP, CH_PER_STEP)
    blk = x2_scr[pl.ds(c0, CH_PER_STEP), :].astype(jnp.bfloat16)   # (16, 81)
    acc = acc_scr[...]
    for cc in range(CH_PER_STEP):
        acc = acc + jnp.dot(blk[cc:cc + 1, :], wf1_ref[cc],        # (1,81)@(81,256)
                            preferred_element_type=jnp.float32)
    acc_scr[...] = acc

    # ---- last step: fc1 bias + relu, then fc2 (output padded to 128 lanes) --
    @pl.when(step == pl.num_programs(0) - 1)
    def _head():
        bf1 = bfc_ref[0:1, :]                            # (1, 256) f32
        bf2 = bfc_ref[1:2, 0:LANE]                       # (1, 128) f32
        hfc = jnp.maximum(acc + bf1, 0.0).astype(jnp.bfloat16)     # (1, 256)
        wf2t = wpack_ref[C1 + C2:C1 + C2 + LANE, :]      # (128, 256) bf16 = fc2_w^T (padded)
        qv = jax.lax.dot_general(hfc, wf2t,
                                 (((1,), (1,)), ((), ())),
                                 preferred_element_type=jnp.float32)  # (1, 128)
        out_ref[...] = qv + bf2


# ----------------------------------------------------------------------------
# Wrapper-side input prep (XLA): conv1-patch blocks, one per conv2 tap.
# Gather-free: built only from stride-8 static slices of a bf16 image.
# ----------------------------------------------------------------------------
def _conv1_patch_blocks(obs):
    """(1,4,84,84) f32 -> (16, 256, 81) bf16.

    cols[q, f, p] = obs[0, c, 8*oh2 + 4*kh2 + kh1, 8*ow2 + 4*kw2 + kw1]
    with q = kh2*4 + kw2, f = c*64 + kh1*8 + kw1, p = oh2*9 + ow2,
    i.e. the conv1 patch at the conv1-output pixel that conv2 tap (kh2, kw2)
    reads for its output pixel (oh2, ow2).  Pre-folds conv2's im2col so the
    kernel needs no gathers / reshapes at all.
    """
    img = obs[0].astype(jnp.bfloat16)                    # (4, 84, 84)
    n_start = S1 * (K2 - 1) + K1                         # 20 distinct row/col starts
    span = S2 * S1 * (OH2 - 1) + 1                       # 65
    stride = S2 * S1                                     # 8
    # rows[s, c, oh2, w]      = img[c, 8*oh2 + s, w]
    rows = jnp.stack([img[:, s:s + span:stride, :] for s in range(n_start)], axis=0)
    # grid[t, s, c, oh2, ow2] = img[c, 8*oh2 + s, 8*ow2 + t]
    grid = jnp.stack([rows[:, :, :, s:s + span:stride] for s in range(n_start)], axis=0)
    blocks = []
    for kh2 in range(K2):
        for kw2 in range(K2):
            blk = grid[S1 * kw2:S1 * kw2 + K1, S1 * kh2:S1 * kh2 + K1]  # (kw1,kh1,c,oh2,ow2)
            blk = blk.transpose(2, 1, 0, 3, 4)                          # (c,kh1,kw1,oh2,ow2)
            blocks.append(blk.reshape(KF1, P2))
    return jnp.stack(blocks, axis=0)                                    # (16, 256, 81)


# ----------------------------------------------------------------------------
# One-time repack of PyTorch-layout params into kernel layouts.
# ----------------------------------------------------------------------------
def prepare_params(params):
    num_actions = params["fc2_b"].shape[0]
    assert num_actions <= LANE
    # conv1 weight as (16, 256), row-major (c, kh1, kw1) features.
    w1 = params["conv1_w"].reshape(C1, KF1)
    # conv2 weight as (32, 256), contraction index = (kh2*4 + kw2)*16 + c1.
    w2 = params["conv2_w"].transpose(0, 2, 3, 1).reshape(C2, Q2 * C1)
    # fc2 weight transposed and row-padded to 128 so it can share wpack's lanes.
    wf2t = jnp.pad(params["fc2_w"].T, ((0, LANE - num_actions), (0, 0)))   # (128, 256)
    wpack = jnp.concatenate([w1, w2, wf2t], axis=0).astype(jnp.bfloat16)   # (176, 256)
    b12 = jnp.concatenate([params["conv1_b"], params["conv2_b"]]
                          ).reshape(C1 + C2, 1).astype(jnp.float32)        # (48, 1)
    bfc = jnp.stack([params["fc1_b"],
                     jnp.pad(params["fc2_b"], (0, FC1_OUT - num_actions))]
                    ).astype(jnp.float32)                                  # (2, 256)
    # fc1 weight: (32*81, 256) -> (32, 81, 256) bf16, UNPADDED position dim.
    wf1 = params["fc1_w"].reshape(C2, P2, FC1_OUT).astype(jnp.bfloat16)
    return {"wpack": wpack, "b12": b12, "bfc": bfc, "wf1": wf1}


# ----------------------------------------------------------------------------
# Forward
# ----------------------------------------------------------------------------
def policy_cnn_forward(packed, obs, *, num_actions):
    cols = _conv1_patch_blocks(obs)
    q_pad = pl.pallas_call(
        _policy_cnn_kernel,
        out_shape=jax.ShapeDtypeStruct((1, LANE), jnp.float32),
        grid=(N_STEPS,),
        in_specs=[
            pl.BlockSpec((Q2, KF1, P2), lambda i: (0, 0, 0)),              # cols
            pl.BlockSpec((C1 + C2 + LANE, KF1), lambda i: (0, 0)),         # wpack
            pl.BlockSpec((C1 + C2, 1), lambda i: (0, 0)),                  # conv biases
            pl.BlockSpec((2, FC1_OUT), lambda i: (0, 0)),                  # fc biases
            pl.BlockSpec((CH_PER_STEP, P2, FC1_OUT), lambda i: (i, 0, 0)), # wf1 (streamed)
        ],
        out_specs=pl.BlockSpec((1, LANE), lambda i: (0, 0)),
        scratch_shapes=[
            pltpu.VMEM((C2, P2), jnp.float32),     # relu(conv2), (c2, position)
            pltpu.VMEM((1, FC1_OUT), jnp.float32), # fc1 accumulator (carried; grid must stay sequential)
        ],
        compiler_params=pltpu.CompilerParams(
            dimension_semantics=("arbitrary",)),   # acc carry -> never "parallel"
    )(cols, packed["wpack"], packed["b12"], packed["bfc"], packed["wf1"])
    return q_pad[:, :num_actions]


# ----------------------------------------------------------------------------
# Params (PyTorch default-style init) and a pure-JAX f32 reference.
# ----------------------------------------------------------------------------
def init_params(key, num_actions):
    ks = jax.random.split(key, 8)

    def u(k, shape, fan_in):
        bound = 1.0 / jnp.sqrt(jnp.float32(fan_in))
        return jax.random.uniform(k, shape, jnp.float32, -bound, bound)

    return {
        "conv1_w": u(ks[0], (16, 4, 8, 8), 4 * 8 * 8),
        "conv1_b": u(ks[1], (16,), 4 * 8 * 8),
        "conv2_w": u(ks[2], (32, 16, 4, 4), 16 * 4 * 4),
        "conv2_b": u(ks[3], (32,), 16 * 4 * 4),
        # fc weights stored as (in, out) == torch (out, in).T
        "fc1_w": u(ks[4], (32 * 9 * 9, 256), 32 * 9 * 9),
        "fc1_b": u(ks[5], (256,), 32 * 9 * 9),
        "fc2_w": u(ks[6], (256, num_actions), 256),
        "fc2_b": u(ks[7], (num_actions,), 256),
    }


def reference_forward(params, obs):
    x = jax.lax.conv_general_dilated(
        obs, params["conv1_w"], window_strides=(S1, S1), padding="VALID",
        dimension_numbers=("NCHW", "OIHW", "NCHW"))
    x = jax.nn.relu(x + params["conv1_b"].reshape(1, -1, 1, 1))
    x = jax.lax.conv_general_dilated(
        x, params["conv2_w"], window_strides=(S2, S2), padding="VALID",
        dimension_numbers=("NCHW", "OIHW", "NCHW"))
    x = jax.nn.relu(x + params["conv2_b"].reshape(1, -1, 1, 1))
    x = x.reshape(1, -1)
    x = jax.nn.relu(x @ params["fc1_w"] + params["fc1_b"])
    return x @ params["fc2_w"] + params["fc2_b"]


if __name__ == "__main__":
    num_actions = 6   # epsilon from the torch __init__ is unused in forward
    key = jax.random.PRNGKey(0)
    pkey, okey = jax.random.split(key)
    params = init_params(pkey, num_actions)
    packed = prepare_params(params)

    # fc1's in-features (32*9*9) pin the observation to Atari-style (1,4,84,84).
    obs = jax.random.normal(okey, (1, C_IN, H_IN, W_IN), dtype=jnp.float32)

    fwd = jax.jit(functools.partial(policy_cnn_forward, num_actions=num_actions))
    q_values = fwd(packed, obs)
    jax.block_until_ready(q_values)

    assert q_values.shape == (1, num_actions), q_values.shape
    assert q_values.dtype == jnp.float32

    # Numerical check vs. a pure-JAX f32 reference of the torch forward
    # (loose tolerance: patches and all matmul weights are deliberately bf16).
    q_ref = reference_forward(params, obs)
    assert jnp.allclose(q_values, q_ref, rtol=1e-1, atol=5e-2), (q_values, q_ref)

    print("KERNEL_OK")
</pallas_src>

<mosaic_0001>
module attributes {stable_mosaic.version = 11 : i64} {
  func.func @_policy_cnn_kernel(%arg0: i32, %arg1: memref<16x256x81xbf16, #tpu.memory_space<vmem>>, %arg2: memref<176x256xbf16, #tpu.memory_space<vmem>>, %arg3: memref<48x1xf32, #tpu.memory_space<vmem>>, %arg4: memref<2x256xf32, #tpu.memory_space<vmem>>, %arg5: memref<16x81x256xbf16, #tpu.memory_space<vmem>>, %arg6: memref<1x128xf32, #tpu.memory_space<vmem>>, %arg7: memref<32x81xf32, #tpu.memory_space<vmem>>, %arg8: memref<1x256xf32, #tpu.memory_space<vmem>>) attributes {dimension_semantics = [#tpu.dimension_semantics<arbitrary>], iteration_bounds = array<i64: 2>, scalar_prefetch = 0 : i64, scratch_operands = 2 : i64, tpu.core_type = #tpu.core_type<tc>, window_params = [{pipeline_mode = #tpu.pipeline_mode<synchronous>, transform_indices = @transform_0, window_bounds = array<i64: 16, 256, 81>}, {pipeline_mode = #tpu.pipeline_mode<synchronous>, transform_indices = @transform_1, window_bounds = array<i64: 176, 256>}, {pipeline_mode = #tpu.pipeline_mode<synchronous>, transform_indices = @transform_2, window_bounds = array<i64: 48, 1>}, {pipeline_mode = #tpu.pipeline_mode<synchronous>, transform_indices = @transform_3, window_bounds = array<i64: 2, 256>}, {transform_indices = @transform_4, window_bounds = array<i64: 16, 81, 256>}, {pipeline_mode = #tpu.pipeline_mode<synchronous>, transform_indices = @transform_5, window_bounds = array<i64: 1, 128>}]} {
    %c0_i32 = arith.constant 0 : i32
    %0 = arith.cmpi eq, %arg0, %c0_i32 : i32
    %1 = arith.extui %0 : i1 to i32
    %c0_i32_0 = arith.constant 0 : i32
    %2 = arith.cmpi ne, %1, %c0_i32_0 : i32
    scf.if %2 {
      %c0_54 = arith.constant 0 : index
      %c0_55 = arith.constant 0 : index
      %93 = vector.load %arg2[%c0_54, %c0_55] : memref<176x256xbf16, #tpu.memory_space<vmem>>, vector<16x256xbf16>
      %c0_56 = arith.constant 0 : index
      %c0_57 = arith.constant 0 : index
      %94 = vector.load %arg3[%c0_56, %c0_57] : memref<48x1xf32, #tpu.memory_space<vmem>>, vector<16x1xf32>
      %c0_58 = arith.constant 0 : index
      %c0_59 = arith.constant 0 : index
      %c0_60 = arith.constant 0 : index
      %95 = vector.load %arg1[%c0_58, %c0_59, %c0_60] : memref<16x256x81xbf16, #tpu.memory_space<vmem>>, vector<1x256x81xbf16>
      %96 = vector.shape_cast %95 : vector<1x256x81xbf16> to vector<256x81xbf16>
      %cst_61 = arith.constant dense<0.000000e+00> : vector<16x81xf32>
      %97 = tpu.matmul %93, %96, %cst_61 {dimension_numbers = #tpu.dot_dimension_numbers<[1], [0], [0], [1], [0, 0, 1, 1], [], []>} : vector<16x256xbf16>, vector<256x81xbf16>, vector<16x81xf32> -> vector<16x81xf32>
      %98 = vector.broadcast %94 : vector<16x1xf32> to vector<16x81xf32>
      %99 = arith.addf %97, %98 : vector<16x81xf32>
      %cst_62 = arith.constant 0.000000e+00 : f32
      %100 = vector.broadcast %cst_62 : f32 to vector<16x81xf32>
      %101 = arith.maximumf %99, %100 : vector<16x81xf32>
      %102 = arith.truncf %101 : vector<16x81xf32> to vector<16x81xbf16>
      %c1_63 = arith.constant 1 : index
      %c0_64 = arith.constant 0 : index
      %c0_65 = arith.constant 0 : index
      %103 = vector.load %arg1[%c1_63, %c0_64, %c0_65] : memref<16x256x81xbf16, #tpu.memory_space<vmem>>, vector<1x256x81xbf16>
      %104 = vector.shape_cast %103 : vector<1x256x81xbf16> to vector<256x81xbf16>
      %cst_66 = arith.constant dense<0.000000e+00> : vector<16x81xf32>
      %105 = tpu.matmul %93, %104, %cst_66 {dimension_numbers = #tpu.dot_dimension_numbers<[1], [0], [0], [1], [0, 0, 1, 1], [], []>} : vector<16x256xbf16>, vector<256x81xbf16>, vector<16x81xf32> -> vector<16x81xf32>
      %106 = vector.broadcast %94 : vector<16x1xf32> to vector<16x81xf32>
      %107 = arith.addf %105, %106 : vector<16x81xf32>
      %cst_67 = arith.constant 0.000000e+00 : f32
      %108 = vector.broadcast %cst_67 : f32 to vector<16x81xf32>
      %109 = arith.maximumf %107, %108 : vector<16x81xf32>
      %110 = arith.truncf %109 : vector<16x81xf32> to vector<16x81xbf16>
      %c2_68 = arith.constant 2 : index
      %c0_69 = arith.constant 0 : index
      %c0_70 = arith.constant 0 : index
      %111 = vector.load %arg1[%c2_68, %c0_69, %c0_70] : memref<16x256x81xbf16, #tpu.memory_space<vmem>>, vector<1x256x81xbf16>
      %112 = vector.shape_cast %111 : vector<1x256x81xbf16> to vector<256x81xbf16>
      %cst_71 = arith.constant dense<0.000000e+00> : vector<16x81xf32>
      %113 = tpu.matmul %93, %112, %cst_71 {dimension_numbers = #tpu.dot_dimension_numbers<[1], [0], [0], [1], [0, 0, 1, 1], [], []>} : vector<16x256xbf16>, vector<256x81xbf16>, vector<16x81xf32> -> vector<16x81xf32>
      %114 = vector.broadcast %94 : vector<16x1xf32> to vector<16x81xf32>
      %115 = arith.addf %113, %114 : vector<16x81xf32>
      %cst_72 = arith.constant 0.000000e+00 : f32
      %116 = vector.broadcast %cst_72 : f32 to vector<16x81xf32>
      %117 = arith.maximumf %115, %116 : vector<16x81xf32>
      %118 = arith.truncf %117 : vector<16x81xf32> to vector<16x81xbf16>
      %c3_73 = arith.constant 3 : index
      %c0_74 = arith.constant 0 : index
      %c0_75 = arith.constant 0 : index
      %119 = vector.load %arg1[%c3_73, %c0_74, %c0_75] : memref<16x256x81xbf16, #tpu.memory_space<vmem>>, vector<1x256x81xbf16>
      %120 = vector.shape_cast %119 : vector<1x256x81xbf16> to vector<256x81xbf16>
      %cst_76 = arith.constant dense<0.000000e+00> : vector<16x81xf32>
      %121 = tpu.matmul %93, %120, %cst_76 {dimension_numbers = #tpu.dot_dimension_numbers<[1], [0], [0], [1], [0, 0, 1, 1], [], []>} : vector<16x256xbf16>, vector<256x81xbf16>, vector<16x81xf32> -> vector<16x81xf32>
      %122 = vector.broadcast %94 : vector<16x1xf32> to vector<16x81xf32>
      %123 = arith.addf %121, %122 : vector<16x81xf32>
      %cst_77 = arith.constant 0.000000e+00 : f32
      %124 = vector.broadcast %cst_77 : f32 to vector<16x81xf32>
      %125 = arith.maximumf %123, %124 : vector<16x81xf32>
      %126 = arith.truncf %125 : vector<16x81xf32> to vector<16x81xbf16>
      %c4_78 = arith.constant 4 : index
      %c0_79 = arith.constant 0 : index
      %c0_80 = arith.constant 0 : index
      %127 = vector.load %arg1[%c4_78, %c0_79, %c0_80] : memref<16x256x81xbf16, #tpu.memory_space<vmem>>, vector<1x256x81xbf16>
      %128 = vector.shape_cast %127 : vector<1x256x81xbf16> to vector<256x81xbf16>
      %cst_81 = arith.constant dense<0.000000e+00> : vector<16x81xf32>
      %129 = tpu.matmul %93, %128, %cst_81 {dimension_numbers = #tpu.dot_dimension_numbers<[1], [0], [0], [1], [0, 0, 1, 1], [], []>} : vector<16x256xbf16>, vector<256x81xbf16>, vector<16x81xf32> -> vector<16x81xf32>
      %130 = vector.broadcast %94 : vector<16x1xf32> to vector<16x81xf32>
      %131 = arith.addf %129, %130 : vector<16x81xf32>
      %cst_82 = arith.constant 0.000000e+00 : f32
      %132 = vector.broadcast %cst_82 : f32 to vector<16x81xf32>
      %133 = arith.maximumf %131, %132 : vector<16x81xf32>
      %134 = arith.truncf %133 : vector<16x81xf32> to vector<16x81xbf16>
      %c5_83 = arith.constant 5 : index
      %c0_84 = arith.constant 0 : index
      %c0_85 = arith.constant 0 : index
      %135 = vector.load %arg1[%c5_83, %c0_84, %c0_85] : memref<16x256x81xbf16, #tpu.memory_space<vmem>>, vector<1x256x81xbf16>
      %136 = vector.shape_cast %135 : vector<1x256x81xbf16> to vector<256x81xbf16>
      %cst_86 = arith.constant dense<0.000000e+00> : vector<16x81xf32>
      %137 = tpu.matmul %93, %136, %cst_86 {dimension_numbers = #tpu.dot_dimension_numbers<[1], [0], [0], [1], [0, 0, 1, 1], [], []>} : vector<16x256xbf16>, vector<256x81xbf16>, vector<16x81xf32> -> vector<16x81xf32>
      %138 = vector.broadcast %94 : vector<16x1xf32> to vector<16x81xf32>
      %139 = arith.addf %137, %138 : vector<16x81xf32>
      %cst_87 = arith.constant 0.000000e+00 : f32
      %140 = vector.broadcast %cst_87 : f32 to vector<16x81xf32>
      %141 = arith.maximumf %139, %140 : vector<16x81xf32>
      %142 = arith.truncf %141 : vector<16x81xf32> to vector<16x81xbf16>
      %c6_88 = arith.constant 6 : index
      %c0_89 = arith.constant 0 : index
      %c0_90 = arith.constant 0 : index
      %143 = vector.load %arg1[%c6_88, %c0_89, %c0_90] : memref<16x256x81xbf16, #tpu.memory_space<vmem>>, vector<1x256x81xbf16>
      %144 = vector.shape_cast %143 : vector<1x256x81xbf16> to vector<256x81xbf16>
      %cst_91 = arith.constant dense<0.000000e+00> : vector<16x81xf32>
      %145 = tpu.matmul %93, %144, %cst_91 {dimension_numbers = #tpu.dot_dimension_numbers<[1], [0], [0], [1], [0, 0, 1, 1], [], []>} : vector<16x256xbf16>, vector<256x81xbf16>, vector<16x81xf32> -> vector<16x81xf32>
      %146 = vector.broadcast %94 : vector<16x1xf32> to vector<16x81xf32>
      %147 = arith.addf %145, %146 : vector<16x81xf32>
      %cst_92 = arith.constant 0.000000e+00 : f32
      %148 = vector.broadcast %cst_92 : f32 to vector<16x81xf32>
      %149 = arith.maximumf %147, %148 : vector<16x81xf32>
      %150 = arith.truncf %149 : vector<16x81xf32> to vector<16x81xbf16>
      %c7_93 = arith.constant 7 : index
      %c0_94 = arith.constant 0 : index
      %c0_95 = arith.constant 0 : index
      %151 = vector.load %arg1[%c7_93, %c0_94, %c0_95] : memref<16x256x81xbf16, #tpu.memory_space<vmem>>, vector<1x256x81xbf16>
      %152 = vector.shape_cast %151 : vector<1x256x81xbf16> to vector<256x81xbf16>
      %cst_96 = arith.constant dense<0.000000e+00> : vector<16x81xf32>
      %153 = tpu.matmul %93, %152, %cst_96 {dimension_numbers = #tpu.dot_dimension_numbers<[1], [0], [0], [1], [0, 0, 1, 1], [], []>} : vector<16x256xbf16>, vector<256x81xbf16>, vector<16x81xf32> -> vector<16x81xf32>
      %154 = vector.broadcast %94 : vector<16x1xf32> to vector<16x81xf32>
      %155 = arith.addf %153, %154 : vector<16x81xf32>
      %cst_97 = arith.constant 0.000000e+00 : f32
      %156 = vector.broadcast %cst_97 : f32 to vector<16x81xf32>
      %157 = arith.maximumf %155, %156 : vector<16x81xf32>
      %158 = arith.truncf %157 : vector<16x81xf32> to vector<16x81xbf16>
      %c8_98 = arith.constant 8 : index
      %c0_99 = arith.constant 0 : index
      %c0_100 = arith.constant 0 : index
      %159 = vector.load %arg1[%c8_98, %c0_99, %c0_100] : memref<16x256x81xbf16, #tpu.memory_space<vmem>>, vector<1x256x81xbf16>
      %160 = vector.shape_cast %159 : vector<1x256x81xbf16> to vector<256x81xbf16>
      %cst_101 = arith.constant dense<0.000000e+00> : vector<16x81xf32>
      %161 = tpu.matmul %93, %160, %cst_101 {dimension_numbers = #tpu.dot_dimension_numbers<[1], [0], [0], [1], [0, 0, 1, 1], [], []>} : vector<16x256xbf16>, vector<256x81xbf16>, vector<16x81xf32> -> vector<16x81xf32>
      %162 = vector.broadcast %94 : vector<16x1xf32> to vector<16x81xf32>
      %163 = arith.addf %161, %162 : vector<16x81xf32>
      %cst_102 = arith.constant 0.000000e+00 : f32
      %164 = vector.broadcast %cst_102 : f32 to vector<16x81xf32>
      %165 = arith.maximumf %163, %164 : vector<16x81xf32>
      %166 = arith.truncf %165 : vector<16x81xf32> to vector<16x81xbf16>
      %c9_103 = arith.constant 9 : index
      %c0_104 = arith.constant 0 : index
      %c0_105 = arith.constant 0 : index
      %167 = vector.load %arg1[%c9_103, %c0_104, %c0_105] : memref<16x256x81xbf16, #tpu.memory_space<vmem>>, vector<1x256x81xbf16>
      %168 = vector.shape_cast %167 : vector<1x256x81xbf16> to vector<256x81xbf16>
      %cst_106 = arith.constant dense<0.000000e+00> : vector<16x81xf32>
      %169 = tpu.matmul %93, %168, %cst_106 {dimension_numbers = #tpu.dot_dimension_numbers<[1], [0], [0], [1], [0, 0, 1, 1], [], []>} : vector<16x256xbf16>, vector<256x81xbf16>, vector<16x81xf32> -> vector<16x81xf32>
      %170 = vector.broadcast %94 : vector<16x1xf32> to vector<16x81xf32>
      %171 = arith.addf %169, %170 : vector<16x81xf32>
      %cst_107 = arith.constant 0.000000e+00 : f32
      %172 = vector.broadcast %cst_107 : f32 to vector<16x81xf32>
      %173 = arith.maximumf %171, %172 : vector<16x81xf32>
      %174 = arith.truncf %173 : vector<16x81xf32> to vector<16x81xbf16>
      %c10_108 = arith.constant 10 : index
      %c0_109 = arith.constant 0 : index
      %c0_110 = arith.constant 0 : index
      %175 = vector.load %arg1[%c10_108, %c0_109, %c0_110] : memref<16x256x81xbf16, #tpu.memory_space<vmem>>, vector<1x256x81xbf16>
      %176 = vector.shape_cast %175 : vector<1x256x81xbf16> to vector<256x81xbf16>
      %cst_111 = arith.constant dense<0.000000e+00> : vector<16x81xf32>
      %177 = tpu.matmul %93, %176, %cst_111 {dimension_numbers = #tpu.dot_dimension_numbers<[1], [0], [0], [1], [0, 0, 1, 1], [], []>} : vector<16x256xbf16>, vector<256x81xbf16>, vector<16x81xf32> -> vector<16x81xf32>
      %178 = vector.broadcast %94 : vector<16x1xf32> to vector<16x81xf32>
      %179 = arith.addf %177, %178 : vector<16x81xf32>
      %cst_112 = arith.constant 0.000000e+00 : f32
      %180 = vector.broadcast %cst_112 : f32 to vector<16x81xf32>
      %181 = arith.maximumf %179, %180 : vector<16x81xf32>
      %182 = arith.truncf %181 : vector<16x81xf32> to vector<16x81xbf16>
      %c11_113 = arith.constant 11 : index
      %c0_114 = arith.constant 0 : index
      %c0_115 = arith.constant 0 : index
      %183 = vector.load %arg1[%c11_113, %c0_114, %c0_115] : memref<16x256x81xbf16, #tpu.memory_space<vmem>>, vector<1x256x81xbf16>
      %184 = vector.shape_cast %183 : vector<1x256x81xbf16> to vector<256x81xbf16>
      %cst_116 = arith.constant dense<0.000000e+00> : vector<16x81xf32>
      %185 = tpu.matmul %93, %184, %cst_116 {dimension_numbers = #tpu.dot_dimension_numbers<[1], [0], [0], [1], [0, 0, 1, 1], [], []>} : vector<16x256xbf16>, vector<256x81xbf16>, vector<16x81xf32> -> vector<16x81xf32>
      %186 = vector.broadcast %94 : vector<16x1xf32> to vector<16x81xf32>
      %187 = arith.addf %185, %186 : vector<16x81xf32>
      %cst_117 = arith.constant 0.000000e+00 : f32
      %188 = vector.broadcast %cst_117 : f32 to vector<16x81xf32>
      %189 = arith.maximumf %187, %188 : vector<16x81xf32>
      %190 = arith.truncf %189 : vector<16x81xf32> to vector<16x81xbf16>
      %c12_118 = arith.constant 12 : index
      %c0_119 = arith.constant 0 : index
      %c0_120 = arith.constant 0 : index
      %191 = vector.load %arg1[%c12_118, %c0_119, %c0_120] : memref<16x256x81xbf16, #tpu.memory_space<vmem>>, vector<1x256x81xbf16>
      %192 = vector.shape_cast %191 : vector<1x256x81xbf16> to vector<256x81xbf16>
      %cst_121 = arith.constant dense<0.000000e+00> : vector<16x81xf32>
      %193 = tpu.matmul %93, %192, %cst_121 {dimension_numbers = #tpu.dot_dimension_numbers<[1], [0], [0], [1], [0, 0, 1, 1], [], []>} : vector<16x256xbf16>, vector<256x81xbf16>, vector<16x81xf32> -> vector<16x81xf32>
      %194 = vector.broadcast %94 : vector<16x1xf32> to vector<16x81xf32>
      %195 = arith.addf %193, %194 : vector<16x81xf32>
      %cst_122 = arith.constant 0.000000e+00 : f32
      %196 = vector.broadcast %cst_122 : f32 to vector<16x81xf32>
      %197 = arith.maximumf %195, %196 : vector<16x81xf32>
      %198 = arith.truncf %197 : vector<16x81xf32> to vector<16x81xbf16>
      %c13_123 = arith.constant 13 : index
      %c0_124 = arith.constant 0 : index
      %c0_125 = arith.constant 0 : index
      %199 = vector.load %arg1[%c13_123, %c0_124, %c0_125] : memref<16x256x81xbf16, #tpu.memory_space<vmem>>, vector<1x256x81xbf16>
      %200 = vector.shape_cast %199 : vector<1x256x81xbf16> to vector<256x81xbf16>
      %cst_126 = arith.constant dense<0.000000e+00> : vector<16x81xf32>
      %201 = tpu.matmul %93, %200, %cst_126 {dimension_numbers = #tpu.dot_dimension_numbers<[1], [0], [0], [1], [0, 0, 1, 1], [], []>} : vector<16x256xbf16>, vector<256x81xbf16>, vector<16x81xf32> -> vector<16x81xf32>
      %202 = vector.broadcast %94 : vector<16x1xf32> to vector<16x81xf32>
      %203 = arith.addf %201, %202 : vector<16x81xf32>
      %cst_127 = arith.constant 0.000000e+00 : f32
      %204 = vector.broadcast %cst_127 : f32 to vector<16x81xf32>
      %205 = arith.maximumf %203, %204 : vector<16x81xf32>
      %206 = arith.truncf %205 : vector<16x81xf32> to vector<16x81xbf16>
      %c14_128 = arith.constant 14 : index
      %c0_129 = arith.constant 0 : index
      %c0_130 = arith.constant 0 : index
      %207 = vector.load %arg1[%c14_128, %c0_129, %c0_130] : memref<16x256x81xbf16, #tpu.memory_space<vmem>>, vector<1x256x81xbf16>
      %208 = vector.shape_cast %207 : vector<1x256x81xbf16> to vector<256x81xbf16>
      %cst_131 = arith.constant dense<0.000000e+00> : vector<16x81xf32>
      %209 = tpu.matmul %93, %208, %cst_131 {dimension_numbers = #tpu.dot_dimension_numbers<[1], [0], [0], [1], [0, 0, 1, 1], [], []>} : vector<16x256xbf16>, vector<256x81xbf16>, vector<16x81xf32> -> vector<16x81xf32>
      %210 = vector.broadcast %94 : vector<16x1xf32> to vector<16x81xf32>
      %211 = arith.addf %209, %210 : vector<16x81xf32>
      %cst_132 = arith.constant 0.000000e+00 : f32
      %212 = vector.broadcast %cst_132 : f32 to vector<16x81xf32>
      %213 = arith.maximumf %211, %212 : vector<16x81xf32>
      %214 = arith.truncf %213 : vector<16x81xf32> to vector<16x81xbf16>
      %c15_133 = arith.constant 15 : index
      %c0_134 = arith.constant 0 : index
      %c0_135 = arith.constant 0 : index
      %215 = vector.load %arg1[%c15_133, %c0_134, %c0_135] : memref<16x256x81xbf16, #tpu.memory_space<vmem>>, vector<1x256x81xbf16>
      %216 = vector.shape_cast %215 : vector<1x256x81xbf16> to vector<256x81xbf16>
      %cst_136 = arith.constant dense<0.000000e+00> : vector<16x81xf32>
      %217 = tpu.matmul %93, %216, %cst_136 {dimension_numbers = #tpu.dot_dimension_numbers<[1], [0], [0], [1], [0, 0, 1, 1], [], []>} : vector<16x256xbf16>, vector<256x81xbf16>, vector<16x81xf32> -> vector<16x81xf32>
      %218 = vector.broadcast %94 : vector<16x1xf32> to vector<16x81xf32>
      %219 = arith.addf %217, %218 : vector<16x81xf32>
      %cst_137 = arith.constant 0.000000e+00 : f32
      %220 = vector.broadcast %cst_137 : f32 to vector<16x81xf32>
      %221 = arith.maximumf %219, %220 : vector<16x81xf32>
      %222 = arith.truncf %221 : vector<16x81xf32> to vector<16x81xbf16>
      %223 = tpu.concatenate %102, %110, %118, %126, %134, %142, %150, %158, %166, %174, %182, %190, %198, %206, %214, %222 in 0 : vector<16x81xbf16>, vector<16x81xbf16>, vector<16x81xbf16>, vector<16x81xbf16>, vector<16x81xbf16>, vector<16x81xbf16>, vector<16x81xbf16>, vector<16x81xbf16>, vector<16x81xbf16>, vector<16x81xbf16>, vector<16x81xbf16>, vector<16x81xbf16>, vector<16x81xbf16>, vector<16x81xbf16>, vector<16x81xbf16>, vector<16x81xbf16> -> vector<256x81xbf16>
      %c16 = arith.constant 16 : index
      %c0_138 = arith.constant 0 : index
      %224 = vector.load %arg2[%c16, %c0_138] : memref<176x256xbf16, #tpu.memory_space<vmem>>, vector<32x256xbf16>
      %c16_139 = arith.constant 16 : index
      %c0_140 = arith.constant 0 : index
      %225 = vector.load %arg3[%c16_139, %c0_140] : memref<48x1xf32, #tpu.memory_space<vmem>>, vector<32x1xf32>
      %cst_141 = arith.constant dense<0.000000e+00> : vector<32x81xf32>
      %226 = tpu.matmul %224, %223, %cst_141 {dimension_numbers = #tpu.dot_dimension_numbers<[1], [0], [0], [1], [0, 0, 1, 1], [], []>} : vector<32x256xbf16>, vector<256x81xbf16>, vector<32x81xf32> -> vector<32x81xf32>
      %227 = vector.broadcast %225 : vector<32x1xf32> to vector<32x81xf32>
      %228 = arith.addf %226, %227 : vector<32x81xf32>
      %cst_142 = arith.constant 0.000000e+00 : f32
      %229 = vector.broadcast %cst_142 : f32 to vector<32x81xf32>
      %230 = arith.maximumf %228, %229 : vector<32x81xf32>
      %c0_143 = arith.constant 0 : index
      %c0_144 = arith.constant 0 : index
      %231 = vector.load %arg7[%c0_143, %c0_144] : memref<32x81xf32, #tpu.memory_space<vmem>>, vector<32x81xf32>
      tpu.vector_store %arg7[%c0_143, %c0_144], %230 {strides = array<i32>} : memref<32x81xf32, #tpu.memory_space<vmem>>, vector<32x81xf32>,
      %cst_145 = arith.constant 0.000000e+00 : f32
      %232 = vector.broadcast %cst_145 : f32 to vector<1x256xf32>
      %c0_146 = arith.constant 0 : index
      %c0_147 = arith.constant 0 : index
      %233 = vector.load %arg8[%c0_146, %c0_147] : memref<1x256xf32, #tpu.memory_space<vmem>>, vector<1x256xf32>
      tpu.vector_store %arg8[%c0_146, %c0_147], %232 {strides = array<i32>} : memref<1x256xf32, #tpu.memory_space<vmem>>, vector<1x256xf32>,
    } else {
    }
    %c16_i32 = arith.constant 16 : i32
    %3 = arith.muli %arg0, %c16_i32 : i32
    %4 = tpu.assume_multiple %3, 16 : i32
    %5 = arith.index_cast %4 : i32 to index
    %c0 = arith.constant 0 : index
    %6 = vector.load %arg7[%5, %c0] : memref<32x81xf32, #tpu.memory_space<vmem>>, vector<16x81xf32>
    %7 = arith.truncf %6 : vector<16x81xf32> to vector<16x81xbf16>
    %c0_1 = arith.constant 0 : index
    %c0_2 = arith.constant 0 : index
    %8 = vector.load %arg8[%c0_1, %c0_2] : memref<1x256xf32, #tpu.memory_space<vmem>>, vector<1x256xf32>
    %9 = vector.extract_strided_slice %7 {offsets = [0, 0], sizes = [1, 81], strides = [1, 1]} : vector<16x81xbf16> to vector<1x81xbf16>
    %c0_3 = arith.constant 0 : index
    %c0_4 = arith.constant 0 : index
    %c0_5 = arith.constant 0 : index
    %10 = vector.load %arg5[%c0_3, %c0_4, %c0_5] : memref<16x81x256xbf16, #tpu.memory_space<vmem>>, vector<1x81x256xbf16>
    %11 = vector.shape_cast %10 : vector<1x81x256xbf16> to vector<81x256xbf16>
    %cst = arith.constant dense<0.000000e+00> : vector<1x256xf32>
    %12 = tpu.matmul %9, %11, %cst {dimension_numbers = #tpu.dot_dimension_numbers<[1], [0], [0], [1], [0, 0, 1, 1], [], []>} : vector<1x81xbf16>, vector<81x256xbf16>, vector<1x256xf32> -> vector<1x256xf32>
    %13 = arith.addf %8, %12 : vector<1x256xf32>
    %14 = vector.extract_strided_slice %7 {offsets = [1, 0], sizes = [1, 81], strides = [1, 1]} : vector<16x81xbf16> to vector<1x81xbf16>
    %c1 = arith.constant 1 : index
    %c0_6 = arith.constant 0 : index
    %c0_7 = arith.constant 0 : index
    %15 = vector.load %arg5[%c1, %c0_6, %c0_7] : memref<16x81x256xbf16, #tpu.memory_space<vmem>>, vector<1x81x256xbf16>
    %16 = vector.shape_cast %15 : vector<1x81x256xbf16> to vector<81x256xbf16>
    %cst_8 = arith.constant dense<0.000000e+00> : vector<1x256xf32>
    %17 = tpu.matmul %14, %16, %cst_8 {dimension_numbers = #tpu.dot_dimension_numbers<[1], [0], [0], [1], [0, 0, 1, 1], [], []>} : vector<1x81xbf16>, vector<81x256xbf16>, vector<1x256xf32> -> vector<1x256xf32>
    %18 = arith.addf %13, %17 : vector<1x256xf32>
    %19 = vector.extract_strided_slice %7 {offsets = [2, 0], sizes = [1, 81], strides = [1, 1]} : vector<16x81xbf16> to vector<1x81xbf16>
    %c2 = arith.constant 2 : index
    %c0_9 = arith.constant 0 : index
    %c0_10 = arith.constant 0 : index
    %20 = vector.load %arg5[%c2, %c0_9, %c0_10] : memref<16x81x256xbf16, #tpu.memory_space<vmem>>, vector<1x81x256xbf16>
    %21 = vector.shape_cast %20 : vector<1x81x256xbf16> to vector<81x256xbf16>
    %cst_11 = arith.constant dense<0.000000e+00> : vector<1x256xf32>
    %22 = tpu.matmul %19, %21, %cst_11 {dimension_numbers = #tpu.dot_dimension_numbers<[1], [0], [0], [1], [0, 0, 1, 1], [], []>} : vector<1x81xbf16>, vector<81x256xbf16>, vector<1x256xf32> -> vector<1x256xf32>
    %23 = arith.addf %18, %22 : vector<1x256xf32>
    %24 = vector.extract_strided_slice %7 {offsets = [3, 0], sizes = [1, 81], strides = [1, 1]} : vector<16x81xbf16> to vector<1x81xbf16>
    %c3 = arith.constant 3 : index
    %c0_12 = arith.constant 0 : index
    %c0_13 = arith.constant 0 : index
    %25 = vector.load %arg5[%c3, %c0_12, %c0_13] : memref<16x81x256xbf16, #tpu.memory_space<vmem>>, vector<1x81x256xbf16>
    %26 = vector.shape_cast %25 : vector<1x81x256xbf16> to vector<81x256xbf16>
    %cst_14 = arith.constant dense<0.000000e+00> : vector<1x256xf32>
    %27 = tpu.matmul %24, %26, %cst_14 {dimension_numbers = #tpu.dot_dimension_numbers<[1], [0], [0], [1], [0, 0, 1, 1], [], []>} : vector<1x81xbf16>, vector<81x256xbf16>, vector<1x256xf32> -> vector<1x256xf32>
    %28 = arith.addf %23, %27 : vector<1x256xf32>
    %29 = vector.extract_strided_slice %7 {offsets = [4, 0], sizes = [1, 81], strides = [1, 1]} : vector<16x81xbf16> to vector<1x81xbf16>
    %c4 = arith.constant 4 : index
    %c0_15 = arith.constant 0 : index
    %c0_16 = arith.constant 0 : index
    %30 = vector.load %arg5[%c4, %c0_15, %c0_16] : memref<16x81x256xbf16, #tpu.memory_space<vmem>>, vector<1x81x256xbf16>
    %31 = vector.shape_cast %30 : vector<1x81x256xbf16> to vector<81x256xbf16>
    %cst_17 = arith.constant dense<0.000000e+00> : vector<1x256xf32>
    %32 = tpu.matmul %29, %31, %cst_17 {dimension_numbers = #tpu.dot_dimension_numbers<[1], [0], [0], [1], [0, 0, 1, 1], [], []>} : vector<1x81xbf16>, vector<81x256xbf16>, vector<1x256xf32> -> vector<1x256xf32>
    %33 = arith.addf %28, %32 : vector<1x256xf32>
    %34 = vector.extract_strided_slice %7 {offsets = [5, 0], sizes = [1, 81], strides = [1, 1]} : vector<16x81xbf16> to vector<1x81xbf16>
    %c5 = arith.constant 5 : index
    %c0_18 = arith.constant 0 : index
    %c0_19 = arith.constant 0 : index
    %35 = vector.load %arg5[%c5, %c0_18, %c0_19] : memref<16x81x256xbf16, #tpu.memory_space<vmem>>, vector<1x81x256xbf16>
    %36 = vector.shape_cast %35 : vector<1x81x256xbf16> to vector<81x256xbf16>
    %cst_20 = arith.constant dense<0.000000e+00> : vector<1x256xf32>
    %37 = tpu.matmul %34, %36, %cst_20 {dimension_numbers = #tpu.dot_dimension_numbers<[1], [0], [0], [1], [0, 0, 1, 1], [], []>} : vector<1x81xbf16>, vector<81x256xbf16>, vector<1x256xf32> -> vector<1x256xf32>
    %38 = arith.addf %33, %37 : vector<1x256xf32>
    %39 = vector.extract_strided_slice %7 {offsets = [6, 0], sizes = [1, 81], strides = [1, 1]} : vector<16x81xbf16> to vector<1x81xbf16>
    %c6 = arith.constant 6 : index
    %c0_21 = arith.constant 0 : index
    %c0_22 = arith.constant 0 : index
    %40 = vector.load %arg5[%c6, %c0_21, %c0_22] : memref<16x81x256xbf16, #tpu.memory_space<vmem>>, vector<1x81x256xbf16>
    %41 = vector.shape_cast %40 : vector<1x81x256xbf16> to vector<81x256xbf16>
    %cst_23 = arith.constant dense<0.000000e+00> : vector<1x256xf32>
    %42 = tpu.matmul %39, %41, %cst_23 {dimension_numbers = #tpu.dot_dimension_numbers<[1], [0], [0], [1], [0, 0, 1, 1], [], []>} : vector<1x81xbf16>, vector<81x256xbf16>, vector<1x256xf32> -> vector<1x256xf32>
    %43 = arith.addf %38, %42 : vector<1x256xf32>
    %44 = vector.extract_strided_slice %7 {offsets = [7, 0], sizes = [1, 81], strides = [1, 1]} : vector<16x81xbf16> to vector<1x81xbf16>
    %c7 = arith.constant 7 : index
    %c0_24 = arith.constant 0 : index
    %c0_25 = arith.constant 0 : index
    %45 = vector.load %arg5[%c7, %c0_24, %c0_25] : memref<16x81x256xbf16, #tpu.memory_space<vmem>>, vector<1x81x256xbf16>
    %46 = vector.shape_cast %45 : vector<1x81x256xbf16> to vector<81x256xbf16>
    %cst_26 = arith.constant dense<0.000000e+00> : vector<1x256xf32>
    %47 = tpu.matmul %44, %46, %cst_26 {dimension_numbers = #tpu.dot_dimension_numbers<[1], [0], [0], [1], [0, 0, 1, 1], [], []>} : vector<1x81xbf16>, vector<81x256xbf16>, vector<1x256xf32> -> vector<1x256xf32>
    %48 = arith.addf %43, %47 : vector<1x256xf32>
    %49 = vector.extract_strided_slice %7 {offsets = [8, 0], sizes = [1, 81], strides = [1, 1]} : vector<16x81xbf16> to vector<1x81xbf16>
    %c8 = arith.constant 8 : index
    %c0_27 = arith.constant 0 : index
    %c0_28 = arith.constant 0 : index
    %50 = vector.load %arg5[%c8, %c0_27, %c0_28] : memref<16x81x256xbf16, #tpu.memory_space<vmem>>, vector<1x81x256xbf16>
    %51 = vector.shape_cast %50 : vector<1x81x256xbf16> to vector<81x256xbf16>
    %cst_29 = arith.constant dense<0.000000e+00> : vector<1x256xf32>
    %52 = tpu.matmul %49, %51, %cst_29 {dimension_numbers = #tpu.dot_dimension_numbers<[1], [0], [0], [1], [0, 0, 1, 1], [], []>} : vector<1x81xbf16>, vector<81x256xbf16>, vector<1x256xf32> -> vector<1x256xf32>
    %53 = arith.addf %48, %52 : vector<1x256xf32>
    %54 = vector.extract_strided_slice %7 {offsets = [9, 0], sizes = [1, 81], strides = [1, 1]} : vector<16x81xbf16> to vector<1x81xbf16>
    %c9 = arith.constant 9 : index
    %c0_30 = arith.constant 0 : index
    %c0_31 = arith.constant 0 : index
    %55 = vector.load %arg5[%c9, %c0_30, %c0_31] : memref<16x81x256xbf16, #tpu.memory_space<vmem>>, vector<1x81x256xbf16>
    %56 = vector.shape_cast %55 : vector<1x81x256xbf16> to vector<81x256xbf16>
    %cst_32 = arith.constant dense<0.000000e+00> : vector<1x256xf32>
    %57 = tpu.matmul %54, %56, %cst_32 {dimension_numbers = #tpu.dot_dimension_numbers<[1], [0], [0], [1], [0, 0, 1, 1], [], []>} : vector<1x81xbf16>, vector<81x256xbf16>, vector<1x256xf32> -> vector<1x256xf32>
    %58 = arith.addf %53, %57 : vector<1x256xf32>
    %59 = vector.extract_strided_slice %7 {offsets = [10, 0], sizes = [1, 81], strides = [1, 1]} : vector<16x81xbf16> to vector<1x81xbf16>
    %c10 = arith.constant 10 : index
    %c0_33 = arith.constant 0 : index
    %c0_34 = arith.constant 0 : index
    %60 = vector.load %arg5[%c10, %c0_33, %c0_34] : memref<16x81x256xbf16, #tpu.memory_space<vmem>>, vector<1x81x256xbf16>
    %61 = vector.shape_cast %60 : vector<1x81x256xbf16> to vector<81x256xbf16>
    %cst_35 = arith.constant dense<0.000000e+00> : vector<1x256xf32>
    %62 = tpu.matmul %59, %61, %cst_35 {dimension_numbers = #tpu.dot_dimension_numbers<[1], [0], [0], [1], [0, 0, 1, 1], [], []>} : vector<1x81xbf16>, vector<81x256xbf16>, vector<1x256xf32> -> vector<1x256xf32>
    %63 = arith.addf %58, %62 : vector<1x256xf32>
    %64 = vector.extract_strided_slice %7 {offsets = [11, 0], sizes = [1, 81], strides = [1, 1]} : vector<16x81xbf16> to vector<1x81xbf16>
    %c11 = arith.constant 11 : index
    %c0_36 = arith.constant 0 : index
    %c0_37 = arith.constant 0 : index
    %65 = vector.load %arg5[%c11, %c0_36, %c0_37] : memref<16x81x256xbf16, #tpu.memory_space<vmem>>, vector<1x81x256xbf16>
    %66 = vector.shape_cast %65 : vector<1x81x256xbf16> to vector<81x256xbf16>
    %cst_38 = arith.constant dense<0.000000e+00> : vector<1x256xf32>
    %67 = tpu.matmul %64, %66, %cst_38 {dimension_numbers = #tpu.dot_dimension_numbers<[1], [0], [0], [1], [0, 0, 1, 1], [], []>} : vector<1x81xbf16>, vector<81x256xbf16>, vector<1x256xf32> -> vector<1x256xf32>
    %68 = arith.addf %63, %67 : vector<1x256xf32>
    %69 = vector.extract_strided_slice %7 {offsets = [12, 0], sizes = [1, 81], strides = [1, 1]} : vector<16x81xbf16> to vector<1x81xbf16>
    %c12 = arith.constant 12 : index
    %c0_39 = arith.constant 0 : index
    %c0_40 = arith.constant 0 : index
    %70 = vector.load %arg5[%c12, %c0_39, %c0_40] : memref<16x81x256xbf16, #tpu.memory_space<vmem>>, vector<1x81x256xbf16>
    %71 = vector.shape_cast %70 : vector<1x81x256xbf16> to vector<81x256xbf16>
    %cst_41 = arith.constant dense<0.000000e+00> : vector<1x256xf32>
    %72 = tpu.matmul %69, %71, %cst_41 {dimension_numbers = #tpu.dot_dimension_numbers<[1], [0], [0], [1], [0, 0, 1, 1], [], []>} : vector<1x81xbf16>, vector<81x256xbf16>, vector<1x256xf32> -> vector<1x256xf32>
    %73 = arith.addf %68, %72 : vector<1x256xf32>
    %74 = vector.extract_strided_slice %7 {offsets = [13, 0], sizes = [1, 81], strides = [1, 1]} : vector<16x81xbf16> to vector<1x81xbf16>
    %c13 = arith.constant 13 : index
    %c0_42 = arith.constant 0 : index
    %c0_43 = arith.constant 0 : index
    %75 = vector.load %arg5[%c13, %c0_42, %c0_43] : memref<16x81x256xbf16, #tpu.memory_space<vmem>>, vector<1x81x256xbf16>
    %76 = vector.shape_cast %75 : vector<1x81x256xbf16> to vector<81x256xbf16>
    %cst_44 = arith.constant dense<0.000000e+00> : vector<1x256xf32>
    %77 = tpu.matmul %74, %76, %cst_44 {dimension_numbers = #tpu.dot_dimension_numbers<[1], [0], [0], [1], [0, 0, 1, 1], [], []>} : vector<1x81xbf16>, vector<81x256xbf16>, vector<1x256xf32> -> vector<1x256xf32>
    %78 = arith.addf %73, %77 : vector<1x256xf32>
    %79 = vector.extract_strided_slice %7 {offsets = [14, 0], sizes = [1, 81], strides = [1, 1]} : vector<16x81xbf16> to vector<1x81xbf16>
    %c14 = arith.constant 14 : index
    %c0_45 = arith.constant 0 : index
    %c0_46 = arith.constant 0 : index
    %80 = vector.load %arg5[%c14, %c0_45, %c0_46] : memref<16x81x256xbf16, #tpu.memory_space<vmem>>, vector<1x81x256xbf16>
    %81 = vector.shape_cast %80 : vector<1x81x256xbf16> to vector<81x256xbf16>
    %cst_47 = arith.constant dense<0.000000e+00> : vector<1x256xf32>
    %82 = tpu.matmul %79, %81, %cst_47 {dimension_numbers = #tpu.dot_dimension_numbers<[1], [0], [0], [1], [0, 0, 1, 1], [], []>} : vector<1x81xbf16>, vector<81x256xbf16>, vector<1x256xf32> -> vector<1x256xf32>
    %83 = arith.addf %78, %82 : vector<1x256xf32>
    %84 = vector.extract_strided_slice %7 {offsets = [15, 0], sizes = [1, 81], strides = [1, 1]} : vector<16x81xbf16> to vector<1x81xbf16>
    %c15 = arith.constant 15 : index
    %c0_48 = arith.constant 0 : index
    %c0_49 = arith.constant 0 : index
    %85 = vector.load %arg5[%c15, %c0_48, %c0_49] : memref<16x81x256xbf16, #tpu.memory_space<vmem>>, vector<1x81x256xbf16>
    %86 = vector.shape_cast %85 : vector<1x81x256xbf16> to vector<81x256xbf16>
    %cst_50 = arith.constant dense<0.000000e+00> : vector<1x256xf32>
    %87 = tpu.matmul %84, %86, %cst_50 {dimension_numbers = #tpu.dot_dimension_numbers<[1], [0], [0], [1], [0, 0, 1, 1], [], []>} : vector<1x81xbf16>, vector<81x256xbf16>, vector<1x256xf32> -> vector<1x256xf32>
    %88 = arith.addf %83, %87 : vector<1x256xf32>
    %c0_51 = arith.constant 0 : index
    %c0_52 = arith.constant 0 : index
    %89 = vector.load %arg8[%c0_51, %c0_52] : memref<1x256xf32, #tpu.memory_space<vmem>>, vector<1x256xf32>
    tpu.vector_store %arg8[%c0_51, %c0_52], %88 {strides = array<i32>} : memref<1x256xf32, #tpu.memory_space<vmem>>, vector<1x256xf32>,
    %c1_i32 = arith.constant 1 : i32
    %90 = arith.cmpi eq, %arg0, %c1_i32 : i32
    %91 = arith.extui %90 : i1 to i32
    %c0_i32_53 = arith.constant 0 : i32
    %92 = arith.cmpi ne, %91, %c0_i32_53 : i32
    scf.if %92 {
      %c0_54 = arith.constant 0 : index
      %c0_55 = arith.constant 0 : index
      %93 = vector.load %arg4[%c0_54, %c0_55] : memref<2x256xf32, #tpu.memory_space<vmem>>, vector<1x256xf32>
      %c1_56 = arith.constant 1 : index
      %c0_57 = arith.constant 0 : index
      %94 = vector.load %arg4[%c1_56, %c0_57] : memref<2x256xf32, #tpu.memory_space<vmem>>, vector<1x128xf32>
      %95 = arith.addf %88, %93 : vector<1x256xf32>
      %cst_58 = arith.constant 0.000000e+00 : f32
      %96 = vector.broadcast %cst_58 : f32 to vector<1x256xf32>
      %97 = arith.maximumf %95, %96 : vector<1x256xf32>
      %98 = arith.truncf %97 : vector<1x256xf32> to vector<1x256xbf16>
      %c48 = arith.constant 48 : index
      %c0_59 = arith.constant 0 : index
      %99 = vector.load %arg2[%c48, %c0_59] : memref<176x256xbf16, #tpu.memory_space<vmem>>, vector<128x256xbf16>
      %cst_60 = arith.constant dense<0.000000e+00> : vector<1x128xf32>
      %100 = tpu.matmul %98, %99, %cst_60 {dimension_numbers = #tpu.dot_dimension_numbers<[1], [1], [0], [0], [0, 0, 1, 0], [], []>} : vector<1x256xbf16>, vector<128x256xbf16>, vector<1x128xf32> -> vector<1x128xf32>
      %101 = arith.addf %100, %94 : vector<1x128xf32>
      %c0_61 = arith.constant 0 : index
      %c0_62 = arith.constant 0 : index
      %102 = vector.load %arg6[%c0_61, %c0_62] : memref<1x128xf32, #tpu.memory_space<vmem>>, vector<1x128xf32>
      tpu.vector_store %arg6[%c0_61, %c0_62], %101 {strides = array<i32>} : memref<1x128xf32, #tpu.memory_space<vmem>>, vector<1x128xf32>,
    } else {
    }
    return
  }
  func.func @transform_0(%arg0: i32) -> (i32, i32, i32) {
    %c0_i32 = arith.constant 0 : i32
    %c0_i32_0 = arith.constant 0 : i32
    %c0_i32_1 = arith.constant 0 : i32
    %c0_i32_2 = arith.constant 0 : i32
    return %c0_i32, %c0_i32_0, %c0_i32_1 : i32, i32, i32
  }
  func.func @transform_1(%arg0: i32) -> (i32, i32) {
    %c0_i32 = arith.constant 0 : i32
    %c0_i32_0 = arith.constant 0 : i32
    %c0_i32_1 = arith.constant 0 : i32
    return %c0_i32, %c0_i32_0 : i32, i32
  }
  func.func @transform_2(%arg0: i32) -> (i32, i32) {
    %c0_i32 = arith.constant 0 : i32
    %c0_i32_0 = arith.constant 0 : i32
    %c0_i32_1 = arith.constant 0 : i32
    return %c0_i32, %c0_i32_0 : i32, i32
  }
  func.func @transform_3(%arg0: i32) -> (i32, i32) {
    %c0_i32 = arith.constant 0 : i32
    %c0_i32_0 = arith.constant 0 : i32
    %c0_i32_1 = arith.constant 0 : i32
    return %c0_i32, %c0_i32_0 : i32, i32
  }
  func.func @transform_4(%arg0: i32) -> (i32, i32, i32) {
    %c0_i32 = arith.constant 0 : i32
    %c0_i32_0 = arith.constant 0 : i32
    %c0_i32_1 = arith.constant 0 : i32
    return %arg0, %c0_i32, %c0_i32_0 : i32, i32, i32
  }
  func.func @transform_5(%arg0: i32) -> (i32, i32) {
    %c0_i32 = arith.constant 0 : i32
    %c0_i32_0 = arith.constant 0 : i32
    %c0_i32_1 = arith.constant 0 : i32
    return %c0_i32, %c0_i32_0 : i32, i32
  }
}

</mosaic_0001>

<llo_original>
// kernel: policy_cnn_forward.1
$region0: #{policy_cnn_forward.1}
  #allocation0 [shape = 'u32[]', space=smem, size = 0x4, offset = 0x4, fixed_abs, tag = 'smem constant byte address 0x4 - core index']
  #allocation1 [shape = 'u32[72,128]{1,0:T(1,128)}', space=vmem, size = 0x9000, scoped, tag = 'internal scratch']
  #allocation2 [shape = 'f32[32,81]{1,0:T(8,128)}', space=vmem, size = 0x4000, scoped, tag = 'scratch operand']
  #allocation3 [shape = 'f32[1,256]{1,0:T(1,128)}', space=vmem, size = 0x400, scoped, tag = 'scratch operand']
  %s0 = inlined_call_operand.vmem [shape: bf16[16,256,81], index: 0, kind: input, shape index: {}]
  %s1 = inlined_call_operand.vmem [shape: bf16[176,256], index: 1, kind: input, shape index: {}]
  %s2 = inlined_call_operand.vmem [shape: f32[48,1], index: 2, kind: input, shape index: {}]
  %s3 = inlined_call_operand.vmem [shape: f32[2,256], index: 3, kind: input, shape index: {}]
  %s4 = inlined_call_operand.vmem [shape: bf16[32,81,256], index: 4, kind: input, shape index: {}]
  %s5 = inlined_call_operand.hbm [shape: f32[1,128], index: 5, kind: output, shape index: {}]
  %s6 = sld [smem:[#allocation0]]
  $region61: #{policy_cnn_forward.1} parent=0
    _
  %s8 = ssub.s32 1, %s6
  %s9 = scalar_select 0, %s8, %s6
  $region1: #{policy_cnn_forward.1} parent=0
    #allocation4 [shape = 'u8[512]{0}', space=vmem, size = 0x400, scoped, tag = 'output window, operand 0, single buffered']
    #allocation5 [shape = 's32[2]{0}', space=sflag, size = 0x8, scoped, tag = 'scoped memory for policy_cnn_forward.1']
    %10 = vsyncpa [#allocation5], 0
    loop: start=0, step=1, limit=4
    $region2: #{policy_cnn_forward.1} parent=1 // loop_pre_header
      _
    $region3: #{policy_cnn_forward.1} parent=1 // loop_header
      %s12 = sphi 0, %s16
      %p13 = scmp.ge.s32.totalorder %s12, 4
      %s20 = sphi 0, %s20
      %s22 = sphi 0, %s20
      %s23 = sphi 0, %s22
      %s37 = sphi 0, %s23
      %s41 = sphi 0, %s41
      %s43 = sphi 0, %s41
      %s44 = sphi 0, %s43
      %s58 = sphi 0, %s44
      %s62 = sphi 0, %s62
      %s64 = sphi 0, %s62
      %s65 = sphi 0, %s64
      %s79 = sphi 0, %s65
      %s83 = sphi 0, %s83
      %s85 = sphi 0, %s83
      %s86 = sphi 0, %s85
      %s100 = sphi 0, %s86
      %s106 = sphi 0, %s108
      %s109 = sphi 0, %s106
      %s110 = sphi 0, %s109
      %s126 = sphi 0, %s110
      %s130 = sphi 0, %s130
      %s132 = sphi 0, %s130
      %s133 = sphi 0, %s132
      %s147 = sphi 0, %s133
    $region4: #{policy_cnn_forward.1} parent=1 // loop_header_branch
      %15 = sbr.rel (%p13) target = $region8
    $region5: #{policy_cnn_forward.1} parent=1 // loop_body
      %s17 = ssub.s32 %s12, 1
      %s18 = ssub.s32 %s12, 2
      %s19 = sadd.s32 %s12, 1
      %s21 = sadd.s32 %s20, 1
      %p24 = scmp.eq.s32.totalorder %s12, 1
      %p25 = scmp.ne.s32.totalorder %s20, %s22
      %p26 = scmp.eq.s32.totalorder %s12, 0
      %p27 = por %p25, %p26
      %p28 = scmp.ne.s32.totalorder %s20, %s22
      %p29 = scmp.eq.s32.totalorder %s17, 1
      %p30 = por %p28, %p29
      %p31 = scmp.ne.s32.totalorder %s22, %s23
      %p32 = scmp.eq.s32.totalorder %s17, 0
      %p33 = por %p31, %p32
      %p34 = scmp.ne.s32.totalorder %s22, %s23
      %p35 = scmp.eq.s32.totalorder %s18, 1
      %p36 = por %p34, %p35
      %p38 = scmp.ne.s32.totalorder %s23, %s37
      %p39 = scmp.eq.s32.totalorder %s18, 0
      %p40 = por %p38, %p39
      %s42 = sadd.s32 %s41, 1
      %p45 = scmp.eq.s32.totalorder %s12, 1
      %p46 = scmp.ne.s32.totalorder %s41, %s43
      %p47 = scmp.eq.s32.totalorder %s12, 0
      %p48 = por %p46, %p47
      %p49 = scmp.ne.s32.totalorder %s41, %s43
      %p50 = scmp.eq.s32.totalorder %s17, 1
      %p51 = por %p49, %p50
      %p52 = scmp.ne.s32.totalorder %s43, %s44
      %p53 = scmp.eq.s32.totalorder %s17, 0
      %p54 = por %p52, %p53
      %p55 = scmp.ne.s32.totalorder %s43, %s44
      %p56 = scmp.eq.s32.totalorder %s18, 1
      %p57 = por %p55, %p56
      %p59 = scmp.ne.s32.totalorder %s44, %s58
      %p60 = scmp.eq.s32.totalorder %s18, 0
      %p61 = por %p59, %p60
      %s63 = sadd.s32 %s62, 1
      %p66 = scmp.eq.s32.totalorder %s12, 1
      %p67 = scmp.ne.s32.totalorder %s62, %s64
      %p68 = scmp.eq.s32.totalorder %s12, 0
      %p69 = por %p67, %p68
      %p70 = scmp.ne.s32.totalorder %s62, %s64
      %p71 = scmp.eq.s32.totalorder %s17, 1
      %p72 = por %p70, %p71
      %p73 = scmp.ne.s32.totalorder %s64, %s65
      %p74 = scmp.eq.s32.totalorder %s17, 0
      %p75 = por %p73, %p74
      %p76 = scmp.ne.s32.totalorder %s64, %s65
      %p77 = scmp.eq.s32.totalorder %s18, 1
      %p78 = por %p76, %p77
      %p80 = scmp.ne.s32.totalorder %s65, %s79
      %p81 = scmp.eq.s32.totalorder %s18, 0
      %p82 = por %p80, %p81
      %s84 = sadd.s32 %s83, 1
      %p87 = scmp.eq.s32.totalorder %s12, 1
      %p88 = scmp.ne.s32.totalorder %s83, %s85
      %p89 = scmp.eq.s32.totalorder %s12, 0
      %p90 = por %p88, %p89
      %p91 = scmp.ne.s32.totalorder %s83, %s85
      %p92 = scmp.eq.s32.totalorder %s17, 1
      %p93 = por %p91, %p92
      %p94 = scmp.ne.s32.totalorder %s85, %s86
      %p95 = scmp.eq.s32.totalorder %s17, 0
      %p96 = por %p94, %p95
      %p97 = scmp.ne.s32.totalorder %s85, %s86
      %p98 = scmp.eq.s32.totalorder %s18, 1
      %p99 = por %p97, %p98
      %p101 = scmp.ne.s32.totalorder %s86, %s100
      %p102 = scmp.eq.s32.totalorder %s18, 0
      %p103 = por %p101, %p102
      %s104 = ssub.s32 %s12, %s19
      %p105 = scmp.eq.s32.totalorder %s104, 0
      %s107 = sadd.s32 %s106, 1
      %s108 = scalar_select %p105, %s106, %s107
      %p111 = pneg %p105
      %p112 = scmp.eq.s32.totalorder %s12, 1
      %p113 = por %p111, %p112
      %p114 = scmp.ne.s32.totalorder %s106, %s109
      %p115 = scmp.eq.s32.totalorder %s12, 0
      %p116 = por %p114, %p115
      %p117 = scmp.ne.s32.totalorder %s106, %s109
      %p118 = scmp.eq.s32.totalorder %s17, 1
      %p119 = por %p117, %p118
      %p120 = scmp.ne.s32.totalorder %s109, %s110
      %p121 = scmp.eq.s32.totalorder %s17, 0
      %p122 = por %p120, %p121
      %p123 = scmp.ne.s32.totalorder %s109, %s110
      %p124 = scmp.eq.s32.totalorder %s18, 1
      %p125 = por %p123, %p124
      %p127 = scmp.ne.s32.totalorder %s110, %s126
      %p128 = scmp.eq.s32.totalorder %s18, 0
      %p129 = por %p127, %p128
      %s131 = sadd.s32 %s130, 1
      %p134 = scmp.eq.s32.totalorder %s12, 1
      %p135 = scmp.ne.s32.totalorder %s130, %s132
      %p136 = scmp.eq.s32.totalorder %s12, 0
      %p137 = por %p135, %p136
      %p138 = scmp.ne.s32.totalorder %s130, %s132
      %p139 = scmp.eq.s32.totalorder %s17, 1
      %p140 = por %p138, %p139
      %p141 = scmp.ne.s32.totalorder %s132, %s133
      %p142 = scmp.eq.s32.totalorder %s17, 0
      %p143 = por %p141, %p142
      %p144 = scmp.ne.s32.totalorder %s132, %s133
      %p145 = scmp.eq.s32.totalorder %s18, 1
      %p146 = por %p144, %p145
      %p148 = scmp.ne.s32.totalorder %s133, %s147
      %p149 = scmp.eq.s32.totalorder %s18, 0
      %p150 = por %p148, %p149
      %p151 = scmp.le.s32.totalorder 1, %s12
      %p152 = scmp.lt.s32.totalorder %s12, 3
      %p153 = pnand %p151, %p152
      %p154 = pneg %p153
      // Predicated region
      $region9: #{policy_cnn_forward.1} parent=5 // pred_check
        _
      $region10: #{policy_cnn_forward.1} parent=5 // pred_check_branch
        %156 = sbr.rel (%p153) target = $region12
      $region11: #{policy_cnn_forward.1} parent=5 // pred_region
        %s157 = ssub.s32 %s12, 1
        // Predicated region
        $region13: #{policy_cnn_forward.1} parent=11 // pred_check
          %p158 = pneg %p33
        $region14: #{policy_cnn_forward.1} parent=11 // pred_check_branch
          %160 = sbr.rel (%p158) target = $region16
        $region15: #{policy_cnn_forward.1} parent=11 // pred_region
          _
        $region16: #{policy_cnn_forward.1} parent=11 // pred_fallthru
          _
        // Predicated region
        $region17: #{policy_cnn_forward.1} parent=11 // pred_check
          %p161 = pneg %p54
        $region18: #{policy_cnn_forward.1} parent=11 // pred_check_branch
          %163 = sbr.rel (%p161) target = $region20
        $region19: #{policy_cnn_forward.1} parent=11 // pred_region
          _
        $region20: #{policy_cnn_forward.1} parent=11 // pred_fallthru
          _
        // Predicated region
        $region21: #{policy_cnn_forward.1} parent=11 // pred_check
          %p164 = pneg %p75
        $region22: #{policy_cnn_forward.1} parent=11 // pred_check_branch
          %166 = sbr.rel (%p164) target = $region24
        $region23: #{policy_cnn_forward.1} parent=11 // pred_region
          _
        $region24: #{policy_cnn_forward.1} parent=11 // pred_fallthru
          _
        // Predicated region
        $region25: #{policy_cnn_forward.1} parent=11 // pred_check
          %p167 = pneg %p96
        $region26: #{policy_cnn_forward.1} parent=11 // pred_check_branch
          %169 = sbr.rel (%p167) target = $region28
        $region27: #{policy_cnn_forward.1} parent=11 // pred_region
          _
        $region28: #{policy_cnn_forward.1} parent=11 // pred_fallthru
          _
      $region12: #{policy_cnn_forward.1} parent=5 // pred_fallthru
        _
      %p170 = scmp.lt.s32.totalorder %s12, 2
      // Predicated region
      $region29: #{policy_cnn_forward.1} parent=5 // pred_check
        %p171 = pneg %p170
      $region30: #{policy_cnn_forward.1} parent=5 // pred_check_branch
        %173 = sbr.rel (%p171) target = $region32
      $region31: #{policy_cnn_forward.1} parent=5 // pred_region
        // Predicated region
        $region33: #{policy_cnn_forward.1} parent=31 // pred_check
          %p174 = pneg %p116
        $region34: #{policy_cnn_forward.1} parent=31 // pred_check_branch
          %176 = sbr.rel (%p174) target = $region36
        $region35: #{policy_cnn_forward.1} parent=31 // pred_region
          %s177 = smul.u32 16, %s12
          %p178 = scmp.lt.s32.totalorder %s177, 31
          %s179 = scalar_select %p178, %s177, 31
          %s180 = smul.addr %s179, 22
          %s181 = smul.addr %s180, 4
          %s182 = scalar_lea.vmem %s4, %s181
          %s183 = smul.u32 16, %s12
        $region36: #{policy_cnn_forward.1} parent=31 // pred_fallthru
          _
      $region32: #{policy_cnn_forward.1} parent=5 // pred_fallthru
        _
      %p184 = scmp.le.s32.totalorder 1, %s12
      %p185 = scmp.lt.s32.totalorder %s12, 3
      %p186 = pnand %p184, %p185
      %p187 = pneg %p186
      // Predicated region
      $region37: #{policy_cnn_forward.1} parent=5 // pred_check
        _
      $region38: #{policy_cnn_forward.1} parent=5 // pred_check_branch
        %189 = sbr.rel (%p186) target = $region40
      $region39: #{policy_cnn_forward.1} parent=5 // pred_region
        %s190 = ssub.s32 %s12, 1
        %p191 = pneg %p33
        %p192 = pneg %p30
        %p193 = pneg %p54
        %p194 = pneg %p51
        %p195 = pneg %p75
        %p196 = pneg %p72
        %p197 = pneg %p96
        %p198 = pneg %p93
        %s199 = smul.u32 16, %s17
        %p200 = scmp.lt.s32.totalorder %s199, 31
        %s201 = scalar_select %p200, %s199, 31
        %s202 = smul.addr %s201, 22
        %s203 = smul.addr %s202, 4
        %s204 = scalar_lea.vmem %s4, %s203
        %p205 = pneg %p122
        %p206 = pneg %p119
        %p207 = pneg %p143
        %p208 = pneg %p140
        %s209 = smul.u32 16, %s17
        %p210 = scmp.lt.s32.totalorder %s209, 31
        %s211 = scalar_select %p210, %s209, 31
        %s212 = smul.addr %s211, 22
        %s213 = smul.addr %s212, 4
        %s214 = scalar_lea.vmem %s4, %s213
        %s215 = smul.u32 16, %s17
        %p217 = scmp.eq.s32.totalorder %s17, 0
        // Predicated region
        $region41: #{policy_cnn_forward.1} parent=39 // pred_check
          %p218 = pneg %p217
        $region42: #{policy_cnn_forward.1} parent=39 // pred_check_branch
          %220 = sbr.rel (%p218) target = $region44
        $region43: #{policy_cnn_forward.1} parent=39 // pred_region
          %v221 = vld [vmem:[%s1] sm:$0xff]
          %v222 = vld [vmem:[%s1 + $0x8] sm:$0xff]
          %v223 = vld [vmem:[%s2] sm:$0xff]
          %v224 = vld [vmem:[%s2 + $0x8] sm:$0xff]
          %v225 = vld [vmem:[%s0] sm:$0xf]
          %v226 = vld [vmem:[%s0 + $0x4] sm:$0xf]
          %v227 = vld [vmem:[%s0 + $0x8] sm:$0xf]
          %v228 = vld [vmem:[%s0 + $0xc] sm:$0xf]
          %v229 = vld [vmem:[%s0 + $0x10] sm:$0xf]
          %v230 = vld [vmem:[%s0 + $0x14] sm:$0xf]
          %v231 = vld [vmem:[%s0 + $0x18] sm:$0xf]
          %v232 = vld [vmem:[%s0 + $0x1c] sm:$0xf]
          %v233 = vld [vmem:[%s0 + $0x20] sm:$0xf]
          %v234 = vld [vmem:[%s0 + $0x24] sm:$0xf]
          %v235 = vld [vmem:[%s0 + $0x28] sm:$0xf]
          %v236 = vld [vmem:[%s0 + $0x2c] sm:$0xf]
          %v237 = vld [vmem:[%s0 + $0x30] sm:$0xf]
          %v238 = vld [vmem:[%s0 + $0x34] sm:$0xf]
          %v239 = vld [vmem:[%s0 + $0x38] sm:$0xf]
          %v240 = vld [vmem:[%s0 + $0x3c] sm:$0xf]
          %v241 = vld [vmem:[%s0 + $0x40] sm:$0xf]
          %v242 = vld [vmem:[%s0 + $0x44] sm:$0xf]
          %v243 = vld [vmem:[%s0 + $0x48] sm:$0xf]
          %v244 = vld [vmem:[%s0 + $0x4c] sm:$0xf]
          %v245 = vld [vmem:[%s0 + $0x50] sm:$0xf]
          %v246 = vld [vmem:[%s0 + $0x54] sm:$0xf]
          %v247 = vld [vmem:[%s0 + $0x58] sm:$0xf]
          %v248 = vld [vmem:[%s0 + $0x5c] sm:$0xf]
          %v249 = vld [vmem:[%s0 + $0x60] sm:$0xf]
          %v250 = vld [vmem:[%s0 + $0x64] sm:$0xf]
          %v251 = vld [vmem:[%s0 + $0x68] sm:$0xf]
          %v252 = vld [vmem:[%s0 + $0x6c] sm:$0xf]
          %v253 = vld [vmem:[%s0 + $0x70] sm:$0xf]
          %v254 = vld [vmem:[%s0 + $0x74] sm:$0xf]
          %v255 = vld [vmem:[%s0 + $0x78] sm:$0xf]
          %v256 = vld [vmem:[%s0 + $0x7c] sm:$0xf]
          %258 = vset.pattern.permute.xlu0 0
          %259 = vperm.xlu0 %258, %v223
          %v260 = vpop.permute.xlu0 %259
          %263 = vset.pattern.permute.xlu0 0
          %264 = vperm.xlu0 %263, %v224
          %v265 = vpop.permute.xlu0 %264
          %v269 = vunpack.c.l.b16 %v221
          %v270 = vunpack.c.h.b16 %v221
          %v271 = vunpack.c.l.b16 %v222
          %v272 = vunpack.c.h.b16 %v222
          %v273 = vpack.c.b16 %v271, %v269
          %v274 = vpack.c.b16 %v272, %v270
          %v309 = vunpack.c.l.b16 %v225
          %v310 = vunpack.c.l.b16 %v226
          %v311 = vunpack.c.l.b16 %v227
          %v312 = vunpack.c.l.b16 %v228
          %v313 = vunpack.c.l.b16 %v229
          %v314 = vunpack.c.l.b16 %v230
          %v315 = vunpack.c.l.b16 %v231
          %v316 = vunpack.c.l.b16 %v232
          %v317 = vunpack.c.l.b16 %v233
          %v318 = vunpack.c.l.b16 %v234
          %v319 = vunpack.c.l.b16 %v235
          %v320 = vunpack.c.l.b16 %v236
          %v321 = vunpack.c.l.b16 %v237
          %v322 = vunpack.c.l.b16 %v238
          %v323 = vunpack.c.l.b16 %v239
          %v324 = vunpack.c.l.b16 %v240
          %v325 = vunpack.c.l.b16 %v241
          %v326 = vunpack.c.l.b16 %v242
          %v327 = vunpack.c.l.b16 %v243
          %v328 = vunpack.c.l.b16 %v244
          %v329 = vunpack.c.l.b16 %v245
          %v330 = vunpack.c.l.b16 %v246
          %v331 = vunpack.c.l.b16 %v247
          %v332 = vunpack.c.l.b16 %v248
          %v333 = vunpack.c.l.b16 %v249
          %v334 = vunpack.c.l.b16 %v250
          %v335 = vunpack.c.l.b16 %v251
          %v336 = vunpack.c.l.b16 %v252
          %v337 = vunpack.c.l.b16 %v253
          %v338 = vunpack.c.l.b16 %v254
          %v339 = vunpack.c.l.b16 %v255
          %v340 = vunpack.c.l.b16 %v256
          %v341 = vpack.c.b16 %v310, %v309
          %v342 = vpack.c.b16 %v312, %v311
          %v343 = vpack.c.b16 %v314, %v313
          %v344 = vpack.c.b16 %v316, %v315
          %v345 = vpack.c.b16 %v318, %v317
          %v346 = vpack.c.b16 %v320, %v319
          %v347 = vpack.c.b16 %v322, %v321
          %v348 = vpack.c.b16 %v324, %v323
          %v349 = vpack.c.b16 %v326, %v325
          %v350 = vpack.c.b16 %v328, %v327
          %v351 = vpack.c.b16 %v330, %v329
          %v352 = vpack.c.b16 %v332, %v331
          %v353 = vpack.c.b16 %v334, %v333
          %v354 = vpack.c.b16 %v336, %v335
          %v355 = vpack.c.b16 %v338, %v337
          %v356 = vpack.c.b16 %v340, %v339
          %373 = vmatpush.bf16.msra.mxu0 %v348
          %374 = vmatpush.bf16.msra.mxu0 %v347
          %375 = vmatpush.bf16.msra.mxu0 %v346
          %376 = vmatpush.bf16.msra.mxu0 %v345
          %377 = vmatpush.bf16.msra.mxu0 %v344
          %378 = vmatpush.bf16.msra.mxu0 %v343
          %379 = vmatpush.bf16.msra.mxu0 %v342
          %380 = vmatpush.bf16.msra.mxu0 %v341
          %381 = vmatmul.bf16.gmra.mxu0 %v273
          %v382 = vpop.f32.mrf.mxu0
          %v383 = vadd.f32 %v260, %v382
          %v384 = vpop.f32.mrf.mxu0
          %v385 = vadd.f32 %v265, %v384
          %386 = vdwg.mxu0
          %387 = vmatpush.bf16.msra.mxu0 %v356
          %388 = vmatpush.bf16.msra.mxu0 %v355
          %389 = vmatpush.bf16.msra.mxu0 %v354
          %390 = vmatpush.bf16.msra.mxu0 %v353
          %391 = vmatpush.bf16.msra.mxu0 %v352
          %392 = vmatpush.bf16.msra.mxu0 %v351
          %393 = vmatpush.bf16.msra.mxu0 %v350
          %394 = vmatpush.bf16.msra.mxu0 %v349
          %395 = vmatmul.bf16.gmra.mxu0 %v274
          %v396 = vpop.f32.mrf.mxu0
          %v397 = vadd.f32 %v383, %v396
          %v398 = vpop.f32.mrf.mxu0
          %v399 = vadd.f32 %v385, %v398
          %400 = vdwg.mxu0
          %v401 = vmax.f32 %v397, 0.0
          %v402 = vmax.f32 %v399, 0.0
          %v403 = vpack.c.bf16 %v401, %v401
          %v404 = vpack.c.bf16 %v402, %v402
          %s405 = scalar_lea.vmem %s0, 128
          %v406 = vld [vmem:[%s405] sm:$0xf]
          %v407 = vld [vmem:[%s405 + $0x4] sm:$0xf]
          %v408 = vld [vmem:[%s405 + $0x8] sm:$0xf]
          %v409 = vld [vmem:[%s405 + $0xc] sm:$0xf]
          %v410 = vld [vmem:[%s405 + $0x10] sm:$0xf]
          %v411 = vld [vmem:[%s405 + $0x14] sm:$0xf]
          %v412 = vld [vmem:[%s405 + $0x18] sm:$0xf]
          %v413 = vld [vmem:[%s405 + $0x1c] sm:$0xf]
          %v414 = vld [vmem:[%s405 + $0x20] sm:$0xf]
          %v415 = vld [vmem:[%s405 + $0x24] sm:$0xf]
          %v416 = vld [vmem:[%s405 + $0x28] sm:$0xf]
          %v417 = vld [vmem:[%s405 + $0x2c] sm:$0xf]
          %v418 = vld [vmem:[%s405 + $0x30] sm:$0xf]
          %v419 = vld [vmem:[%s405 + $0x34] sm:$0xf]
          %v420 = vld [vmem:[%s405 + $0x38] sm:$0xf]
          %v421 = vld [vmem:[%s405 + $0x3c] sm:$0xf]
          %v422 = vld [vmem:[%s405 + $0x40] sm:$0xf]
          %v423 = vld [vmem:[%s405 + $0x44] sm:$0xf]
          %v424 = vld [vmem:[%s405 + $0x48] sm:$0xf]
          %v425 = vld [vmem:[%s405 + $0x4c] sm:$0xf]
          %v426 = vld [vmem:[%s405 + $0x50] sm:$0xf]
          %v427 = vld [vmem:[%s405 + $0x54] sm:$0xf]
          %v428 = vld [vmem:[%s405 + $0x58] sm:$0xf]
          %v429 = vld [vmem:[%s405 + $0x5c] sm:$0xf]
          %v430 = vld [vmem:[%s405 + $0x60] sm:$0xf]
          %v431 = vld [vmem:[%s405 + $0x64] sm:$0xf]
          %v432 = vld [vmem:[%s405 + $0x68] sm:$0xf]
          %v433 = vld [vmem:[%s405 + $0x6c] sm:$0xf]
          %v434 = vld [vmem:[%s405 + $0x70] sm:$0xf]
          %v435 = vld [vmem:[%s405 + $0x74] sm:$0xf]
          %v436 = vld [vmem:[%s405 + $0x78] sm:$0xf]
          %v437 = vld [vmem:[%s405 + $0x7c] sm:$0xf]
          %v470 = vunpack.c.l.b16 %v406
          %v471 = vunpack.c.l.b16 %v407
          %v472 = vunpack.c.l.b16 %v408
          %v473 = vunpack.c.l.b16 %v409
          %v474 = vunpack.c.l.b16 %v410
          %v475 = vunpack.c.l.b16 %v411
          %v476 = vunpack.c.l.b16 %v412
          %v477 = vunpack.c.l.b16 %v413
          %v478 = vunpack.c.l.b16 %v414
          %v479 = vunpack.c.l.b16 %v415
          %v480 = vunpack.c.l.b16 %v416
          %v481 = vunpack.c.l.b16 %v417
          %v482 = vunpack.c.l.b16 %v418
          %v483 = vunpack.c.l.b16 %v419
          %v484 = vunpack.c.l.b16 %v420
          %v485 = vunpack.c.l.b16 %v421
          %v486 = vunpack.c.l.b16 %v422
          %v487 = vunpack.c.l.b16 %v423
          %v488 = vunpack.c.l.b16 %v424
          %v489 = vunpack.c.l.b16 %v425
          %v490 = vunpack.c.l.b16 %v426
          %v491 = vunpack.c.l.b16 %v427
          %v492 = vunpack.c.l.b16 %v428
          %v493 = vunpack.c.l.b16 %v429
          %v494 = vunpack.c.l.b16 %v430
          %v495 = vunpack.c.l.b16 %v431
          %v496 = vunpack.c.l.b16 %v432
          %v497 = vunpack.c.l.b16 %v433
          %v498 = vunpack.c.l.b16 %v434
          %v499 = vunpack.c.l.b16 %v435
          %v500 = vunpack.c.l.b16 %v436
          %v501 = vunpack.c.l.b16 %v437
          %v502 = vpack.c.b16 %v471, %v470
          %v503 = vpack.c.b16 %v473, %v472
          %v504 = vpack.c.b16 %v475, %v474
          %v505 = vpack.c.b16 %v477, %v476
          %v506 = vpack.c.b16 %v479, %v478
          %v507 = vpack.c.b16 %v481, %v480
          %v508 = vpack.c.b16 %v483, %v482
          %v509 = vpack.c.b16 %v485, %v484
          %v510 = vpack.c.b16 %v487, %v486
          %v511 = vpack.c.b16 %v489, %v488
          %v512 = vpack.c.b16 %v491, %v490
          %v513 = vpack.c.b16 %v493, %v492
          %v514 = vpack.c.b16 %v495, %v494
          %v515 = vpack.c.b16 %v497, %v496
          %v516 = vpack.c.b16 %v499, %v498
          %v517 = vpack.c.b16 %v501, %v500
          %534 = vmatpush.bf16.msra.mxu0 %v509
          %535 = vmatpush.bf16.msra.mxu0 %v508
          %536 = vmatpush.bf16.msra.mxu0 %v507
          %537 = vmatpush.bf16.msra.mxu0 %v506
          %538 = vmatpush.bf16.msra.mxu0 %v505
          %539 = vmatpush.bf16.msra.mxu0 %v504
          %540 = vmatpush.bf16.msra.mxu0 %v503
          %541 = vmatpush.bf16.msra.mxu0 %v502
          %542 = vmatmul.bf16.gmra.mxu0 %v273
          %v543 = vpop.f32.mrf.mxu0
          %v544 = vadd.f32 %v260, %v543
          %v545 = vpop.f32.mrf.mxu0
          %v546 = vadd.f32 %v265, %v545
          %547 = vdwg.mxu0
          %548 = vmatpush.bf16.msra.mxu0 %v517
          %549 = vmatpush.bf16.msra.mxu0 %v516
          %550 = vmatpush.bf16.msra.mxu0 %v515
          %551 = vmatpush.bf16.msra.mxu0 %v514
          %552 = vmatpush.bf16.msra.mxu0 %v513
          %553 = vmatpush.bf16.msra.mxu0 %v512
          %554 = vmatpush.bf16.msra.mxu0 %v511
          %555 = vmatpush.bf16.msra.mxu0 %v510
          %556 = vmatmul.bf16.gmra.mxu0 %v274
          %v557 = vpop.f32.mrf.mxu0
          %v558 = vadd.f32 %v544, %v557
          %v559 = vpop.f32.mrf.mxu0
          %v560 = vadd.f32 %v546, %v559
          %561 = vdwg.mxu0
          %v562 = vmax.f32 %v558, 0.0
          %v563 = vmax.f32 %v560, 0.0
          %v564 = vpack.c.bf16 %v562, %v562
          %v565 = vpack.c.bf16 %v563, %v563
          %s566 = scalar_lea.vmem %s0, 256
          %v567 = vld [vmem:[%s566] sm:$0xf]
          %v568 = vld [vmem:[%s566 + $0x4] sm:$0xf]
          %v569 = vld [vmem:[%s566 + $0x8] sm:$0xf]
          %v570 = vld [vmem:[%s566 + $0xc] sm:$0xf]
          %v571 = vld [vmem:[%s566 + $0x10] sm:$0xf]
          %v572 = vld [vmem:[%s566 + $0x14] sm:$0xf]
          %v573 = vld [vmem:[%s566 + $0x18] sm:$0xf]
          %v574 = vld [vmem:[%s566 + $0x1c] sm:$0xf]
          %v575 = vld [vmem:[%s566 + $0x20] sm:$0xf]
          %v576 = vld [vmem:[%s566 + $0x24] sm:$0xf]
          %v577 = vld [vmem:[%s566 + $0x28] sm:$0xf]
          %v578 = vld [vmem:[%s566 + $0x2c] sm:$0xf]
          %v579 = vld [vmem:[%s566 + $0x30] sm:$0xf]
          %v580 = vld [vmem:[%s566 + $0x34] sm:$0xf]
          %v581 = vld [vmem:[%s566 + $0x38] sm:$0xf]
          %v582 = vld [vmem:[%s566 + $0x3c] sm:$0xf]
          %v583 = vld [vmem:[%s566 + $0x40] sm:$0xf]
          %v584 = vld [vmem:[%s566 + $0x44] sm:$0xf]
          %v585 = vld [vmem:[%s566 + $0x48] sm:$0xf]
          %v586 = vld [vmem:[%s566 + $0x4c] sm:$0xf]
          %v587 = vld [vmem:[%s566 + $0x50] sm:$0xf]
          %v588 = vld [vmem:[%s566 + $0x54] sm:$0xf]
          %v589 = vld [vmem:[%s566 + $0x58] sm:$0xf]
          %v590 = vld [vmem:[%s566 + $0x5c] sm:$0xf]
          %v591 = vld [vmem:[%s566 + $0x60] sm:$0xf]
          %v592 = vld [vmem:[%s566 + $0x64] sm:$0xf]
          %v593 = vld [vmem:[%s566 + $0x68] sm:$0xf]
          %v594 = vld [vmem:[%s566 + $0x6c] sm:$0xf]
          %v595 = vld [vmem:[%s566 + $0x70] sm:$0xf]
          %v596 = vld [vmem:[%s566 + $0x74] sm:$0xf]
          %v597 = vld [vmem:[%s566 + $0x78] sm:$0xf]
          %v598 = vld [vmem:[%s566 + $0x7c] sm:$0xf]
          %v631 = vunpack.c.l.b16 %v567
          %v632 = vunpack.c.l.b16 %v568
          %v633 = vunpack.c.l.b16 %v569
          %v634 = vunpack.c.l.b16 %v570
          %v635 = vunpack.c.l.b16 %v571
          %v636 = vunpack.c.l.b16 %v572
          %v637 = vunpack.c.l.b16 %v573
          %v638 = vunpack.c.l.b16 %v574
          %v639 = vunpack.c.l.b16 %v575
          %v640 = vunpack.c.l.b16 %v576
          %v641 = vunpack.c.l.b16 %v577
          %v642 = vunpack.c.l.b16 %v578
          %v643 = vunpack.c.l.b16 %v579
          %v644 = vunpack.c.l.b16 %v580
          %v645 = vunpack.c.l.b16 %v581
          %v646 = vunpack.c.l.b16 %v582
          %v647 = vunpack.c.l.b16 %v583
          %v648 = vunpack.c.l.b16 %v584
          %v649 = vunpack.c.l.b16 %v585
          %v650 = vunpack.c.l.b16 %v586
          %v651 = vunpack.c.l.b16 %v587
          %v652 = vunpack.c.l.b16 %v588
          %v653 = vunpack.c.l.b16 %v589
          %v654 = vunpack.c.l.b16 %v590
          %v655 = vunpack.c.l.b16 %v591
          %v656 = vunpack.c.l.b16 %v592
          %v657 = vunpack.c.l.b16 %v593
          %v658 = vunpack.c.l.b16 %v594
          %v659 = vunpack.c.l.b16 %v595
          %v660 = vunpack.c.l.b16 %v596
          %v661 = vunpack.c.l.b16 %v597
          %v662 = vunpack.c.l.b16 %v598
          %v663 = vpack.c.b16 %v632, %v631
          %v664 = vpack.c.b16 %v634, %v633
          %v665 = vpack.c.b16 %v636, %v635
          %v666 = vpack.c.b16 %v638, %v637
          %v667 = vpack.c.b16 %v640, %v639
          %v668 = vpack.c.b16 %v642, %v641
          %v669 = vpack.c.b16 %v644, %v643
          %v670 = vpack.c.b16 %v646, %v645
          %v671 = vpack.c.b16 %v648, %v647
          %v672 = vpack.c.b16 %v650, %v649
          %v673 = vpack.c.b16 %v652, %v651
          %v674 = vpack.c.b16 %v654, %v653
          %v675 = vpack.c.b16 %v656, %v655
          %v676 = vpack.c.b16 %v658, %v657
          %v677 = vpack.c.b16 %v660, %v659
          %v678 = vpack.c.b16 %v662, %v661
          %695 = vmatpush.bf16.msra.mxu0 %v670
          %696 = vmatpush.bf16.msra.mxu0 %v669
          %697 = vmatpush.bf16.msra.mxu0 %v668
          %698 = vmatpush.bf16.msra.mxu0 %v667
          %699 = vmatpush.bf16.msra.mxu0 %v666
          %700 = vmatpush.bf16.msra.mxu0 %v665
          %701 = vmatpush.bf16.msra.mxu0 %v664
          %702 = vmatpush.bf16.msra.mxu0 %v663
          %703 = vmatmul.bf16.gmra.mxu0 %v273
          %v704 = vpop.f32.mrf.mxu0
          %v705 = vadd.f32 %v260, %v704
          %v706 = vpop.f32.mrf.mxu0
          %v707 = vadd.f32 %v265, %v706
          %708 = vdwg.mxu0
          %709 = vmatpush.bf16.msra.mxu0 %v678
          %710 = vmatpush.bf16.msra.mxu0 %v677
          %711 = vmatpush.bf16.msra.mxu0 %v676
          %712 = vmatpush.bf16.msra.mxu0 %v675
          %713 = vmatpush.bf16.msra.mxu0 %v674
          %714 = vmatpush.bf16.msra.mxu0 %v673
          %715 = vmatpush.bf16.msra.mxu0 %v672
          %716 = vmatpush.bf16.msra.mxu0 %v671
          %717 = vmatmul.bf16.gmra.mxu0 %v274
          %v718 = vpop.f32.mrf.mxu0
          %v719 = vadd.f32 %v705, %v718
          %v720 = vpop.f32.mrf.mxu0
          %v721 = vadd.f32 %v707, %v720
          %722 = vdwg.mxu0
          %v723 = vmax.f32 %v719, 0.0
          %v724 = vmax.f32 %v721, 0.0
          %v725 = vpack.c.bf16 %v723, %v723
          %v726 = vpack.c.bf16 %v724, %v724
          %s727 = scalar_lea.vmem %s0, 384
          %v728 = vld [vmem:[%s727] sm:$0xf]
          %v729 = vld [vmem:[%s727 + $0x4] sm:$0xf]
          %v730 = vld [vmem:[%s727 + $0x8] sm:$0xf]
          %v731 = vld [vmem:[%s727 + $0xc] sm:$0xf]
          %v732 = vld [vmem:[%s727 + $0x10] sm:$0xf]
          %v733 = vld [vmem:[%s727 + $0x14] sm:$0xf]
          %v734 = vld [vmem:[%s727 + $0x18] sm:$0xf]
          %v735 = vld [vmem:[%s727 + $0x1c] sm:$0xf]
          %v736 = vld [vmem:[%s727 + $0x20] sm:$0xf]
          %v737 = vld [vmem:[%s727 + $0x24] sm:$0xf]
          %v738 = vld [vmem:[%s727 + $0x28] sm:$0xf]
          %v739 = vld [vmem:[%s727 + $0x2c] sm:$0xf]
          %v740 = vld [vmem:[%s727 + $0x30] sm:$0xf]
          %v741 = vld [vmem:[%s727 + $0x34] sm:$0xf]
          %v742 = vld [vmem:[%s727 + $0x38] sm:$0xf]
          %v743 = vld [vmem:[%s727 + $0x3c] sm:$0xf]
          %v744 = vld [vmem:[%s727 + $0x40] sm:$0xf]
          %v745 = vld [vmem:[%s727 + $0x44] sm:$0xf]
          %v746 = vld [vmem:[%s727 + $0x48] sm:$0xf]
          %v747 = vld [vmem:[%s727 + $0x4c] sm:$0xf]
          %v748 = vld [vmem:[%s727 + $0x50] sm:$0xf]
          %v749 = vld [vmem:[%s727 + $0x54] sm:$0xf]
          %v750 = vld [vmem:[%s727 + $0x58] sm:$0xf]
          %v751 = vld [vmem:[%s727 + $0x5c] sm:$0xf]
          %v752 = vld [vmem:[%s727 + $0x60] sm:$0xf]
          %v753 = vld [vmem:[%s727 + $0x64] sm:$0xf]
          %v754 = vld [vmem:[%s727 + $0x68] sm:$0xf]
          %v755 = vld [vmem:[%s727 + $0x6c] sm:$0xf]
          %v756 = vld [vmem:[%s727 + $0x70] sm:$0xf]
          %v757 = vld [vmem:[%s727 + $0x74] sm:$0xf]
          %v758 = vld [vmem:[%s727 + $0x78] sm:$0xf]
          %v759 = vld [vmem:[%s727 + $0x7c] sm:$0xf]
          %v792 = vunpack.c.l.b16 %v728
          %v793 = vunpack.c.l.b16 %v729
          %v794 = vunpack.c.l.b16 %v730
          %v795 = vunpack.c.l.b16 %v731
          %v796 = vunpack.c.l.b16 %v732
          %v797 = vunpack.c.l.b16 %v733
          %v798 = vunpack.c.l.b16 %v734
          %v799 = vunpack.c.l.b16 %v735
          %v800 = vunpack.c.l.b16 %v736
          %v801 = vunpack.c.l.b16 %v737
          %v802 = vunpack.c.l.b16 %v738
          %v803 = vunpack.c.l.b16 %v739
          %v804 = vunpack.c.l.b16 %v740
          %v805 = vunpack.c.l.b16 %v741
          %v806 = vunpack.c.l.b16 %v742
          %v807 = vunpack.c.l.b16 %v743
          %v808 = vunpack.c.l.b16 %v744
          %v809 = vunpack.c.l.b16 %v745
          %v810 = vunpack.c.l.b16 %v746
          %v811 = vunpack.c.l.b16 %v747
          %v812 = vunpack.c.l.b16 %v748
          %v813 = vunpack.c.l.b16 %v749
          %v814 = vunpack.c.l.b16 %v750
          %v815 = vunpack.c.l.b16 %v751
          %v816 = vunpack.c.l.b16 %v752
          %v817 = vunpack.c.l.b16 %v753
          %v818 = vunpack.c.l.b16 %v754
          %v819 = vunpack.c.l.b16 %v755
          %v820 = vunpack.c.l.b16 %v756
          %v821 = vunpack.c.l.b16 %v757
          %v822 = vunpack.c.l.b16 %v758
          %v823 = vunpack.c.l.b16 %v759
          %v824 = vpack.c.b16 %v793, %v792
          %v825 = vpack.c.b16 %v795, %v794
          %v826 = vpack.c.b16 %v797, %v796
          %v827 = vpack.c.b16 %v799, %v798
          %v828 = vpack.c.b16 %v801, %v800
          %v829 = vpack.c.b16 %v803, %v802
          %v830 = vpack.c.b16 %v805, %v804
          %v831 = vpack.c.b16 %v807, %v806
          %v832 = vpack.c.b16 %v809, %v808
          %v833 = vpack.c.b16 %v811, %v810
          %v834 = vpack.c.b16 %v813, %v812
          %v835 = vpack.c.b16 %v815, %v814
          %v836 = vpack.c.b16 %v817, %v816
          %v837 = vpack.c.b16 %v819, %v818
          %v838 = vpack.c.b16 %v821, %v820
          %v839 = vpack.c.b16 %v823, %v822
          %856 = vmatpush.bf16.msra.mxu0 %v831
          %857 = vmatpush.bf16.msra.mxu0 %v830
          %858 = vmatpush.bf16.msra.mxu0 %v829
          %859 = vmatpush.bf16.msra.mxu0 %v828
          %860 = vmatpush.bf16.msra.mxu0 %v827
          %861 = vmatpush.bf16.msra.mxu0 %v826
          %862 = vmatpush.bf16.msra.mxu0 %v825
          %863 = vmatpush.bf16.msra.mxu0 %v824
          %864 = vmatmul.bf16.gmra.mxu0 %v273
          %v865 = vpop.f32.mrf.mxu0
          %v866 = vadd.f32 %v260, %v865
          %v867 = vpop.f32.mrf.mxu0
          %v868 = vadd.f32 %v265, %v867
          %869 = vdwg.mxu0
          %870 = vmatpush.bf16.msra.mxu0 %v839
          %871 = vmatpush.bf16.msra.mxu0 %v838
          %872 = vmatpush.bf16.msra.mxu0 %v837
          %873 = vmatpush.bf16.msra.mxu0 %v836
          %874 = vmatpush.bf16.msra.mxu0 %v835
          %875 = vmatpush.bf16.msra.mxu0 %v834
          %876 = vmatpush.bf16.msra.mxu0 %v833
          %877 = vmatpush.bf16.msra.mxu0 %v832
          %878 = vmatmul.bf16.gmra.mxu0 %v274
          %v879 = vpop.f32.mrf.mxu0
          %v880 = vadd.f32 %v866, %v879
          %v881 = vpop.f32.mrf.mxu0
          %v882 = vadd.f32 %v868, %v881
          %883 = vdwg.mxu0
          %v884 = vmax.f32 %v880, 0.0
          %v885 = vmax.f32 %v882, 0.0
          %v886 = vpack.c.bf16 %v884, %v884
          %v887 = vpack.c.bf16 %v885, %v885
          %s888 = scalar_lea.vmem %s0, 512
          %v889 = vld [vmem:[%s888] sm:$0xf]
          %v890 = vld [vmem:[%s888 + $0x4] sm:$0xf]
          %v891 = vld [vmem:[%s888 + $0x8] sm:$0xf]
          %v892 = vld [vmem:[%s888 + $0xc] sm:$0xf]
          %v893 = vld [vmem:[%s888 + $0x10] sm:$0xf]
          %v894 = vld [vmem:[%s888 + $0x14] sm:$0xf]
          %v895 = vld [vmem:[%s888 + $0x18] sm:$0xf]
          %v896 = vld [vmem:[%s888 + $0x1c] sm:$0xf]
          %v897 = vld [vmem:[%s888 + $0x20] sm:$0xf]
          %v898 = vld [vmem:[%s888 + $0x24] sm:$0xf]
          %v899 = vld [vmem:[%s888 + $0x28] sm:$0xf]
          %v900 = vld [vmem:[%s888 + $0x2c] sm:$0xf]
          %v901 = vld [vmem:[%s888 + $0x30] sm:$0xf]
          %v902 = vld [vmem:[%s888 + $0x34] sm:$0xf]
          %v903 = vld [vmem:[%s888 + $0x38] sm:$0xf]
          %v904 = vld [vmem:[%s888 + $0x3c] sm:$0xf]
          %v905 = vld [vmem:[%s888 + $0x40] sm:$0xf]
          %v906 = vld [vmem:[%s888 + $0x44] sm:$0xf]
          %v907 = vld [vmem:[%s888 + $0x48] sm:$0xf]
          %v908 = vld [vmem:[%s888 + $0x4c] sm:$0xf]
          %v909 = vld [vmem:[%s888 + $0x50] sm:$0xf]
          %v910 = vld [vmem:[%s888 + $0x54] sm:$0xf]
          %v911 = vld [vmem:[%s888 + $0x58] sm:$0xf]
          %v912 = vld [vmem:[%s888 + $0x5c] sm:$0xf]
          %v913 = vld [vmem:[%s888 + $0x60] sm:$0xf]
          %v914 = vld [vmem:[%s888 + $0x64] sm:$0xf]
          %v915 = vld [vmem:[%s888 + $0x68] sm:$0xf]
          %v916 = vld [vmem:[%s888 + $0x6c] sm:$0xf]
          %v917 = vld [vmem:[%s888 + $0x70] sm:$0xf]
          %v918 = vld [vmem:[%s888 + $0x74] sm:$0xf]
          %v919 = vld [vmem:[%s888 + $0x78] sm:$0xf]
          %v920 = vld [vmem:[%s888 + $0x7c] sm:$0xf]
          %v953 = vunpack.c.l.b16 %v889
          %v954 = vunpack.c.l.b16 %v890
          %v955 = vunpack.c.l.b16 %v891
          %v956 = vunpack.c.l.b16 %v892
          %v957 = vunpack.c.l.b16 %v893
          %v958 = vunpack.c.l.b16 %v894
          %v959 = vunpack.c.l.b16 %v895
          %v960 = vunpack.c.l.b16 %v896
          %v961 = vunpack.c.l.b16 %v897
          %v962 = vunpack.c.l.b16 %v898
          %v963 = vunpack.c.l.b16 %v899
          %v964 = vunpack.c.l.b16 %v900
          %v965 = vunpack.c.l.b16 %v901
          %v966 = vunpack.c.l.b16 %v902
          %v967 = vunpack.c.l.b16 %v903
          %v968 = vunpack.c.l.b16 %v904
          %v969 = vunpack.c.l.b16 %v905
          %v970 = vunpack.c.l.b16 %v906
          %v971 = vunpack.c.l.b16 %v907
          %v972 = vunpack.c.l.b16 %v908
          %v973 = vunpack.c.l.b16 %v909
          %v974 = vunpack.c.l.b16 %v910
          %v975 = vunpack.c.l.b16 %v911
          %v976 = vunpack.c.l.b16 %v912
          %v977 = vunpack.c.l.b16 %v913
          %v978 = vunpack.c.l.b16 %v914
          %v979 = vunpack.c.l.b16 %v915
          %v980 = vunpack.c.l.b16 %v916
          %v981 = vunpack.c.l.b16 %v917
          %v982 = vunpack.c.l.b16 %v918
          %v983 = vunpack.c.l.b16 %v919
          %v984 = vunpack.c.l.b16 %v920
          %v985 = vpack.c.b16 %v954, %v953
          %v986 = vpack.c.b16 %v956, %v955
          %v987 = vpack.c.b16 %v958, %v957
          %v988 = vpack.c.b16 %v960, %v959
          %v989 = vpack.c.b16 %v962, %v961
          %v990 = vpack.c.b16 %v964, %v963
          %v991 = vpack.c.b16 %v966, %v965
          %v992 = vpack.c.b16 %v968, %v967
          %v993 = vpack.c.b16 %v970, %v969
          %v994 = vpack.c.b16 %v972, %v971
          %v995 = vpack.c.b16 %v974, %v973
          %v996 = vpack.c.b16 %v976, %v975
          %v997 = vpack.c.b16 %v978, %v977
          %v998 = vpack.c.b16 %v980, %v979
          %v999 = vpack.c.b16 %v982, %v981
          %v1000 = vpack.c.b16 %v984, %v983
          %1017 = vmatpush.bf16.msra.mxu0 %v992
          %1018 = vmatpush.bf16.msra.mxu0 %v991
          %1019 = vmatpush.bf16.msra.mxu0 %v990
          %1020 = vmatpush.bf16.msra.mxu0 %v989
          %1021 = vmatpush.bf16.msra.mxu0 %v988
          %1022 = vmatpush.bf16.msra.mxu0 %v987
          %1023 = vmatpush.bf16.msra.mxu0 %v986
          %1024 = vmatpush.bf16.msra.mxu0 %v985
          %1025 = vmatmul.bf16.gmra.mxu0 %v273
          %v1026 = vpop.f32.mrf.mxu0
          %v1027 = vadd.f32 %v260, %v1026
          %v1028 = vpop.f32.mrf.mxu0
          %v1029 = vadd.f32 %v265, %v1028
          %1030 = vdwg.mxu0
          %1031 = vmatpush.bf16.msra.mxu0 %v1000
          %1032 = vmatpush.bf16.msra.mxu0 %v999
          %1033 = vmatpush.bf16.msra.mxu0 %v998
          %1034 = vmatpush.bf16.msra.mxu0 %v997
          %1035 = vmatpush.bf16.msra.mxu0 %v996
          %1036 = vmatpush.bf16.msra.mxu0 %v995
          %1037 = vmatpush.bf16.msra.mxu0 %v994
          %1038 = vmatpush.bf16.msra.mxu0 %v993
          %1039 = vmatmul.bf16.gmra.mxu0 %v274
          %v1040 = vpop.f32.mrf.mxu0
          %v1041 = vadd.f32 %v1027, %v1040
          %v1042 = vpop.f32.mrf.mxu0
          %v1043 = vadd.f32 %v1029, %v1042
          %1044 = vdwg.mxu0
          %v1045 = vmax.f32 %v1041, 0.0
          %v1046 = vmax.f32 %v1043, 0.0
          %v1047 = vpack.c.bf16 %v1045, %v1045
          %v1048 = vpack.c.bf16 %v1046, %v1046
          %s1049 = scalar_lea.vmem %s0, 640
          %v1050 = vld [vmem:[%s1049] sm:$0xf]
          %v1051 = vld [vmem:[%s1049 + $0x4] sm:$0xf]
          %v1052 = vld [vmem:[%s1049 + $0x8] sm:$0xf]
          %v1053 = vld [vmem:[%s1049 + $0xc] sm:$0xf]
          %v1054 = vld [vmem:[%s1049 + $0x10] sm:$0xf]
          %v1055 = vld [vmem:[%s1049 + $0x14] sm:$0xf]
          %v1056 = vld [vmem:[%s1049 + $0x18] sm:$0xf]
          %v1057 = vld [vmem:[%s1049 + $0x1c] sm:$0xf]
          %v1058 = vld [vmem:[%s1049 + $0x20] sm:$0xf]
          %v1059 = vld [vmem:[%s1049 + $0x24] sm:$0xf]
          %v1060 = vld [vmem:[%s1049 + $0x28] sm:$0xf]
          %v1061 = vld [vmem:[%s1049 + $0x2c] sm:$0xf]
          %v1062 = vld [vmem:[%s1049 + $0x30] sm:$0xf]
          %v1063 = vld [vmem:[%s1049 + $0x34] sm:$0xf]
          %v1064 = vld [vmem:[%s1049 + $0x38] sm:$0xf]
          %v1065 = vld [vmem:[%s1049 + $0x3c] sm:$0xf]
          %v1066 = vld [vmem:[%s1049 + $0x40] sm:$0xf]
          %v1067 = vld [vmem:[%s1049 + $0x44] sm:$0xf]
          %v1068 = vld [vmem:[%s1049 + $0x48] sm:$0xf]
          %v1069 = vld [vmem:[%s1049 + $0x4c] sm:$0xf]
          %v1070 = vld [vmem:[%s1049 + $0x50] sm:$0xf]
          %v1071 = vld [vmem:[%s1049 + $0x54] sm:$0xf]
          %v1072 = vld [vmem:[%s1049 + $0x58] sm:$0xf]
          %v1073 = vld [vmem:[%s1049 + $0x5c] sm:$0xf]
          %v1074 = vld [vmem:[%s1049 + $0x60] sm:$0xf]
          %v1075 = vld [vmem:[%s1049 + $0x64] sm:$0xf]
          %v1076 = vld [vmem:[%s1049 + $0x68] sm:$0xf]
          %v1077 = vld [vmem:[%s1049 + $0x6c] sm:$0xf]
          %v1078 = vld [vmem:[%s1049 + $0x70] sm:$0xf]
          %v1079 = vld [vmem:[%s1049 + $0x74] sm:$0xf]
          %v1080 = vld [vmem:[%s1049 + $0x78] sm:$0xf]
          %v1081 = vld [vmem:[%s1049 + $0x7c] sm:$0xf]
          %v1114 = vunpack.c.l.b16 %v1050
          %v1115 = vunpack.c.l.b16 %v1051
          %v1116 = vunpack.c.l.b16 %v1052
          %v1117 = vunpack.c.l.b16 %v1053
          %v1118 = vunpack.c.l.b16 %v1054
          %v1119 = vunpack.c.l.b16 %v1055
          %v1120 = vunpack.c.l.b16 %v1056
          %v1121 = vunpack.c.l.b16 %v1057
          %v1122 = vunpack.c.l.b16 %v1058
          %v1123 = vunpack.c.l.b16 %v1059
          %v1124 = vunpack.c.l.b16 %v1060
          %v1125 = vunpack.c.l.b16 %v1061
          %v1126 = vunpack.c.l.b16 %v1062
          %v1127 = vunpack.c.l.b16 %v1063
          %v1128 = vunpack.c.l.b16 %v1064
          %v1129 = vunpack.c.l.b16 %v1065
          %v1130 = vunpack.c.l.b16 %v1066
          %v1131 = vunpack.c.l.b16 %v1067
          %v1132 = vunpack.c.l.b16 %v1068
          %v1133 = vunpack.c.l.b16 %v1069
          %v1134 = vunpack.c.l.b16 %v1070
          %v1135 = vunpack.c.l.b16 %v1071
          %v1136 = vunpack.c.l.b16 %v1072
          %v1137 = vunpack.c.l.b16 %v1073
          %v1138 = vunpack.c.l.b16 %v1074
          %v1139 = vunpack.c.l.b16 %v1075
          %v1140 = vunpack.c.l.b16 %v1076
          %v1141 = vunpack.c.l.b16 %v1077
          %v1142 = vunpack.c.l.b16 %v1078
          %v1143 = vunpack.c.l.b16 %v1079
          %v1144 = vunpack.c.l.b16 %v1080
          %v1145 = vunpack.c.l.b16 %v1081
          %v1146 = vpack.c.b16 %v1115, %v1114
          %v1147 = vpack.c.b16 %v1117, %v1116
          %v1148 = vpack.c.b16 %v1119, %v1118
          %v1149 = vpack.c.b16 %v1121, %v1120
          %v1150 = vpack.c.b16 %v1123, %v1122
          %v1151 = vpack.c.b16 %v1125, %v1124
          %v1152 = vpack.c.b16 %v1127, %v1126
          %v1153 = vpack.c.b16 %v1129, %v1128
          %v1154 = vpack.c.b16 %v1131, %v1130
          %v1155 = vpack.c.b16 %v1133, %v1132
          %v1156 = vpack.c.b16 %v1135, %v1134
          %v1157 = vpack.c.b16 %v1137, %v1136
          %v1158 = vpack.c.b16 %v1139, %v1138
          %v1159 = vpack.c.b16 %v1141, %v1140
          %v1160 = vpack.c.b16 %v1143, %v1142
          %v1161 = vpack.c.b16 %v1145, %v1144
          %1178 = vmatpush.bf16.msra.mxu0 %v1153
          %1179 = vmatpush.bf16.msra.mxu0 %v1152
          %1180 = vmatpush.bf16.msra.mxu0 %v1151
          %1181 = vmatpush.bf16.msra.mxu0 %v1150
          %1182 = vmatpush.bf16.msra.mxu0 %v1149
          %1183 = vmatpush.bf16.msra.mxu0 %v1148
          %1184 = vmatpush.bf16.msra.mxu0 %v1147
          %1185 = vmatpush.bf16.msra.mxu0 %v1146
          %1186 = vmatmul.bf16.gmra.mxu0 %v273
          %v1187 = vpop.f32.mrf.mxu0
          %v1188 = vadd.f32 %v260, %v1187
          %v1189 = vpop.f32.mrf.mxu0
          %v1190 = vadd.f32 %v265, %v1189
          %1191 = vdwg.mxu0
          %1192 = vmatpush.bf16.msra.mxu0 %v1161
          %1193 = vmatpush.bf16.msra.mxu0 %v1160
          %1194 = vmatpush.bf16.msra.mxu0 %v1159
          %1195 = vmatpush.bf16.msra.mxu0 %v1158
          %1196 = vmatpush.bf16.msra.mxu0 %v1157
          %1197 = vmatpush.bf16.msra.mxu0 %v1156
          %1198 = vmatpush.bf16.msra.mxu0 %v1155
          %1199 = vmatpush.bf16.msra.mxu0 %v1154
          %1200 = vmatmul.bf16.gmra.mxu0 %v274
          %v1201 = vpop.f32.mrf.mxu0
          %v1202 = vadd.f32 %v1188, %v1201
          %v1203 = vpop.f32.mrf.mxu0
          %v1204 = vadd.f32 %v1190, %v1203
          %1205 = vdwg.mxu0
          %v1206 = vmax.f32 %v1202, 0.0
          %v1207 = vmax.f32 %v1204, 0.0
          %v1208 = vpack.c.bf16 %v1206, %v1206
          %v1209 = vpack.c.bf16 %v1207, %v1207
          %s1210 = scalar_lea.vmem %s0, 768
          %v1211 = vld [vmem:[%s1210] sm:$0xf]
          %v1212 = vld [vmem:[%s1210 + $0x4] sm:$0xf]
          %v1213 = vld [vmem:[%s1210 + $0x8] sm:$0xf]
          %v1214 = vld [vmem:[%s1210 + $0xc] sm:$0xf]
          %v1215 = vld [vmem:[%s1210 + $0x10] sm:$0xf]
          %v1216 = vld [vmem:[%s1210 + $0x14] sm:$0xf]
          %v1217 = vld [vmem:[%s1210 + $0x18] sm:$0xf]
          %v1218 = vld [vmem:[%s1210 + $0x1c] sm:$0xf]
          %v1219 = vld [vmem:[%s1210 + $0x20] sm:$0xf]
          %v1220 = vld [vmem:[%s1210 + $0x24] sm:$0xf]
          %v1221 = vld [vmem:[%s1210 + $0x28] sm:$0xf]
          %v1222 = vld [vmem:[%s1210 + $0x2c] sm:$0xf]
          %v1223 = vld [vmem:[%s1210 + $0x30] sm:$0xf]
          %v1224 = vld [vmem:[%s1210 + $0x34] sm:$0xf]
          %v1225 = vld [vmem:[%s1210 + $0x38] sm:$0xf]
          %v1226 = vld [vmem:[%s1210 + $0x3c] sm:$0xf]
          %v1227 = vld [vmem:[%s1210 + $0x40] sm:$0xf]
          %v1228 = vld [vmem:[%s1210 + $0x44] sm:$0xf]
          %v1229 = vld [vmem:[%s1210 + $0x48] sm:$0xf]
          %v1230 = vld [vmem:[%s1210 + $0x4c] sm:$0xf]
          %v1231 = vld [vmem:[%s1210 + $0x50] sm:$0xf]
          %v1232 = vld [vmem:[%s1210 + $0x54] sm:$0xf]
          %v1233 = vld [vmem:[%s1210 + $0x58] sm:$0xf]
          %v1234 = vld [vmem:[%s1210 + $0x5c] sm:$0xf]
          %v1235 = vld [vmem:[%s1210 + $0x60] sm:$0xf]
          %v1236 = vld [vmem:[%s1210 + $0x64] sm:$0xf]
          %v1237 = vld [vmem:[%s1210 + $0x68] sm:$0xf]
          %v1238 = vld [vmem:[%s1210 + $0x6c] sm:$0xf]
          %v1239 = vld [vmem:[%s1210 + $0x70] sm:$0xf]
          %v1240 = vld [vmem:[%s1210 + $0x74] sm:$0xf]
          %v1241 = vld [vmem:[%s1210 + $0x78] sm:$0xf]
          %v1242 = vld [vmem:[%s1210 + $0x7c] sm:$0xf]
          %v1275 = vunpack.c.l.b16 %v1211
          %v1276 = vunpack.c.l.b16 %v1212
          %v1277 = vunpack.c.l.b16 %v1213
          %v1278 = vunpack.c.l.b16 %v1214
          %v1279 = vunpack.c.l.b16 %v1215
          %v1280 = vunpack.c.l.b16 %v1216
          %v1281 = vunpack.c.l.b16 %v1217
          %v1282 = vunpack.c.l.b16 %v1218
          %v1283 = vunpack.c.l.b16 %v1219
          %v1284 = vunpack.c.l.b16 %v1220
          %v1285 = vunpack.c.l.b16 %v1221
          %v1286 = vunpack.c.l.b16 %v1222
          %v1287 = vunpack.c.l.b16 %v1223
          %v1288 = vunpack.c.l.b16 %v1224
          %v1289 = vunpack.c.l.b16 %v1225
          %v1290 = vunpack.c.l.b16 %v1226
          %v1291 = vunpack.c.l.b16 %v1227
          %v1292 = vunpack.c.l.b16 %v1228
          %v1293 = vunpack.c.l.b16 %v1229
          %v1294 = vunpack.c.l.b16 %v1230
          %v1295 = vunpack.c.l.b16 %v1231
          %v1296 = vunpack.c.l.b16 %v1232
          %v1297 = vunpack.c.l.b16 %v1233
          %v1298 = vunpack.c.l.b16 %v1234
          %v1299 = vunpack.c.l.b16 %v1235
          %v1300 = vunpack.c.l.b16 %v1236
          %v1301 = vunpack.c.l.b16 %v1237
          %v1302 = vunpack.c.l.b16 %v1238
          %v1303 = vunpack.c.l.b16 %v1239
          %v1304 = vunpack.c.l.b16 %v1240
          %v1305 = vunpack.c.l.b16 %v1241
          %v1306 = vunpack.c.l.b16 %v1242
          %v1307 = vpack.c.b16 %v1276, %v1275
          %v1308 = vpack.c.b16 %v1278, %v1277
          %v1309 = vpack.c.b16 %v1280, %v1279
          %v1310 = vpack.c.b16 %v1282, %v1281
          %v1311 = vpack.c.b16 %v1284, %v1283
          %v1312 = vpack.c.b16 %v1286, %v1285
          %v1313 = vpack.c.b16 %v1288, %v1287
          %v1314 = vpack.c.b16 %v1290, %v1289
          %v1315 = vpack.c.b16 %v1292, %v1291
          %v1316 = vpack.c.b16 %v1294, %v1293
          %v1317 = vpack.c.b16 %v1296, %v1295
          %v1318 = vpack.c.b16 %v1298, %v1297
          %v1319 = vpack.c.b16 %v1300, %v1299
          %v1320 = vpack.c.b16 %v1302, %v1301
          %v1321 = vpack.c.b16 %v1304, %v1303
          %v1322 = vpack.c.b16 %v1306, %v1305
          %1339 = vmatpush.bf16.msra.mxu0 %v1314
          %1340 = vmatpush.bf16.msra.mxu0 %v1313
          %1341 = vmatpush.bf16.msra.mxu0 %v1312
          %1342 = vmatpush.bf16.msra.mxu0 %v1311
          %1343 = vmatpush.bf16.msra.mxu0 %v1310
          %1344 = vmatpush.bf16.msra.mxu0 %v1309
          %1345 = vmatpush.bf16.msra.mxu0 %v1308
          %1346 = vmatpush.bf16.msra.mxu0 %v1307
          %1347 = vmatmul.bf16.gmra.mxu0 %v273
          %v1348 = vpop.f32.mrf.mxu0
          %v1349 = vadd.f32 %v260, %v1348
          %v1350 = vpop.f32.mrf.mxu0
          %v1351 = vadd.f32 %v265, %v1350
          %1352 = vdwg.mxu0
          %1353 = vmatpush.bf16.msra.mxu0 %v1322
          %1354 = vmatpush.bf16.msra.mxu0 %v1321
          %1355 = vmatpush.bf16.msra.mxu0 %v1320
          %1356 = vmatpush.bf16.msra.mxu0 %v1319
          %1357 = vmatpush.bf16.msra.mxu0 %v1318
          %1358 = vmatpush.bf16.msra.mxu0 %v1317
          %1359 = vmatpush.bf16.msra.mxu0 %v1316
          %1360 = vmatpush.bf16.msra.mxu0 %v1315
          %1361 = vmatmul.bf16.gmra.mxu0 %v274
          %v1362 = vpop.f32.mrf.mxu0
          %v1363 = vadd.f32 %v1349, %v1362
          %v1364 = vpop.f32.mrf.mxu0
          %v1365 = vadd.f32 %v1351, %v1364
          %1366 = vdwg.mxu0
          %v1367 = vmax.f32 %v1363, 0.0
          %v1368 = vmax.f32 %v1365, 0.0
          %v1369 = vpack.c.bf16 %v1367, %v1367
          %v1370 = vpack.c.bf16 %v1368, %v1368
          %s1371 = scalar_lea.vmem %s0, 896
          %v1372 = vld [vmem:[%s1371] sm:$0xf]
          %v1373 = vld [vmem:[%s1371 + $0x4] sm:$0xf]
          %v1374 = vld [vmem:[%s1371 + $0x8] sm:$0xf]
          %v1375 = vld [vmem:[%s1371 + $0xc] sm:$0xf]
          %v1376 = vld [vmem:[%s1371 + $0x10] sm:$0xf]
          %v1377 = vld [vmem:[%s1371 + $0x14] sm:$0xf]
          %v1378 = vld [vmem:[%s1371 + $0x18] sm:$0xf]
          %v1379 = vld [vmem:[%s1371 + $0x1c] sm:$0xf]
          %v1380 = vld [vmem:[%s1371 + $0x20] sm:$0xf]
          %v1381 = vld [vmem:[%s1371 + $0x24] sm:$0xf]
          %v1382 = vld [vmem:[%s1371 + $0x28] sm:$0xf]
          %v1383 = vld [vmem:[%s1371 + $0x2c] sm:$0xf]
          %v1384 = vld [vmem:[%s1371 + $0x30] sm:$0xf]
          %v1385 = vld [vmem:[%s1371 + $0x34] sm:$0xf]
          %v1386 = vld [vmem:[%s1371 + $0x38] sm:$0xf]
          %v1387 = vld [vmem:[%s1371 + $0x3c] sm:$0xf]
          %v1388 = vld [vmem:[%s1371 + $0x40] sm:$0xf]
          %v1389 = vld [vmem:[%s1371 + $0x44] sm:$0xf]
          %v1390 = vld [vmem:[%s1371 + $0x48] sm:$0xf]
          %v1391 = vld [vmem:[%s1371 + $0x4c] sm:$0xf]
          %v1392 = vld [vmem:[%s1371 + $0x50] sm:$0xf]
          %v1393 = vld [vmem:[%s1371 + $0x54] sm:$0xf]
          %v1394 = vld [vmem:[%s1371 + $0x58] sm:$0xf]
          %v1395 = vld [vmem:[%s1371 + $0x5c] sm:$0xf]
          %v1396 = vld [vmem:[%s1371 + $0x60] sm:$0xf]
          %v1397 = vld [vmem:[%s1371 + $0x64] sm:$0xf]
          %v1398 = vld [vmem:[%s1371 + $0x68] sm:$0xf]
          %v1399 = vld [vmem:[%s1371 + $0x6c] sm:$0xf]
          %v1400 = vld [vmem:[%s1371 + $0x70] sm:$0xf]
          %v1401 = vld [vmem:[%s1371 + $0x74] sm:$0xf]
          %v1402 = vld [vmem:[%s1371 + $0x78] sm:$0xf]
          %v1403 = vld [vmem:[%s1371 + $0x7c] sm:$0xf]
          %v1436 = vunpack.c.l.b16 %v1372
          %v1437 = vunpack.c.l.b16 %v1373
          %v1438 = vunpack.c.l.b16 %v1374
          %v1439 = vunpack.c.l.b16 %v1375
          %v1440 = vunpack.c.l.b16 %v1376
          %v1441 = vunpack.c.l.b16 %v1377
          %v1442 = vunpack.c.l.b16 %v1378
          %v1443 = vunpack.c.l.b16 %v1379
          %v1444 = vunpack.c.l.b16 %v1380
          %v1445 = vunpack.c.l.b16 %v1381
          %v1446 = vunpack.c.l.b16 %v1382
          %v1447 = vunpack.c.l.b16 %v1383
          %v1448 = vunpack.c.l.b16 %v1384
          %v1449 = vunpack.c.l.b16 %v1385
          %v1450 = vunpack.c.l.b16 %v1386
          %v1451 = vunpack.c.l.b16 %v1387
          %v1452 = vunpack.c.l.b16 %v1388
          %v1453 = vunpack.c.l.b16 %v1389
          %v1454 = vunpack.c.l.b16 %v1390
          %v1455 = vunpack.c.l.b16 %v1391
          %v1456 = vunpack.c.l.b16 %v1392
          %v1457 = vunpack.c.l.b16 %v1393
          %v1458 = vunpack.c.l.b16 %v1394
          %v1459 = vunpack.c.l.b16 %v1395
          %v1460 = vunpack.c.l.b16 %v1396
          %v1461 = vunpack.c.l.b16 %v1397
          %v1462 = vunpack.c.l.b16 %v1398
          %v1463 = vunpack.c.l.b16 %v1399
          %v1464 = vunpack.c.l.b16 %v1400
          %v1465 = vunpack.c.l.b16 %v1401
          %v1466 = vunpack.c.l.b16 %v1402
          %v1467 = vunpack.c.l.b16 %v1403
          %v1468 = vpack.c.b16 %v1437, %v1436
          %v1469 = vpack.c.b16 %v1439, %v1438
          %v1470 = vpack.c.b16 %v1441, %v1440
          %v1471 = vpack.c.b16 %v1443, %v1442
          %v1472 = vpack.c.b16 %v1445, %v1444
          %v1473 = vpack.c.b16 %v1447, %v1446
          %v1474 = vpack.c.b16 %v1449, %v1448
          %v1475 = vpack.c.b16 %v1451, %v1450
          %v1476 = vpack.c.b16 %v1453, %v1452
          %v1477 = vpack.c.b16 %v1455, %v1454
          %v1478 = vpack.c.b16 %v1457, %v1456
          %v1479 = vpack.c.b16 %v1459, %v1458
          %v1480 = vpack.c.b16 %v1461, %v1460
          %v1481 = vpack.c.b16 %v1463, %v1462
          %v1482 = vpack.c.b16 %v1465, %v1464
          %v1483 = vpack.c.b16 %v1467, %v1466
          %1500 = vmatpush.bf16.msra.mxu0 %v1475
          %1501 = vmatpush.bf16.msra.mxu0 %v1474
          %1502 = vmatpush.bf16.msra.mxu0 %v1473
          %1503 = vmatpush.bf16.msra.mxu0 %v1472
          %1504 = vmatpush.bf16.msra.mxu0 %v1471
          %1505 = vmatpush.bf16.msra.mxu0 %v1470
          %1506 = vmatpush.bf16.msra.mxu0 %v1469
          %1507 = vmatpush.bf16.msra.mxu0 %v1468
          %1508 = vmatmul.bf16.gmra.mxu0 %v273
          %v1509 = vpop.f32.mrf.mxu0
          %v1510 = vadd.f32 %v260, %v1509
          %v1511 = vpop.f32.mrf.mxu0
          %v1512 = vadd.f32 %v265, %v1511
          %1513 = vdwg.mxu0
          %1514 = vmatpush.bf16.msra.mxu0 %v1483
          %1515 = vmatpush.bf16.msra.mxu0 %v1482
          %1516 = vmatpush.bf16.msra.mxu0 %v1481
          %1517 = vmatpush.bf16.msra.mxu0 %v1480
          %1518 = vmatpush.bf16.msra.mxu0 %v1479
          %1519 = vmatpush.bf16.msra.mxu0 %v1478
          %1520 = vmatpush.bf16.msra.mxu0 %v1477
          %1521 = vmatpush.bf16.msra.mxu0 %v1476
          %1522 = vmatmul.bf16.gmra.mxu0 %v274
          %v1523 = vpop.f32.mrf.mxu0
          %v1524 = vadd.f32 %v1510, %v1523
          %v1525 = vpop.f32.mrf.mxu0
          %v1526 = vadd.f32 %v1512, %v1525
          %1527 = vdwg.mxu0
          %v1528 = vmax.f32 %v1524, 0.0
          %v1529 = vmax.f32 %v1526, 0.0
          %v1530 = vpack.c.bf16 %v1528, %v1528
          %v1531 = vpack.c.bf16 %v1529, %v1529
          %s1532 = scalar_lea.vmem %s0, 1024
          %v1533 = vld [vmem:[%s1532] sm:$0xf]
          %v1534 = vld [vmem:[%s1532 + $0x4] sm:$0xf]
          %v1535 = vld [vmem:[%s1532 + $0x8] sm:$0xf]
          %v1536 = vld [vmem:[%s1532 + $0xc] sm:$0xf]
          %v1537 = vld [vmem:[%s1532 + $0x10] sm:$0xf]
          %v1538 = vld [vmem:[%s1532 + $0x14] sm:$0xf]
          %v1539 = vld [vmem:[%s1532 + $0x18] sm:$0xf]
          %v1540 = vld [vmem:[%s1532 + $0x1c] sm:$0xf]
          %v1541 = vld [vmem:[%s1532 + $0x20] sm:$0xf]
          %v1542 = vld [vmem:[%s1532 + $0x24] sm:$0xf]
          %v1543 = vld [vmem:[%s1532 + $0x28] sm:$0xf]
          %v1544 = vld [vmem:[%s1532 + $0x2c] sm:$0xf]
          %v1545 = vld [vmem:[%s1532 + $0x30] sm:$0xf]
          %v1546 = vld [vmem:[%s1532 + $0x34] sm:$0xf]
          %v1547 = vld [vmem:[%s1532 + $0x38] sm:$0xf]
          %v1548 = vld [vmem:[%s1532 + $0x3c] sm:$0xf]
          %v1549 = vld [vmem:[%s1532 + $0x40] sm:$0xf]
          %v1550 = vld [vmem:[%s1532 + $0x44] sm:$0xf]
          %v1551 = vld [vmem:[%s1532 + $0x48] sm:$0xf]
          %v1552 = vld [vmem:[%s1532 + $0x4c] sm:$0xf]
          %v1553 = vld [vmem:[%s1532 + $0x50] sm:$0xf]
          %v1554 = vld [vmem:[%s1532 + $0x54] sm:$0xf]
          %v1555 = vld [vmem:[%s1532 + $0x58] sm:$0xf]
          %v1556 = vld [vmem:[%s1532 + $0x5c] sm:$0xf]
          %v1557 = vld [vmem:[%s1532 + $0x60] sm:$0xf]
          %v1558 = vld [vmem:[%s1532 + $0x64] sm:$0xf]
          %v1559 = vld [vmem:[%s1532 + $0x68] sm:$0xf]
          %v1560 = vld [vmem:[%s1532 + $0x6c] sm:$0xf]
          %v1561 = vld [vmem:[%s1532 + $0x70] sm:$0xf]
          %v1562 = vld [vmem:[%s1532 + $0x74] sm:$0xf]
          %v1563 = vld [vmem:[%s1532 + $0x78] sm:$0xf]
          %v1564 = vld [vmem:[%s1532 + $0x7c] sm:$0xf]
          %v1597 = vunpack.c.l.b16 %v1533
          %v1598 = vunpack.c.l.b16 %v1534
          %v1599 = vunpack.c.l.b16 %v1535
          %v1600 = vunpack.c.l.b16 %v1536
          %v1601 = vunpack.c.l.b16 %v1537
          %v1602 = vunpack.c.l.b16 %v1538
          %v1603 = vunpack.c.l.b16 %v1539
          %v1604 = vunpack.c.l.b16 %v1540
          %v1605 = vunpack.c.l.b16 %v1541
          %v1606 = vunpack.c.l.b16 %v1542
          %v1607 = vunpack.c.l.b16 %v1543
          %v1608 = vunpack.c.l.b16 %v1544
          %v1609 = vunpack.c.l.b16 %v1545
          %v1610 = vunpack.c.l.b16 %v1546
          %v1611 = vunpack.c.l.b16 %v1547
          %v1612 = vunpack.c.l.b16 %v1548
          %v1613 = vunpack.c.l.b16 %v1549
          %v1614 = vunpack.c.l.b16 %v1550
          %v1615 = vunpack.c.l.b16 %v1551
          %v1616 = vunpack.c.l.b16 %v1552
          %v1617 = vunpack.c.l.b16 %v1553
          %v1618 = vunpack.c.l.b16 %v1554
          %v1619 = vunpack.c.l.b16 %v1555
          %v1620 = vunpack.c.l.b16 %v1556
          %v1621 = vunpack.c.l.b16 %v1557
          %v1622 = vunpack.c.l.b16 %v1558
          %v1623 = vunpack.c.l.b16 %v1559
          %v1624 = vunpack.c.l.b16 %v1560
          %v1625 = vunpack.c.l.b16 %v1561
          %v1626 = vunpack.c.l.b16 %v1562
          %v1627 = vunpack.c.l.b16 %v1563
          %v1628 = vunpack.c.l.b16 %v1564
          %v1629 = vpack.c.b16 %v1598, %v1597
          %v1630 = vpack.c.b16 %v1600, %v1599
          %v1631 = vpack.c.b16 %v1602, %v1601
          %v1632 = vpack.c.b16 %v1604, %v1603
          %v1633 = vpack.c.b16 %v1606, %v1605
          %v1634 = vpack.c.b16 %v1608, %v1607
          %v1635 = vpack.c.b16 %v1610, %v1609
          %v1636 = vpack.c.b16 %v1612, %v1611
          %v1637 = vpack.c.b16 %v1614, %v1613
          %v1638 = vpack.c.b16 %v1616, %v1615
          %v1639 = vpack.c.b16 %v1618, %v1617
          %v1640 = vpack.c.b16 %v1620, %v1619
          %v1641 = vpack.c.b16 %v1622, %v1621
          %v1642 = vpack.c.b16 %v1624, %v1623
          %v1643 = vpack.c.b16 %v1626, %v1625
          %v1644 = vpack.c.b16 %v1628, %v1627
          %1661 = vmatpush.bf16.msra.mxu0 %v1636
          %1662 = vmatpush.bf16.msra.mxu0 %v1635
          %1663 = vmatpush.bf16.msra.mxu0 %v1634
          %1664 = vmatpush.bf16.msra.mxu0 %v1633
          %1665 = vmatpush.bf16.msra.mxu0 %v1632
          %1666 = vmatpush.bf16.msra.mxu0 %v1631
          %1667 = vmatpush.bf16.msra.mxu0 %v1630
          %1668 = vmatpush.bf16.msra.mxu0 %v1629
          %1669 = vmatmul.bf16.gmra.mxu0 %v273
          %v1670 = vpop.f32.mrf.mxu0
          %v1671 = vadd.f32 %v260, %v1670
          %v1672 = vpop.f32.mrf.mxu0
          %v1673 = vadd.f32 %v265, %v1672
          %1674 = vdwg.mxu0
          %1675 = vmatpush.bf16.msra.mxu0 %v1644
          %1676 = vmatpush.bf16.msra.mxu0 %v1643
          %1677 = vmatpush.bf16.msra.mxu0 %v1642
          %1678 = vmatpush.bf16.msra.mxu0 %v1641
          %1679 = vmatpush.bf16.msra.mxu0 %v1640
          %1680 = vmatpush.bf16.msra.mxu0 %v1639
          %1681 = vmatpush.bf16.msra.mxu0 %v1638
          %1682 = vmatpush.bf16.msra.mxu0 %v1637
          %1683 = vmatmul.bf16.gmra.mxu0 %v274
          %v1684 = vpop.f32.mrf.mxu0
          %v1685 = vadd.f32 %v1671, %v1684
          %v1686 = vpop.f32.mrf.mxu0
          %v1687 = vadd.f32 %v1673, %v1686
          %1688 = vdwg.mxu0
          %v1689 = vmax.f32 %v1685, 0.0
          %v1690 = vmax.f32 %v1687, 0.0
          %v1691 = vpack.c.bf16 %v1689, %v1689
          %v1692 = vpack.c.bf16 %v1690, %v1690
          %s1693 = scalar_lea.vmem %s0, 1152
          %v1694 = vld [vmem:[%s1693] sm:$0xf]
          %v1695 = vld [vmem:[%s1693 + $0x4] sm:$0xf]
          %v1696 = vld [vmem:[%s1693 + $0x8] sm:$0xf]
          %v1697 = vld [vmem:[%s1693 + $0xc] sm:$0xf]
          %v1698 = vld [vmem:[%s1693 + $0x10] sm:$0xf]
          %v1699 = vld [vmem:[%s1693 + $0x14] sm:$0xf]
          %v1700 = vld [vmem:[%s1693 + $0x18] sm:$0xf]
          %v1701 = vld [vmem:[%s1693 + $0x1c] sm:$0xf]
          %v1702 = vld [vmem:[%s1693 + $0x20] sm:$0xf]
          %v1703 = vld [vmem:[%s1693 + $0x24] sm:$0xf]
          %v1704 = vld [vmem:[%s1693 + $0x28] sm:$0xf]
          %v1705 = vld [vmem:[%s1693 + $0x2c] sm:$0xf]
          %v1706 = vld [vmem:[%s1693 + $0x30] sm:$0xf]
          %v1707 = vld [vmem:[%s1693 + $0x34] sm:$0xf]
          %v1708 = vld [vmem:[%s1693 + $0x38] sm:$0xf]
          %v1709 = vld [vmem:[%s1693 + $0x3c] sm:$0xf]
          %v1710 = vld [vmem:[%s1693 + $0x40] sm:$0xf]
          %v1711 = vld [vmem:[%s1693 + $0x44] sm:$0xf]
          %v1712 = vld [vmem:[%s1693 + $0x48] sm:$0xf]
          %v1713 = vld [vmem:[%s1693 + $0x4c] sm:$0xf]
          %v1714 = vld [vmem:[%s1693 + $0x50] sm:$0xf]
          %v1715 = vld [vmem:[%s1693 + $0x54] sm:$0xf]
          %v1716 = vld [vmem:[%s1693 + $0x58] sm:$0xf]
          %v1717 = vld [vmem:[%s1693 + $0x5c] sm:$0xf]
          %v1718 = vld [vmem:[%s1693 + $0x60] sm:$0xf]
          %v1719 = vld [vmem:[%s1693 + $0x64] sm:$0xf]
          %v1720 = vld [vmem:[%s1693 + $0x68] sm:$0xf]
          %v1721 = vld [vmem:[%s1693 + $0x6c] sm:$0xf]
          %v1722 = vld [vmem:[%s1693 + $0x70] sm:$0xf]
          %v1723 = vld [vmem:[%s1693 + $0x74] sm:$0xf]
          %v1724 = vld [vmem:[%s1693 + $0x78] sm:$0xf]
          %v1725 = vld [vmem:[%s1693 + $0x7c] sm:$0xf]
          %v1758 = vunpack.c.l.b16 %v1694
          %v1759 = vunpack.c.l.b16 %v1695
          %v1760 = vunpack.c.l.b16 %v1696
          %v1761 = vunpack.c.l.b16 %v1697
          %v1762 = vunpack.c.l.b16 %v1698
          %v1763 = vunpack.c.l.b16 %v1699
          %v1764 = vunpack.c.l.b16 %v1700
          %v1765 = vunpack.c.l.b16 %v1701
          %v1766 = vunpack.c.l.b16 %v1702
          %v1767 = vunpack.c.l.b16 %v1703
          %v1768 = vunpack.c.l.b16 %v1704
          %v1769 = vunpack.c.l.b16 %v1705
          %v1770 = vunpack.c.l.b16 %v1706
          %v1771 = vunpack.c.l.b16 %v1707
          %v1772 = vunpack.c.l.b16 %v1708
          %v1773 = vunpack.c.l.b16 %v1709
          %v1774 = vunpack.c.l.b16 %v1710
          %v1775 = vunpack.c.l.b16 %v1711
          %v1776 = vunpack.c.l.b16 %v1712
          %v1777 = vunpack.c.l.b16 %v1713
          %v1778 = vunpack.c.l.b16 %v1714
          %v1779 = vunpack.c.l.b16 %v1715
          %v1780 = vunpack.c.l.b16 %v1716
          %v1781 = vunpack.c.l.b16 %v1717
          %v1782 = vunpack.c.l.b16 %v1718
          %v1783 = vunpack.c.l.b16 %v1719
          %v1784 = vunpack.c.l.b16 %v1720
          %v1785 = vunpack.c.l.b16 %v1721
          %v1786 = vunpack.c.l.b16 %v1722
          %v1787 = vunpack.c.l.b16 %v1723
          %v1788 = vunpack.c.l.b16 %v1724
          %v1789 = vunpack.c.l.b16 %v1725
          %v1790 = vpack.c.b16 %v1759, %v1758
          %v1791 = vpack.c.b16 %v1761, %v1760
          %v1792 = vpack.c.b16 %v1763, %v1762
          %v1793 = vpack.c.b16 %v1765, %v1764
          %v1794 = vpack.c.b16 %v1767, %v1766
          %v1795 = vpack.c.b16 %v1769, %v1768
          %v1796 = vpack.c.b16 %v1771, %v1770
          %v1797 = vpack.c.b16 %v1773, %v1772
          %v1798 = vpack.c.b16 %v1775, %v1774
          %v1799 = vpack.c.b16 %v1777, %v1776
          %v1800 = vpack.c.b16 %v1779, %v1778
          %v1801 = vpack.c.b16 %v1781, %v1780
          %v1802 = vpack.c.b16 %v1783, %v1782
          %v1803 = vpack.c.b16 %v1785, %v1784
          %v1804 = vpack.c.b16 %v1787, %v1786
          %v1805 = vpack.c.b16 %v1789, %v1788
          %1822 = vmatpush.bf16.msra.mxu0 %v1797
          %1823 = vmatpush.bf16.msra.mxu0 %v1796
          %1824 = vmatpush.bf16.msra.mxu0 %v1795
          %1825 = vmatpush.bf16.msra.mxu0 %v1794
          %1826 = vmatpush.bf16.msra.mxu0 %v1793
          %1827 = vmatpush.bf16.msra.mxu0 %v1792
          %1828 = vmatpush.bf16.msra.mxu0 %v1791
          %1829 = vmatpush.bf16.msra.mxu0 %v1790
          %1830 = vmatmul.bf16.gmra.mxu0 %v273
          %v1831 = vpop.f32.mrf.mxu0
          %v1832 = vadd.f32 %v260, %v1831
          %v1833 = vpop.f32.mrf.mxu0
          %v1834 = vadd.f32 %v265, %v1833
          %1835 = vdwg.mxu0
          %1836 = vmatpush.bf16.msra.mxu0 %v1805
          %1837 = vmatpush.bf16.msra.mxu0 %v1804
          %1838 = vmatpush.bf16.msra.mxu0 %v1803
          %1839 = vmatpush.bf16.msra.mxu0 %v1802
          %1840 = vmatpush.bf16.msra.mxu0 %v1801
          %1841 = vmatpush.bf16.msra.mxu0 %v1800
          %1842 = vmatpush.bf16.msra.mxu0 %v1799
          %1843 = vmatpush.bf16.msra.mxu0 %v1798
          %1844 = vmatmul.bf16.gmra.mxu0 %v274
          %v1845 = vpop.f32.mrf.mxu0
          %v1846 = vadd.f32 %v1832, %v1845
          %v1847 = vpop.f32.mrf.mxu0
          %v1848 = vadd.f32 %v1834, %v1847
          %1849 = vdwg.mxu0
          %v1850 = vmax.f32 %v1846, 0.0
          %v1851 = vmax.f32 %v1848, 0.0
          %v1852 = vpack.c.bf16 %v1850, %v1850
          %v1853 = vpack.c.bf16 %v1851, %v1851
          %s1854 = scalar_lea.vmem %s0, 1280
          %v1855 = vld [vmem:[%s1854] sm:$0xf]
          %v1856 = vld [vmem:[%s1854 + $0x4] sm:$0xf]
          %v1857 = vld [vmem:[%s1854 + $0x8] sm:$0xf]
          %v1858 = vld [vmem:[%s1854 + $0xc] sm:$0xf]
          %v1859 = vld [vmem:[%s1854 + $0x10] sm:$0xf]
          %v1860 = vld [vmem:[%s1854 + $0x14] sm:$0xf]
          %v1861 = vld [vmem:[%s1854 + $0x18] sm:$0xf]
          %v1862 = vld [vmem:[%s1854 + $0x1c] sm:$0xf]
          %v1863 = vld [vmem:[%s1854 + $0x20] sm:$0xf]
          %v1864 = vld [vmem:[%s1854 + $0x24] sm:$0xf]
          %v1865 = vld [vmem:[%s1854 + $0x28] sm:$0xf]
          %v1866 = vld [vmem:[%s1854 + $0x2c] sm:$0xf]
          %v1867 = vld [vmem:[%s1854 + $0x30] sm:$0xf]
          %v1868 = vld [vmem:[%s1854 + $0x34] sm:$0xf]
          %v1869 = vld [vmem:[%s1854 + $0x38] sm:$0xf]
          %v1870 = vld [vmem:[%s1854 + $0x3c] sm:$0xf]
          %v1871 = vld [vmem:[%s1854 + $0x40] sm:$0xf]
          %v1872 = vld [vmem:[%s1854 + $0x44] sm:$0xf]
          %v1873 = vld [vmem:[%s1854 + $0x48] sm:$0xf]
          %v1874 = vld [vmem:[%s1854 + $0x4c] sm:$0xf]
          %v1875 = vld [vmem:[%s1854 + $0x50] sm:$0xf]
          %v1876 = vld [vmem:[%s1854 + $0x54] sm:$0xf]
          %v1877 = vld [vmem:[%s1854 + $0x58] sm:$0xf]
          %v1878 = vld [vmem:[%s1854 + $0x5c] sm:$0xf]
          %v1879 = vld [vmem:[%s1854 + $0x60] sm:$0xf]
          %v1880 = vld [vmem:[%s1854 + $0x64] sm:$0xf]
          %v1881 = vld [vmem:[%s1854 + $0x68] sm:$0xf]
          %v1882 = vld [vmem:[%s1854 + $0x6c] sm:$0xf]
          %v1883 = vld [vmem:[%s1854 + $0x70] sm:$0xf]
          %v1884 = vld [vmem:[%s1854 + $0x74] sm:$0xf]
          %v1885 = vld [vmem:[%s1854 + $0x78] sm:$0xf]
          %v1886 = vld [vmem:[%s1854 + $0x7c] sm:$0xf]
          %v1919 = vunpack.c.l.b16 %v1855
          %v1920 = vunpack.c.l.b16 %v1856
          %v1921 = vunpack.c.l.b16 %v1857
          %v1922 = vunpack.c.l.b16 %v1858
          %v1923 = vunpack.c.l.b16 %v1859
          %v1924 = vunpack.c.l.b16 %v1860
          %v1925 = vunpack.c.l.b16 %v1861
          %v1926 = vunpack.c.l.b16 %v1862
          %v1927 = vunpack.c.l.b16 %v1863
          %v1928 = vunpack.c.l.b16 %v1864
          %v1929 = vunpack.c.l.b16 %v1865
          %v1930 = vunpack.c.l.b16 %v1866
          %v1931 = vunpack.c.l.b16 %v1867
          %v1932 = vunpack.c.l.b16 %v1868
          %v1933 = vunpack.c.l.b16 %v1869
          %v1934 = vunpack.c.l.b16 %v1870
          %v1935 = vunpack.c.l.b16 %v1871
          %v1936 = vunpack.c.l.b16 %v1872
          %v1937 = vunpack.c.l.b16 %v1873
          %v1938 = vunpack.c.l.b16 %v1874
          %v1939 = vunpack.c.l.b16 %v1875
          %v1940 = vunpack.c.l.b16 %v1876
          %v1941 = vunpack.c.l.b16 %v1877
          %v1942 = vunpack.c.l.b16 %v1878
          %v1943 = vunpack.c.l.b16 %v1879
          %v1944 = vunpack.c.l.b16 %v1880
          %v1945 = vunpack.c.l.b16 %v1881
          %v1946 = vunpack.c.l.b16 %v1882
          %v1947 = vunpack.c.l.b16 %v1883
          %v1948 = vunpack.c.l.b16 %v1884
          %v1949 = vunpack.c.l.b16 %v1885
          %v1950 = vunpack.c.l.b16 %v1886
          %v1951 = vpack.c.b16 %v1920, %v1919
          %v1952 = vpack.c.b16 %v1922, %v1921
          %v1953 = vpack.c.b16 %v1924, %v1923
          %v1954 = vpack.c.b16 %v1926, %v1925
          %v1955 = vpack.c.b16 %v1928, %v1927
          %v1956 = vpack.c.b16 %v1930, %v1929
          %v1957 = vpack.c.b16 %v1932, %v1931
          %v1958 = vpack.c.b16 %v1934, %v1933
          %v1959 = vpack.c.b16 %v1936, %v1935
          %v1960 = vpack.c.b16 %v1938, %v1937
          %v1961 = vpack.c.b16 %v1940, %v1939
          %v1962 = vpack.c.b16 %v1942, %v1941
          %v1963 = vpack.c.b16 %v1944, %v1943
          %v1964 = vpack.c.b16 %v1946, %v1945
          %v1965 = vpack.c.b16 %v1948, %v1947
          %v1966 = vpack.c.b16 %v1950, %v1949
          %1983 = vmatpush.bf16.msra.mxu0 %v1958
          %1984 = vmatpush.bf16.msra.mxu0 %v1957
          %1985 = vmatpush.bf16.msra.mxu0 %v1956
          %1986 = vmatpush.bf16.msra.mxu0 %v1955
          %1987 = vmatpush.bf16.msra.mxu0 %v1954
          %1988 = vmatpush.bf16.msra.mxu0 %v1953
          %1989 = vmatpush.bf16.msra.mxu0 %v1952
          %1990 = vmatpush.bf16.msra.mxu0 %v1951
          %1991 = vmatmul.bf16.gmra.mxu0 %v273
          %v1992 = vpop.f32.mrf.mxu0
          %v1993 = vadd.f32 %v260, %v1992
          %v1994 = vpop.f32.mrf.mxu0
          %v1995 = vadd.f32 %v265, %v1994
          %1996 = vdwg.mxu0
          %1997 = vmatpush.bf16.msra.mxu0 %v1966
          %1998 = vmatpush.bf16.msra.mxu0 %v1965
          %1999 = vmatpush.bf16.msra.mxu0 %v1964
          %2000 = vmatpush.bf16.msra.mxu0 %v1963
          %2001 = vmatpush.bf16.msra.mxu0 %v1962
          %2002 = vmatpush.bf16.msra.mxu0 %v1961
          %2003 = vmatpush.bf16.msra.mxu0 %v1960
          %2004 = vmatpush.bf16.msra.mxu0 %v1959
          %2005 = vmatmul.bf16.gmra.mxu0 %v274
          %v2006 = vpop.f32.mrf.mxu0
          %v2007 = vadd.f32 %v1993, %v2006
          %v2008 = vpop.f32.mrf.mxu0
          %v2009 = vadd.f32 %v1995, %v2008
          %2010 = vdwg.mxu0
          %v2011 = vmax.f32 %v2007, 0.0
          %v2012 = vmax.f32 %v2009, 0.0
          %v2013 = vpack.c.bf16 %v2011, %v2011
          %v2014 = vpack.c.bf16 %v2012, %v2012
          %s2015 = scalar_lea.vmem %s0, 1408
          %v2016 = vld [vmem:[%s2015] sm:$0xf]
          %v2017 = vld [vmem:[%s2015 + $0x4] sm:$0xf]
          %v2018 = vld [vmem:[%s2015 + $0x8] sm:$0xf]
          %v2019 = vld [vmem:[%s2015 + $0xc] sm:$0xf]
          %v2020 = vld [vmem:[%s2015 + $0x10] sm:$0xf]
          %v2021 = vld [vmem:[%s2015 + $0x14] sm:$0xf]
          %v2022 = vld [vmem:[%s2015 + $0x18] sm:$0xf]
          %v2023 = vld [vmem:[%s2015 + $0x1c] sm:$0xf]
          %v2024 = vld [vmem:[%s2015 + $0x20] sm:$0xf]
          %v2025 = vld [vmem:[%s2015 + $0x24] sm:$0xf]
          %v2026 = vld [vmem:[%s2015 + $0x28] sm:$0xf]
          %v2027 = vld [vmem:[%s2015 + $0x2c] sm:$0xf]
          %v2028 = vld [vmem:[%s2015 + $0x30] sm:$0xf]
          %v2029 = vld [vmem:[%s2015 + $0x34] sm:$0xf]
          %v2030 = vld [vmem:[%s2015 + $0x38] sm:$0xf]
          %v2031 = vld [vmem:[%s2015 + $0x3c] sm:$0xf]
          %v2032 = vld [vmem:[%s2015 + $0x40] sm:$0xf]
          %v2033 = vld [vmem:[%s2015 + $0x44] sm:$0xf]
          %v2034 = vld [vmem:[%s2015 + $0x48] sm:$0xf]
          %v2035 = vld [vmem:[%s2015 + $0x4c] sm:$0xf]
          %v2036 = vld [vmem:[%s2015 + $0x50] sm:$0xf]
          %v2037 = vld [vmem:[%s2015 + $0x54] sm:$0xf]
          %v2038 = vld [vmem:[%s2015 + $0x58] sm:$0xf]
          %v2039 = vld [vmem:[%s2015 + $0x5c] sm:$0xf]
          %v2040 = vld [vmem:[%s2015 + $0x60] sm:$0xf]
          %v2041 = vld [vmem:[%s2015 + $0x64] sm:$0xf]
          %v2042 = vld [vmem:[%s2015 + $0x68] sm:$0xf]
          %v2043 = vld [vmem:[%s2015 + $0x6c] sm:$0xf]
          %v2044 = vld [vmem:[%s2015 + $0x70] sm:$0xf]
          %v2045 = vld [vmem:[%s2015 + $0x74] sm:$0xf]
          %v2046 = vld [vmem:[%s2015 + $0x78] sm:$0xf]
          %v2047 = vld [vmem:[%s2015 + $0x7c] sm:$0xf]
          %v2080 = vunpack.c.l.b16 %v2016
          %v2081 = vunpack.c.l.b16 %v2017
          %v2082 = vunpack.c.l.b16 %v2018
          %v2083 = vunpack.c.l.b16 %v2019
          %v2084 = vunpack.c.l.b16 %v2020
          %v2085 = vunpack.c.l.b16 %v2021
          %v2086 = vunpack.c.l.b16 %v2022
          %v2087 = vunpack.c.l.b16 %v2023
          %v2088 = vunpack.c.l.b16 %v2024
          %v2089 = vunpack.c.l.b16 %v2025
          %v2090 = vunpack.c.l.b16 %v2026
          %v2091 = vunpack.c.l.b16 %v2027
          %v2092 = vunpack.c.l.b16 %v2028
          %v2093 = vunpack.c.l.b16 %v2029
          %v2094 = vunpack.c.l.b16 %v2030
          %v2095 = vunpack.c.l.b16 %v2031
          %v2096 = vunpack.c.l.b16 %v2032
          %v2097 = vunpack.c.l.b16 %v2033
          %v2098 = vunpack.c.l.b16 %v2034
          %v2099 = vunpack.c.l.b16 %v2035
          %v2100 = vunpack.c.l.b16 %v2036
          %v2101 = vunpack.c.l.b16 %v2037
          %v2102 = vunpack.c.l.b16 %v2038
          %v2103 = vunpack.c.l.b16 %v2039
          %v2104 = vunpack.c.l.b16 %v2040
          %v2105 = vunpack.c.l.b16 %v2041
          %v2106 = vunpack.c.l.b16 %v2042
          %v2107 = vunpack.c.l.b16 %v2043
          %v2108 = vunpack.c.l.b16 %v2044
          %v2109 = vunpack.c.l.b16 %v2045
          %v2110 = vunpack.c.l.b16 %v2046
          %v2111 = vunpack.c.l.b16 %v2047
          %v2112 = vpack.c.b16 %v2081, %v2080
          %v2113 = vpack.c.b16 %v2083, %v2082
          %v2114 = vpack.c.b16 %v2085, %v2084
          %v2115 = vpack.c.b16 %v2087, %v2086
          %v2116 = vpack.c.b16 %v2089, %v2088
          %v2117 = vpack.c.b16 %v2091, %v2090
          %v2118 = vpack.c.b16 %v2093, %v2092
          %v2119 = vpack.c.b16 %v2095, %v2094
          %v2120 = vpack.c.b16 %v2097, %v2096
          %v2121 = vpack.c.b16 %v2099, %v2098
          %v2122 = vpack.c.b16 %v2101, %v2100
          %v2123 = vpack.c.b16 %v2103, %v2102
          %v2124 = vpack.c.b16 %v2105, %v2104
          %v2125 = vpack.c.b16 %v2107, %v2106
          %v2126 = vpack.c.b16 %v2109, %v2108
          %v2127 = vpack.c.b16 %v2111, %v2110
          %2144 = vmatpush.bf16.msra.mxu0 %v2119
          %2145 = vmatpush.bf16.msra.mxu0 %v2118
          %2146 = vmatpush.bf16.msra.mxu0 %v2117
          %2147 = vmatpush.bf16.msra.mxu0 %v2116
          %2148 = vmatpush.bf16.msra.mxu0 %v2115
          %2149 = vmatpush.bf16.msra.mxu0 %v2114
          %2150 = vmatpush.bf16.msra.mxu0 %v2113
          %2151 = vmatpush.bf16.msra.mxu0 %v2112
          %2152 = vmatmul.bf16.gmra.mxu0 %v273
          %v2153 = vpop.f32.mrf.mxu0
          %v2154 = vadd.f32 %v260, %v2153
          %v2155 = vpop.f32.mrf.mxu0
          %v2156 = vadd.f32 %v265, %v2155
          %2157 = vdwg.mxu0
          %2158 = vmatpush.bf16.msra.mxu0 %v2127
          %2159 = vmatpush.bf16.msra.mxu0 %v2126
          %2160 = vmatpush.bf16.msra.mxu0 %v2125
          %2161 = vmatpush.bf16.msra.mxu0 %v2124
          %2162 = vmatpush.bf16.msra.mxu0 %v2123
          %2163 = vmatpush.bf16.msra.mxu0 %v2122
          %2164 = vmatpush.bf16.msra.mxu0 %v2121
          %2165 = vmatpush.bf16.msra.mxu0 %v2120
          %2166 = vmatmul.bf16.gmra.mxu0 %v274
          %v2167 = vpop.f32.mrf.mxu0
          %v2168 = vadd.f32 %v2154, %v2167
          %v2169 = vpop.f32.mrf.mxu0
          %v2170 = vadd.f32 %v2156, %v2169
          %2171 = vdwg.mxu0
          %v2172 = vmax.f32 %v2168, 0.0
          %v2173 = vmax.f32 %v2170, 0.0
          %v2174 = vpack.c.bf16 %v2172, %v2172
          %v2175 = vpack.c.bf16 %v2173, %v2173
          %s2176 = scalar_lea.vmem %s0, 1536
          %v2177 = vld [vmem:[%s2176] sm:$0xf]
          %v2178 = vld [vmem:[%s2176 + $0x4] sm:$0xf]
          %v2179 = vld [vmem:[%s2176 + $0x8] sm:$0xf]
          %v2180 = vld [vmem:[%s2176 + $0xc] sm:$0xf]
          %v2181 = vld [vmem:[%s2176 + $0x10] sm:$0xf]
          %v2182 = vld [vmem:[%s2176 + $0x14] sm:$0xf]
          %v2183 = vld [vmem:[%s2176 + $0x18] sm:$0xf]
          %v2184 = vld [vmem:[%s2176 + $0x1c] sm:$0xf]
          %v2185 = vld [vmem:[%s2176 + $0x20] sm:$0xf]
          %v2186 = vld [vmem:[%s2176 + $0x24] sm:$0xf]
          %v2187 = vld [vmem:[%s2176 + $0x28] sm:$0xf]
          %v2188 = vld [vmem:[%s2176 + $0x2c] sm:$0xf]
          %v2189 = vld [vmem:[%s2176 + $0x30] sm:$0xf]
          %v2190 = vld [vmem:[%s2176 + $0x34] sm:$0xf]
          %v2191 = vld [vmem:[%s2176 + $0x38] sm:$0xf]
          %v2192 = vld [vmem:[%s2176 + $0x3c] sm:$0xf]
          %v2193 = vld [vmem:[%s2176 + $0x40] sm:$0xf]
          %v2194 = vld [vmem:[%s2176 + $0x44] sm:$0xf]
          %v2195 = vld [vmem:[%s2176 + $0x48] sm:$0xf]
          %v2196 = vld [vmem:[%s2176 + $0x4c] sm:$0xf]
          %v2197 = vld [vmem:[%s2176 + $0x50] sm:$0xf]
          %v2198 = vld [vmem:[%s2176 + $0x54] sm:$0xf]
          %v2199 = vld [vmem:[%s2176 + $0x58] sm:$0xf]
          %v2200 = vld [vmem:[%s2176 + $0x5c] sm:$0xf]
          %v2201 = vld [vmem:[%s2176 + $0x60] sm:$0xf]
          %v2202 = vld [vmem:[%s2176 + $0x64] sm:$0xf]
          %v2203 = vld [vmem:[%s2176 + $0x68] sm:$0xf]
          %v2204 = vld [vmem:[%s2176 + $0x6c] sm:$0xf]
          %v2205 = vld [vmem:[%s2176 + $0x70] sm:$0xf]
          %v2206 = vld [vmem:[%s2176 + $0x74] sm:$0xf]
          %v2207 = vld [vmem:[%s2176 + $0x78] sm:$0xf]
          %v2208 = vld [vmem:[%s2176 + $0x7c] sm:$0xf]
          %v2241 = vunpack.c.l.b16 %v2177
          %v2242 = vunpack.c.l.b16 %v2178
          %v2243 = vunpack.c.l.b16 %v2179
          %v2244 = vunpack.c.l.b16 %v2180
          %v2245 = vunpack.c.l.b16 %v2181
          %v2246 = vunpack.c.l.b16 %v2182
          %v2247 = vunpack.c.l.b16 %v2183
          %v2248 = vunpack.c.l.b16 %v2184
          %v2249 = vunpack.c.l.b16 %v2185
          %v2250 = vunpack.c.l.b16 %v2186
          %v2251 = vunpack.c.l.b16 %v2187
          %v2252 = vunpack.c.l.b16 %v2188
          %v2253 = vunpack.c.l.b16 %v2189
          %v2254 = vunpack.c.l.b16 %v2190
          %v2255 = vunpack.c.l.b16 %v2191
          %v2256 = vunpack.c.l.b16 %v2192
          %v2257 = vunpack.c.l.b16 %v2193
          %v2258 = vunpack.c.l.b16 %v2194
          %v2259 = vunpack.c.l.b16 %v2195
          %v2260 = vunpack.c.l.b16 %v2196
          %v2261 = vunpack.c.l.b16 %v2197
          %v2262 = vunpack.c.l.b16 %v2198
          %v2263 = vunpack.c.l.b16 %v2199
          %v2264 = vunpack.c.l.b16 %v2200
          %v2265 = vunpack.c.l.b16 %v2201
          %v2266 = vunpack.c.l.b16 %v2202
          %v2267 = vunpack.c.l.b16 %v2203
          %v2268 = vunpack.c.l.b16 %v2204
          %v2269 = vunpack.c.l.b16 %v2205
          %v2270 = vunpack.c.l.b16 %v2206
          %v2271 = vunpack.c.l.b16 %v2207
          %v2272 = vunpack.c.l.b16 %v2208
          %v2273 = vpack.c.b16 %v2242, %v2241
          %v2274 = vpack.c.b16 %v2244, %v2243
          %v2275 = vpack.c.b16 %v2246, %v2245
          %v2276 = vpack.c.b16 %v2248, %v2247
          %v2277 = vpack.c.b16 %v2250, %v2249
          %v2278 = vpack.c.b16 %v2252, %v2251
          %v2279 = vpack.c.b16 %v2254, %v2253
          %v2280 = vpack.c.b16 %v2256, %v2255
          %v2281 = vpack.c.b16 %v2258, %v2257
          %v2282 = vpack.c.b16 %v2260, %v2259
          %v2283 = vpack.c.b16 %v2262, %v2261
          %v2284 = vpack.c.b16 %v2264, %v2263
          %v2285 = vpack.c.b16 %v2266, %v2265
          %v2286 = vpack.c.b16 %v2268, %v2267
          %v2287 = vpack.c.b16 %v2270, %v2269
          %v2288 = vpack.c.b16 %v2272, %v2271
          %2305 = vmatpush.bf16.msra.mxu0 %v2280
          %2306 = vmatpush.bf16.msra.mxu0 %v2279
          %2307 = vmatpush.bf16.msra.mxu0 %v2278
          %2308 = vmatpush.bf16.msra.mxu0 %v2277
          %2309 = vmatpush.bf16.msra.mxu0 %v2276
          %2310 = vmatpush.bf16.msra.mxu0 %v2275
          %2311 = vmatpush.bf16.msra.mxu0 %v2274
          %2312 = vmatpush.bf16.msra.mxu0 %v2273
          %2313 = vmatmul.bf16.gmra.mxu0 %v273
          %v2314 = vpop.f32.mrf.mxu0
          %v2315 = vadd.f32 %v260, %v2314
          %v2316 = vpop.f32.mrf.mxu0
          %v2317 = vadd.f32 %v265, %v2316
          %2318 = vdwg.mxu0
          %2319 = vmatpush.bf16.msra.mxu0 %v2288
          %2320 = vmatpush.bf16.msra.mxu0 %v2287
          %2321 = vmatpush.bf16.msra.mxu0 %v2286
          %2322 = vmatpush.bf16.msra.mxu0 %v2285
          %2323 = vmatpush.bf16.msra.mxu0 %v2284
          %2324 = vmatpush.bf16.msra.mxu0 %v2283
          %2325 = vmatpush.bf16.msra.mxu0 %v2282
          %2326 = vmatpush.bf16.msra.mxu0 %v2281
          %2327 = vmatmul.bf16.gmra.mxu0 %v274
          %v2328 = vpop.f32.mrf.mxu0
          %v2329 = vadd.f32 %v2315, %v2328
          %v2330 = vpop.f32.mrf.mxu0
          %v2331 = vadd.f32 %v2317, %v2330
          %2332 = vdwg.mxu0
          %v2333 = vmax.f32 %v2329, 0.0
          %v2334 = vmax.f32 %v2331, 0.0
          %v2335 = vpack.c.bf16 %v2333, %v2333
          %v2336 = vpack.c.bf16 %v2334, %v2334
          %s2337 = scalar_lea.vmem %s0, 1664
          %v2338 = vld [vmem:[%s2337] sm:$0xf]
          %v2339 = vld [vmem:[%s2337 + $0x4] sm:$0xf]
          %v2340 = vld [vmem:[%s2337 + $0x8] sm:$0xf]
          %v2341 = vld [vmem:[%s2337 + $0xc] sm:$0xf]
          %v2342 = vld [vmem:[%s2337 + $0x10] sm:$0xf]
          %v2343 = vld [vmem:[%s2337 + $0x14] sm:$0xf]
          %v2344 = vld [vmem:[%s2337 + $0x18] sm:$0xf]
          %v2345 = vld [vmem:[%s2337 + $0x1c] sm:$0xf]
          %v2346 = vld [vmem:[%s2337 + $0x20] sm:$0xf]
          %v2347 = vld [vmem:[%s2337 + $0x24] sm:$0xf]
          %v2348 = vld [vmem:[%s2337 + $0x28] sm:$0xf]
          %v2349 = vld [vmem:[%s2337 + $0x2c] sm:$0xf]
          %v2350 = vld [vmem:[%s2337 + $0x30] sm:$0xf]
          %v2351 = vld [vmem:[%s2337 + $0x34] sm:$0xf]
          %v2352 = vld [vmem:[%s2337 + $0x38] sm:$0xf]
          %v2353 = vld [vmem:[%s2337 + $0x3c] sm:$0xf]
          %v2354 = vld [vmem:[%s2337 + $0x40] sm:$0xf]
          %v2355 = vld [vmem:[%s2337 + $0x44] sm:$0xf]
          %v2356 = vld [vmem:[%s2337 + $0x48] sm:$0xf]
          %v2357 = vld [vmem:[%s2337 + $0x4c] sm:$0xf]
          %v2358 = vld [vmem:[%s2337 + $0x50] sm:$0xf]
          %v2359 = vld [vmem:[%s2337 + $0x54] sm:$0xf]
          %v2360 = vld [vmem:[%s2337 + $0x58] sm:$0xf]
          %v2361 = vld [vmem:[%s2337 + $0x5c] sm:$0xf]
          %v2362 = vld [vmem:[%s2337 + $0x60] sm:$0xf]
          %v2363 = vld [vmem:[%s2337 + $0x64] sm:$0xf]
          %v2364 = vld [vmem:[%s2337 + $0x68] sm:$0xf]
          %v2365 = vld [vmem:[%s2337 + $0x6c] sm:$0xf]
          %v2366 = vld [vmem:[%s2337 + $0x70] sm:$0xf]
          %v2367 = vld [vmem:[%s2337 + $0x74] sm:$0xf]
          %v2368 = vld [vmem:[%s2337 + $0x78] sm:$0xf]
          %v2369 = vld [vmem:[%s2337 + $0x7c] sm:$0xf]
          %v2402 = vunpack.c.l.b16 %v2338
          %v2403 = vunpack.c.l.b16 %v2339
          %v2404 = vunpack.c.l.b16 %v2340
          %v2405 = vunpack.c.l.b16 %v2341
          %v2406 = vunpack.c.l.b16 %v2342
          %v2407 = vunpack.c.l.b16 %v2343
          %v2408 = vunpack.c.l.b16 %v2344
          %v2409 = vunpack.c.l.b16 %v2345
          %v2410 = vunpack.c.l.b16 %v2346
          %v2411 = vunpack.c.l.b16 %v2347
          %v2412 = vunpack.c.l.b16 %v2348
          %v2413 = vunpack.c.l.b16 %v2349
          %v2414 = vunpack.c.l.b16 %v2350
          %v2415 = vunpack.c.l.b16 %v2351
          %v2416 = vunpack.c.l.b16 %v2352
          %v2417 = vunpack.c.l.b16 %v2353
          %v2418 = vunpack.c.l.b16 %v2354
          %v2419 = vunpack.c.l.b16 %v2355
          %v2420 = vunpack.c.l.b16 %v2356
          %v2421 = vunpack.c.l.b16 %v2357
          %v2422 = vunpack.c.l.b16 %v2358
          %v2423 = vunpack.c.l.b16 %v2359
          %v2424 = vunpack.c.l.b16 %v2360
          %v2425 = vunpack.c.l.b16 %v2361
          %v2426 = vunpack.c.l.b16 %v2362
          %v2427 = vunpack.c.l.b16 %v2363
          %v2428 = vunpack.c.l.b16 %v2364
          %v2429 = vunpack.c.l.b16 %v2365
          %v2430 = vunpack.c.l.b16 %v2366
          %v2431 = vunpack.c.l.b16 %v2367
          %v2432 = vunpack.c.l.b16 %v2368
          %v2433 = vunpack.c.l.b16 %v2369
          %v2434 = vpack.c.b16 %v2403, %v2402
          %v2435 = vpack.c.b16 %v2405, %v2404
          %v2436 = vpack.c.b16 %v2407, %v2406
          %v2437 = vpack.c.b16 %v2409, %v2408
          %v2438 = vpack.c.b16 %v2411, %v2410
          %v2439 = vpack.c.b16 %v2413, %v2412
          %v2440 = vpack.c.b16 %v2415, %v2414
          %v2441 = vpack.c.b16 %v2417, %v2416
          %v2442 = vpack.c.b16 %v2419, %v2418
          %v2443 = vpack.c.b16 %v2421, %v2420
          %v2444 = vpack.c.b16 %v2423, %v2422
          %v2445 = vpack.c.b16 %v2425, %v2424
          %v2446 = vpack.c.b16 %v2427, %v2426
          %v2447 = vpack.c.b16 %v2429, %v2428
          %v2448 = vpack.c.b16 %v2431, %v2430
          %v2449 = vpack.c.b16 %v2433, %v2432
          %2466 = vmatpush.bf16.msra.mxu0 %v2441
          %2467 = vmatpush.bf16.msra.mxu0 %v2440
          %2468 = vmatpush.bf16.msra.mxu0 %v2439
          %2469 = vmatpush.bf16.msra.mxu0 %v2438
          %2470 = vmatpush.bf16.msra.mxu0 %v2437
          %2471 = vmatpush.bf16.msra.mxu0 %v2436
          %2472 = vmatpush.bf16.msra.mxu0 %v2435
          %2473 = vmatpush.bf16.msra.mxu0 %v2434
          %2474 = vmatmul.bf16.gmra.mxu0 %v273
          %v2475 = vpop.f32.mrf.mxu0
          %v2476 = vadd.f32 %v260, %v2475
          %v2477 = vpop.f32.mrf.mxu0
          %v2478 = vadd.f32 %v265, %v2477
          %2479 = vdwg.mxu0
          %2480 = vmatpush.bf16.msra.mxu0 %v2449
          %2481 = vmatpush.bf16.msra.mxu0 %v2448
          %2482 = vmatpush.bf16.msra.mxu0 %v2447
          %2483 = vmatpush.bf16.msra.mxu0 %v2446
          %2484 = vmatpush.bf16.msra.mxu0 %v2445
          %2485 = vmatpush.bf16.msra.mxu0 %v2444
          %2486 = vmatpush.bf16.msra.mxu0 %v2443
          %2487 = vmatpush.bf16.msra.mxu0 %v2442
          %2488 = vmatmul.bf16.gmra.mxu0 %v274
          %v2489 = vpop.f32.mrf.mxu0
          %v2490 = vadd.f32 %v2476, %v2489
          %v2491 = vpop.f32.mrf.mxu0
          %v2492 = vadd.f32 %v2478, %v2491
          %2493 = vdwg.mxu0
          %v2494 = vmax.f32 %v2490, 0.0
          %v2495 = vmax.f32 %v2492, 0.0
          %v2496 = vpack.c.bf16 %v2494, %v2494
          %v2497 = vpack.c.bf16 %v2495, %v2495
          %s2498 = scalar_lea.vmem %s0, 1792
          %v2499 = vld [vmem:[%s2498] sm:$0xf]
          %v2500 = vld [vmem:[%s2498 + $0x4] sm:$0xf]
          %v2501 = vld [vmem:[%s2498 + $0x8] sm:$0xf]
          %v2502 = vld [vmem:[%s2498 + $0xc] sm:$0xf]
          %v2503 = vld [vmem:[%s2498 + $0x10] sm:$0xf]
          %v2504 = vld [vmem:[%s2498 + $0x14] sm:$0xf]
          %v2505 = vld [vmem:[%s2498 + $0x18] sm:$0xf]
          %v2506 = vld [vmem:[%s2498 + $0x1c] sm:$0xf]
          %v2507 = vld [vmem:[%s2498 + $0x20] sm:$0xf]
          %v2508 = vld [vmem:[%s2498 + $0x24] sm:$0xf]
          %v2509 = vld [vmem:[%s2498 + $0x28] sm:$0xf]
          %v2510 = vld [vmem:[%s2498 + $0x2c] sm:$0xf]
          %v2511 = vld [vmem:[%s2498 + $0x30] sm:$0xf]
          %v2512 = vld [vmem:[%s2498 + $0x34] sm:$0xf]
          %v2513 = vld [vmem:[%s2498 + $0x38] sm:$0xf]
          %v2514 = vld [vmem:[%s2498 + $0x3c] sm:$0xf]
          %v2515 = vld [vmem:[%s2498 + $0x40] sm:$0xf]
          %v2516 = vld [vmem:[%s2498 + $0x44] sm:$0xf]
          %v2517 = vld [vmem:[%s2498 + $0x48] sm:$0xf]
          %v2518 = vld [vmem:[%s2498 + $0x4c] sm:$0xf]
          %v2519 = vld [vmem:[%s2498 + $0x50] sm:$0xf]
          %v2520 = vld [vmem:[%s2498 + $0x54] sm:$0xf]
          %v2521 = vld [vmem:[%s2498 + $0x58] sm:$0xf]
          %v2522 = vld [vmem:[%s2498 + $0x5c] sm:$0xf]
          %v2523 = vld [vmem:[%s2498 + $0x60] sm:$0xf]
          %v2524 = vld [vmem:[%s2498 + $0x64] sm:$0xf]
          %v2525 = vld [vmem:[%s2498 + $0x68] sm:$0xf]
          %v2526 = vld [vmem:[%s2498 + $0x6c] sm:$0xf]
          %v2527 = vld [vmem:[%s2498 + $0x70] sm:$0xf]
          %v2528 = vld [vmem:[%s2498 + $0x74] sm:$0xf]
          %v2529 = vld [vmem:[%s2498 + $0x78] sm:$0xf]
          %v2530 = vld [vmem:[%s2498 + $0x7c] sm:$0xf]
          %v2563 = vunpack.c.l.b16 %v2499
          %v2564 = vunpack.c.l.b16 %v2500
          %v2565 = vunpack.c.l.b16 %v2501
          %v2566 = vunpack.c.l.b16 %v2502
          %v2567 = vunpack.c.l.b16 %v2503
          %v2568 = vunpack.c.l.b16 %v2504
          %v2569 = vunpack.c.l.b16 %v2505
          %v2570 = vunpack.c.l.b16 %v2506
          %v2571 = vunpack.c.l.b16 %v2507
          %v2572 = vunpack.c.l.b16 %v2508
          %v2573 = vunpack.c.l.b16 %v2509
          %v2574 = vunpack.c.l.b16 %v2510
          %v2575 = vunpack.c.l.b16 %v2511
          %v2576 = vunpack.c.l.b16 %v2512
          %v2577 = vunpack.c.l.b16 %v2513
          %v2578 = vunpack.c.l.b16 %v2514
          %v2579 = vunpack.c.l.b16 %v2515
          %v2580 = vunpack.c.l.b16 %v2516
          %v2581 = vunpack.c.l.b16 %v2517
          %v2582 = vunpack.c.l.b16 %v2518
          %v2583 = vunpack.c.l.b16 %v2519
          %v2584 = vunpack.c.l.b16 %v2520
          %v2585 = vunpack.c.l.b16 %v2521
          %v2586 = vunpack.c.l.b16 %v2522
          %v2587 = vunpack.c.l.b16 %v2523
          %v2588 = vunpack.c.l.b16 %v2524
          %v2589 = vunpack.c.l.b16 %v2525
          %v2590 = vunpack.c.l.b16 %v2526
          %v2591 = vunpack.c.l.b16 %v2527
          %v2592 = vunpack.c.l.b16 %v2528
          %v2593 = vunpack.c.l.b16 %v2529
          %v2594 = vunpack.c.l.b16 %v2530
          %v2595 = vpack.c.b16 %v2564, %v2563
          %v2596 = vpack.c.b16 %v2566, %v2565
          %v2597 = vpack.c.b16 %v2568, %v2567
          %v2598 = vpack.c.b16 %v2570, %v2569
          %v2599 = vpack.c.b16 %v2572, %v2571
          %v2600 = vpack.c.b16 %v2574, %v2573
          %v2601 = vpack.c.b16 %v2576, %v2575
          %v2602 = vpack.c.b16 %v2578, %v2577
          %v2603 = vpack.c.b16 %v2580, %v2579
          %v2604 = vpack.c.b16 %v2582, %v2581
          %v2605 = vpack.c.b16 %v2584, %v2583
          %v2606 = vpack.c.b16 %v2586, %v2585
          %v2607 = vpack.c.b16 %v2588, %v2587
          %v2608 = vpack.c.b16 %v2590, %v2589
          %v2609 = vpack.c.b16 %v2592, %v2591
          %v2610 = vpack.c.b16 %v2594, %v2593
          %2627 = vmatpush.bf16.msra.mxu0 %v2602
          %2628 = vmatpush.bf16.msra.mxu0 %v2601
          %2629 = vmatpush.bf16.msra.mxu0 %v2600
          %2630 = vmatpush.bf16.msra.mxu0 %v2599
          %2631 = vmatpush.bf16.msra.mxu0 %v2598
          %2632 = vmatpush.bf16.msra.mxu0 %v2597
          %2633 = vmatpush.bf16.msra.mxu0 %v2596
          %2634 = vmatpush.bf16.msra.mxu0 %v2595
          %2635 = vmatmul.bf16.gmra.mxu0 %v273
          %v2636 = vpop.f32.mrf.mxu0
          %v2637 = vadd.f32 %v260, %v2636
          %v2638 = vpop.f32.mrf.mxu0
          %v2639 = vadd.f32 %v265, %v2638
          %2640 = vdwg.mxu0
          %2641 = vmatpush.bf16.msra.mxu0 %v2610
          %2642 = vmatpush.bf16.msra.mxu0 %v2609
          %2643 = vmatpush.bf16.msra.mxu0 %v2608
          %2644 = vmatpush.bf16.msra.mxu0 %v2607
          %2645 = vmatpush.bf16.msra.mxu0 %v2606
          %2646 = vmatpush.bf16.msra.mxu0 %v2605
          %2647 = vmatpush.bf16.msra.mxu0 %v2604
          %2648 = vmatpush.bf16.msra.mxu0 %v2603
          %2649 = vmatmul.bf16.gmra.mxu0 %v274
          %v2650 = vpop.f32.mrf.mxu0
          %v2651 = vadd.f32 %v2637, %v2650
          %v2652 = vpop.f32.mrf.mxu0
          %v2653 = vadd.f32 %v2639, %v2652
          %2654 = vdwg.mxu0
          %v2655 = vmax.f32 %v2651, 0.0
          %v2656 = vmax.f32 %v2653, 0.0
          %v2657 = vpack.c.bf16 %v2655, %v2655
          %v2658 = vpack.c.bf16 %v2656, %v2656
          %s2659 = scalar_lea.vmem %s0, 1920
          %v2660 = vld [vmem:[%s2659] sm:$0xf]
          %v2661 = vld [vmem:[%s2659 + $0x4] sm:$0xf]
          %v2662 = vld [vmem:[%s2659 + $0x8] sm:$0xf]
          %v2663 = vld [vmem:[%s2659 + $0xc] sm:$0xf]
          %v2664 = vld [vmem:[%s2659 + $0x10] sm:$0xf]
          %v2665 = vld [vmem:[%s2659 + $0x14] sm:$0xf]
          %v2666 = vld [vmem:[%s2659 + $0x18] sm:$0xf]
          %v2667 = vld [vmem:[%s2659 + $0x1c] sm:$0xf]
          %v2668 = vld [vmem:[%s2659 + $0x20] sm:$0xf]
          %v2669 = vld [vmem:[%s2659 + $0x24] sm:$0xf]
          %v2670 = vld [vmem:[%s2659 + $0x28] sm:$0xf]
          %v2671 = vld [vmem:[%s2659 + $0x2c] sm:$0xf]
          %v2672 = vld [vmem:[%s2659 + $0x30] sm:$0xf]
          %v2673 = vld [vmem:[%s2659 + $0x34] sm:$0xf]
          %v2674 = vld [vmem:[%s2659 + $0x38] sm:$0xf]
          %v2675 = vld [vmem:[%s2659 + $0x3c] sm:$0xf]
          %v2676 = vld [vmem:[%s2659 + $0x40] sm:$0xf]
          %v2677 = vld [vmem:[%s2659 + $0x44] sm:$0xf]
          %v2678 = vld [vmem:[%s2659 + $0x48] sm:$0xf]
          %v2679 = vld [vmem:[%s2659 + $0x4c] sm:$0xf]
          %v2680 = vld [vmem:[%s2659 + $0x50] sm:$0xf]
          %v2681 = vld [vmem:[%s2659 + $0x54] sm:$0xf]
          %v2682 = vld [vmem:[%s2659 + $0x58] sm:$0xf]
          %v2683 = vld [vmem:[%s2659 + $0x5c] sm:$0xf]
          %v2684 = vld [vmem:[%s2659 + $0x60] sm:$0xf]
          %v2685 = vld [vmem:[%s2659 + $0x64] sm:$0xf]
          %v2686 = vld [vmem:[%s2659 + $0x68] sm:$0xf]
          %v2687 = vld [vmem:[%s2659 + $0x6c] sm:$0xf]
          %v2688 = vld [vmem:[%s2659 + $0x70] sm:$0xf]
          %v2689 = vld [vmem:[%s2659 + $0x74] sm:$0xf]
          %v2690 = vld [vmem:[%s2659 + $0x78] sm:$0xf]
          %v2691 = vld [vmem:[%s2659 + $0x7c] sm:$0xf]
          %v2724 = vunpack.c.l.b16 %v2660
          %v2725 = vunpack.c.l.b16 %v2661
          %v2726 = vunpack.c.l.b16 %v2662
          %v2727 = vunpack.c.l.b16 %v2663
          %v2728 = vunpack.c.l.b16 %v2664
          %v2729 = vunpack.c.l.b16 %v2665
          %v2730 = vunpack.c.l.b16 %v2666
          %v2731 = vunpack.c.l.b16 %v2667
          %v2732 = vunpack.c.l.b16 %v2668
          %v2733 = vunpack.c.l.b16 %v2669
          %v2734 = vunpack.c.l.b16 %v2670
          %v2735 = vunpack.c.l.b16 %v2671
          %v2736 = vunpack.c.l.b16 %v2672
          %v2737 = vunpack.c.l.b16 %v2673
          %v2738 = vunpack.c.l.b16 %v2674
          %v2739 = vunpack.c.l.b16 %v2675
          %v2740 = vunpack.c.l.b16 %v2676
          %v2741 = vunpack.c.l.b16 %v2677
          %v2742 = vunpack.c.l.b16 %v2678
          %v2743 = vunpack.c.l.b16 %v2679
          %v2744 = vunpack.c.l.b16 %v2680
          %v2745 = vunpack.c.l.b16 %v2681
          %v2746 = vunpack.c.l.b16 %v2682
          %v2747 = vunpack.c.l.b16 %v2683
          %v2748 = vunpack.c.l.b16 %v2684
          %v2749 = vunpack.c.l.b16 %v2685
          %v2750 = vunpack.c.l.b16 %v2686
          %v2751 = vunpack.c.l.b16 %v2687
          %v2752 = vunpack.c.l.b16 %v2688
          %v2753 = vunpack.c.l.b16 %v2689
          %v2754 = vunpack.c.l.b16 %v2690
          %v2755 = vunpack.c.l.b16 %v2691
          %v2756 = vpack.c.b16 %v2725, %v2724
          %v2757 = vpack.c.b16 %v2727, %v2726
          %v2758 = vpack.c.b16 %v2729, %v2728
          %v2759 = vpack.c.b16 %v2731, %v2730
          %v2760 = vpack.c.b16 %v2733, %v2732
          %v2761 = vpack.c.b16 %v2735, %v2734
          %v2762 = vpack.c.b16 %v2737, %v2736
          %v2763 = vpack.c.b16 %v2739, %v2738
          %v2764 = vpack.c.b16 %v2741, %v2740
          %v2765 = vpack.c.b16 %v2743, %v2742
          %v2766 = vpack.c.b16 %v2745, %v2744
          %v2767 = vpack.c.b16 %v2747, %v2746
          %v2768 = vpack.c.b16 %v2749, %v2748
          %v2769 = vpack.c.b16 %v2751, %v2750
          %v2770 = vpack.c.b16 %v2753, %v2752
          %v2771 = vpack.c.b16 %v2755, %v2754
          %2788 = vmatpush.bf16.msra.mxu0 %v2763
          %2789 = vmatpush.bf16.msra.mxu0 %v2762
          %2790 = vmatpush.bf16.msra.mxu0 %v2761
          %2791 = vmatpush.bf16.msra.mxu0 %v2760
          %2792 = vmatpush.bf16.msra.mxu0 %v2759
          %2793 = vmatpush.bf16.msra.mxu0 %v2758
          %2794 = vmatpush.bf16.msra.mxu0 %v2757
          %2795 = vmatpush.bf16.msra.mxu0 %v2756
          %2796 = vmatmul.bf16.gmra.mxu0 %v273
          %v2797 = vpop.f32.mrf.mxu0
          %v2798 = vadd.f32 %v260, %v2797
          %v2799 = vpop.f32.mrf.mxu0
          %v2800 = vadd.f32 %v265, %v2799
          %2801 = vdwg.mxu0
          %2802 = vmatpush.bf16.msra.mxu0 %v2771
          %2803 = vmatpush.bf16.msra.mxu0 %v2770
          %2804 = vmatpush.bf16.msra.mxu0 %v2769
          %2805 = vmatpush.bf16.msra.mxu0 %v2768
          %2806 = vmatpush.bf16.msra.mxu0 %v2767
          %2807 = vmatpush.bf16.msra.mxu0 %v2766
          %2808 = vmatpush.bf16.msra.mxu0 %v2765
          %2809 = vmatpush.bf16.msra.mxu0 %v2764
          %2810 = vmatmul.bf16.gmra.mxu0 %v274
          %v2811 = vpop.f32.mrf.mxu0
          %v2812 = vadd.f32 %v2798, %v2811
          %v2813 = vpop.f32.mrf.mxu0
          %v2814 = vadd.f32 %v2800, %v2813
          %2815 = vdwg.mxu0
          %v2816 = vmax.f32 %v2812, 0.0
          %v2817 = vmax.f32 %v2814, 0.0
          %v2818 = vpack.c.bf16 %v2816, %v2816
          %v2819 = vpack.c.bf16 %v2817, %v2817
          %v2822 = vunpack.c.l.b16 %v403
          %v2823 = vunpack.c.l.b16 %v404
          %v2824 = vpack.c.b16 %v2823, %v2822
          %v2828 = vunpack.c.l.b16 %v564
          %v2829 = vunpack.c.l.b16 %v565
          %v2830 = vpack.c.b16 %v2829, %v2828
          %v2834 = vunpack.c.l.b16 %v725
          %v2835 = vunpack.c.l.b16 %v726
          %v2836 = vpack.c.b16 %v2835, %v2834
          %v2840 = vunpack.c.l.b16 %v886
          %v2841 = vunpack.c.l.b16 %v887
          %v2842 = vpack.c.b16 %v2841, %v2840
          %v2846 = vunpack.c.l.b16 %v1047
          %v2847 = vunpack.c.l.b16 %v1048
          %v2848 = vpack.c.b16 %v2847, %v2846
          %v2852 = vunpack.c.l.b16 %v1208
          %v2853 = vunpack.c.l.b16 %v1209
          %v2854 = vpack.c.b16 %v2853, %v2852
          %v2858 = vunpack.c.l.b16 %v1369
          %v2859 = vunpack.c.l.b16 %v1370
          %v2860 = vpack.c.b16 %v2859, %v2858
          %v2864 = vunpack.c.l.b16 %v1530
          %v2865 = vunpack.c.l.b16 %v1531
          %v2866 = vpack.c.b16 %v2865, %v2864
          %v2870 = vunpack.c.l.b16 %v1691
          %v2871 = vunpack.c.l.b16 %v1692
          %v2872 = vpack.c.b16 %v2871, %v2870
          %v2876 = vunpack.c.l.b16 %v1852
          %v2877 = vunpack.c.l.b16 %v1853
          %v2878 = vpack.c.b16 %v2877, %v2876
          %v2882 = vunpack.c.l.b16 %v2013
          %v2883 = vunpack.c.l.b16 %v2014
          %v2884 = vpack.c.b16 %v2883, %v2882
          %v2888 = vunpack.c.l.b16 %v2174
          %v2889 = vunpack.c.l.b16 %v2175
          %v2890 = vpack.c.b16 %v2889, %v2888
          %v2894 = vunpack.c.l.b16 %v2335
          %v2895 = vunpack.c.l.b16 %v2336
          %v2896 = vpack.c.b16 %v2895, %v2894
          %v2900 = vunpack.c.l.b16 %v2496
          %v2901 = vunpack.c.l.b16 %v2497
          %v2902 = vpack.c.b16 %v2901, %v2900
          %v2906 = vunpack.c.l.b16 %v2657
          %v2907 = vunpack.c.l.b16 %v2658
          %v2908 = vpack.c.b16 %v2907, %v2906
          %v2912 = vunpack.c.l.b16 %v2818
          %v2913 = vunpack.c.l.b16 %v2819
          %v2914 = vpack.c.b16 %v2913, %v2912
          %v2916 = vld [vmem:[%s1 + $0x10] sm:$0xff]
          %v2917 = vld [vmem:[%s1 + $0x18] sm:$0xff]
          %v2918 = vld [vmem:[%s1 + $0x20] sm:$0xff]
          %v2919 = vld [vmem:[%s1 + $0x28] sm:$0xff]
          %v2920 = vld [vmem:[%s2 + $0x10] sm:$0xff]
          %v2921 = vld [vmem:[%s2 + $0x18] sm:$0xff]
          %v2922 = vld [vmem:[%s2 + $0x20] sm:$0xff]
          %v2923 = vld [vmem:[%s2 + $0x28] sm:$0xff]
          %2925 = vset.pattern.permute.xlu0 0
          %2926 = vperm.xlu0 %2925, %v2920
          %v2927 = vpop.permute.xlu0 %2926
          %2930 = vset.pattern.permute.xlu0 0
          %2931 = vperm.xlu0 %2930, %v2921
          %v2932 = vpop.permute.xlu0 %2931
          %2935 = vset.pattern.permute.xlu0 0
          %2936 = vperm.xlu0 %2935, %v2922
          %v2937 = vpop.permute.xlu0 %2936
          %2940 = vset.pattern.permute.xlu0 0
          %2941 = vperm.xlu0 %2940, %v2923
          %v2942 = vpop.permute.xlu0 %2941
          %v2948 = vunpack.c.l.b16 %v2916
          %v2949 = vunpack.c.h.b16 %v2916
          %v2950 = vunpack.c.l.b16 %v2917
          %v2951 = vunpack.c.h.b16 %v2917
          %v2952 = vunpack.c.l.b16 %v2918
          %v2953 = vunpack.c.h.b16 %v2918
          %v2954 = vunpack.c.l.b16 %v2919
          %v2955 = vunpack.c.h.b16 %v2919
          %v2956 = vpack.c.b16 %v2950, %v2948
          %v2957 = vpack.c.b16 %v2951, %v2949
          %v2958 = vpack.c.b16 %v2954, %v2952
          %v2959 = vpack.c.b16 %v2955, %v2953
          %2964 = vmatpush.bf16.msra.mxu0 %v2866
          %2965 = vmatpush.bf16.msra.mxu0 %v2860
          %2966 = vmatpush.bf16.msra.mxu0 %v2854
          %2967 = vmatpush.bf16.msra.mxu0 %v2848
          %2968 = vmatpush.bf16.msra.mxu0 %v2842
          %2969 = vmatpush.bf16.msra.mxu0 %v2836
          %2970 = vmatpush.bf16.msra.mxu0 %v2830
          %2971 = vmatpush.bf16.msra.mxu0 %v2824
          %2972 = vmatmul.bf16.gmra.mxu0 %v2956
          %v2973 = vpop.f32.mrf.mxu0
          %v2974 = vadd.f32 %v2927, %v2973
          %v2975 = vpop.f32.mrf.mxu0
          %v2976 = vadd.f32 %v2932, %v2975
          %2977 = vmatmul.bf16.gmra.mxu0 %v2958
          %v2978 = vpop.f32.mrf.mxu0
          %v2979 = vadd.f32 %v2937, %v2978
          %v2980 = vpop.f32.mrf.mxu0
          %v2981 = vadd.f32 %v2942, %v2980
          %2982 = vdwg.mxu0
          %2983 = vmatpush.bf16.msra.mxu0 %v2914
          %2984 = vmatpush.bf16.msra.mxu0 %v2908
          %2985 = vmatpush.bf16.msra.mxu0 %v2902
          %2986 = vmatpush.bf16.msra.mxu0 %v2896
          %2987 = vmatpush.bf16.msra.mxu0 %v2890
          %2988 = vmatpush.bf16.msra.mxu0 %v2884
          %2989 = vmatpush.bf16.msra.mxu0 %v2878
          %2990 = vmatpush.bf16.msra.mxu0 %v2872
          %2991 = vmatmul.bf16.gmra.mxu0 %v2957
          %v2992 = vpop.f32.mrf.mxu0
          %v2993 = vadd.f32 %v2974, %v2992
          %v2994 = vpop.f32.mrf.mxu0
          %v2995 = vadd.f32 %v2976, %v2994
          %2996 = vmatmul.bf16.gmra.mxu0 %v2959
          %v2997 = vpop.f32.mrf.mxu0
          %v2998 = vadd.f32 %v2979, %v2997
          %v2999 = vpop.f32.mrf.mxu0
          %v3000 = vadd.f32 %v2981, %v2999
          %3001 = vdwg.mxu0
          %v3002 = vmax.f32 %v2993, 0.0
          %v3003 = vmax.f32 %v2995, 0.0
          %v3004 = vmax.f32 %v2998, 0.0
          %v3005 = vmax.f32 %v3000, 0.0
          %vm3006 = vcmask 662528
          %3007 = vst.msk [vmem:[#allocation2] sm:$0xff] %vm3006, %v3002
          %3008 = vst.msk [vmem:[#allocation2 + $0x8] sm:$0xff] %vm3006, %v3003
          %3009 = vst.msk [vmem:[#allocation2 + $0x10] sm:$0xff] %vm3006, %v3004
          %3010 = vst.msk [vmem:[#allocation2 + $0x18] sm:$0xff] %vm3006, %v3005
          %v3011 = vlaneseq
          %vm3012 = vcmp.ge.s32.totalorder %v3011, 0
          %vm3013 = vcmp.lt.s32.totalorder %v3011, 256
          %vm3014 = vmand %vm3012, %vm3013
          %3015 = vst.msk [vmem:[#allocation3] sm:$0x3] %vm3014, 0.0
        $region44: #{policy_cnn_forward.1} parent=39 // pred_fallthru
          _
        %s3016 = smul.u32 %s17, 16
        %s3017 = scalar_lea.vmem [#allocation2], %s3016
        %v3018 = vld [vmem:[%s3017] sm:$0xff]
        %v3019 = vld [vmem:[%s3017 + $0x8] sm:$0xff]
        %v3020 = vpack.c.bf16 %v3018, %v3018
        %v3021 = vpack.c.bf16 %v3019, %v3019
        %v3022 = vld [vmem:[#allocation3] sm:$0x3]
        %v3023 = vld [vmem:[%s214] sm:$0xff]
        %v3024 = vld [vmem:[%s214 + $0x8] sm:$0xff]
        %v3025 = vld [vmem:[%s214 + $0x10] sm:$0xff]
        %v3026 = vld [vmem:[%s214 + $0x18] sm:$0xff]
        %v3027 = vld [vmem:[%s214 + $0x20] sm:$0xff]
        %v3028 = vld [vmem:[%s214 + $0x28] sm:$0xff]
        %v3029 = vld [vmem:[%s214 + $0x30] sm:$0xff]
        %v3030 = vld [vmem:[%s214 + $0x38] sm:$0xff]
        %v3031 = vld [vmem:[%s214 + $0x40] sm:$0xff]
        %v3032 = vld [vmem:[%s214 + $0x48] sm:$0xff]
        %v3033 = vld [vmem:[%s214 + $0x50] sm:$0x11]
        %v3045 = vunpack.c.l.b16 %v3023
        %v3046 = vunpack.c.h.b16 %v3023
        %v3047 = vunpack.c.l.b16 %v3024
        %v3048 = vunpack.c.h.b16 %v3024
        %v3049 = vunpack.c.l.b16 %v3025
        %v3050 = vunpack.c.h.b16 %v3025
        %v3051 = vunpack.c.l.b16 %v3026
        %v3052 = vunpack.c.h.b16 %v3026
        %v3053 = vunpack.c.l.b16 %v3027
        %v3054 = vunpack.c.h.b16 %v3027
        %v3055 = vunpack.c.l.b16 %v3028
        %v3056 = vunpack.c.h.b16 %v3028
        %v3057 = vunpack.c.l.b16 %v3029
        %v3058 = vunpack.c.h.b16 %v3029
        %v3059 = vunpack.c.l.b16 %v3030
        %v3060 = vunpack.c.h.b16 %v3030
        %v3061 = vunpack.c.l.b16 %v3031
        %v3062 = vunpack.c.h.b16 %v3031
        %v3063 = vunpack.c.l.b16 %v3032
        %v3064 = vunpack.c.h.b16 %v3032
        %v3065 = vunpack.c.l.b16 %v3033
        %v3066 = vunpack.c.h.b16 %v3033
        %v3067 = vpack.c.b16 %v3047, %v3045
        %v3068 = vpack.c.b16 %v3048, %v3046
        %v3069 = vpack.c.b16 %v3051, %v3049
        %v3070 = vpack.c.b16 %v3052, %v3050
        %v3071 = vpack.c.b16 %v3055, %v3053
        %v3072 = vpack.c.b16 %v3056, %v3054
        %v3073 = vpack.c.b16 %v3059, %v3057
        %v3074 = vpack.c.b16 %v3060, %v3058
        %v3075 = vpack.c.b16 %v3063, %v3061
        %v3076 = vpack.c.b16 %v3064, %v3062
        %v3077 = vpack.c.b16 %v3065, %v3065
        %v3078 = vpack.c.b16 %v3066, %v3066
        %vm3089 = vcmask 662528
        %v3091 = vsel %vm3089, %v3020, 0
        %vm3093 = vcmask 1040384
        %v3094 = vsel 0, 4294967295, 65535
        %v3095 = vsel %vm3093, %v3094, 0
        %v3097 = vand.u32 %v3077, %v3095
        %v3100 = vand.u32 %v3078, %v3095
        %3102 = vmatpush.bf16.msra.mxu0 0
        %3103 = vmatpush.bf16.msra.mxu0 0
        %3104 = vmatpush.bf16.msra.mxu0 %v3097
        %3105 = vmatpush.bf16.msra.mxu0 %v3075
        %3106 = vmatpush.bf16.msra.mxu0 %v3073
        %3107 = vmatpush.bf16.msra.mxu0 %v3071
        %3108 = vmatpush.bf16.msra.mxu0 %v3069
        %3109 = vmatpush.bf16.msra.mxu0 %v3067
        %3110 = vmatmul.bf16.gmra.mxu0 %v3091
        %v3111 = vpop.f32.mrf.mxu0
        %v3112 = vadd.f32 0.0, %v3111
        %v3113 = vpop.f32.mrf.mxu0
        %3114 = vdwg.mxu0
        %3115 = vmatpush.bf16.msra.mxu0 0
        %3116 = vmatpush.bf16.msra.mxu0 0
        %3117 = vmatpush.bf16.msra.mxu0 %v3100
        %3118 = vmatpush.bf16.msra.mxu0 %v3076
        %3119 = vmatpush.bf16.msra.mxu0 %v3074
        %3120 = vmatpush.bf16.msra.mxu0 %v3072
        %3121 = vmatpush.bf16.msra.mxu0 %v3070
        %3122 = vmatpush.bf16.msra.mxu0 %v3068
        %3123 = vmatmul.bf16.gmra.mxu0 %v3091
        %v3124 = vpop.f32.mrf.mxu0
        %v3125 = vadd.f32 0.0, %v3124
        %v3126 = vpop.f32.mrf.mxu0
        %3127 = vdwg.mxu0
        %v3130 = vrot.slane %v3125, 7
        %v3131 = vsel %vm3093, %v3112, %v3130
        %v3133 = vadd.f32 %v3022, %v3131
        %s3134 = scalar_lea.vmem %s214, 88
        %v3135 = vld [vmem:[%s3134] sm:$0xff]
        %v3136 = vld [vmem:[%s3134 + $0x8] sm:$0xff]
        %v3137 = vld [vmem:[%s3134 + $0x10] sm:$0xff]
        %v3138 = vld [vmem:[%s3134 + $0x18] sm:$0xff]
        %v3139 = vld [vmem:[%s3134 + $0x20] sm:$0xff]
        %v3140 = vld [vmem:[%s3134 + $0x28] sm:$0xff]
        %v3141 = vld [vmem:[%s3134 + $0x30] sm:$0xff]
        %v3142 = vld [vmem:[%s3134 + $0x38] sm:$0xff]
        %v3143 = vld [vmem:[%s3134 + $0x40] sm:$0xff]
        %v3144 = vld [vmem:[%s3134 + $0x48] sm:$0xff]
        %v3145 = vld [vmem:[%s3134 + $0x50] sm:$0x11]
        %v3147 = vunpack.c.l.b16 %v3020
        %v3148 = vpack.c.b16 %v3147, %v3147
        %v3150 = vshrl.u32 %v3148, 16
        %v3163 = vunpack.c.l.b16 %v3135
        %v3164 = vunpack.c.h.b16 %v3135
        %v3165 = vunpack.c.l.b16 %v3136
        %v3166 = vunpack.c.h.b16 %v3136
        %v3167 = vunpack.c.l.b16 %v3137
        %v3168 = vunpack.c.h.b16 %v3137
        %v3169 = vunpack.c.l.b16 %v3138
        %v3170 = vunpack.c.h.b16 %v3138
        %v3171 = vunpack.c.l.b16 %v3139
        %v3172 = vunpack.c.h.b16 %v3139
        %v3173 = vunpack.c.l.b16 %v3140
        %v3174 = vunpack.c.h.b16 %v3140
        %v3175 = vunpack.c.l.b16 %v3141
        %v3176 = vunpack.c.h.b16 %v3141
        %v3177 = vunpack.c.l.b16 %v3142
        %v3178 = vunpack.c.h.b16 %v3142
        %v3179 = vunpack.c.l.b16 %v3143
        %v3180 = vunpack.c.h.b16 %v3143
        %v3181 = vunpack.c.l.b16 %v3144
        %v3182 = vunpack.c.h.b16 %v3144
        %v3183 = vunpack.c.l.b16 %v3145
        %v3184 = vunpack.c.h.b16 %v3145
        %v3185 = vpack.c.b16 %v3165, %v3163
        %v3186 = vpack.c.b16 %v3166, %v3164
        %v3187 = vpack.c.b16 %v3169, %v3167
        %v3188 = vpack.c.b16 %v3170, %v3168
        %v3189 = vpack.c.b16 %v3173, %v3171
        %v3190 = vpack.c.b16 %v3174, %v3172
        %v3191 = vpack.c.b16 %v3177, %v3175
        %v3192 = vpack.c.b16 %v3178, %v3176
        %v3193 = vpack.c.b16 %v3181, %v3179
        %v3194 = vpack.c.b16 %v3182, %v3180
        %v3195 = vpack.c.b16 %v3183, %v3183
        %v3196 = vpack.c.b16 %v3184, %v3184
        %v3208 = vsel %vm3089, %v3150, 0
        %v3211 = vand.u32 %v3195, %v3095
        %v3214 = vand.u32 %v3196, %v3095
        %3216 = vmatpush.bf16.msra.mxu0 0
        %3217 = vmatpush.bf16.msra.mxu0 0
        %3218 = vmatpush.bf16.msra.mxu0 %v3211
        %3219 = vmatpush.bf16.msra.mxu0 %v3193
        %3220 = vmatpush.bf16.msra.mxu0 %v3191
        %3221 = vmatpush.bf16.msra.mxu0 %v3189
        %3222 = vmatpush.bf16.msra.mxu0 %v3187
        %3223 = vmatpush.bf16.msra.mxu0 %v3185
        %3224 = vmatmul.bf16.gmra.mxu0 %v3208
        %v3225 = vpop.f32.mrf.mxu0
        %v3226 = vadd.f32 0.0, %v3225
        %v3227 = vpop.f32.mrf.mxu0
        %3228 = vdwg.mxu0
        %3229 = vmatpush.bf16.msra.mxu0 0
        %3230 = vmatpush.bf16.msra.mxu0 0
        %3231 = vmatpush.bf16.msra.mxu0 %v3214
        %3232 = vmatpush.bf16.msra.mxu0 %v3194
        %3233 = vmatpush.bf16.msra.mxu0 %v3192
        %3234 = vmatpush.bf16.msra.mxu0 %v3190
        %3235 = vmatpush.bf16.msra.mxu0 %v3188
        %3236 = vmatpush.bf16.msra.mxu0 %v3186
        %3237 = vmatmul.bf16.gmra.mxu0 %v3208
        %v3238 = vpop.f32.mrf.mxu0
        %v3239 = vadd.f32 0.0, %v3238
        %v3240 = vpop.f32.mrf.mxu0
        %3241 = vdwg.mxu0
        %v3244 = vrot.slane %v3239, 7
        %v3245 = vsel %vm3093, %v3226, %v3244
        %v3247 = vadd.f32 %v3133, %v3245
        %s3248 = scalar_lea.vmem %s214, 176
        %v3249 = vld [vmem:[%s3248] sm:$0xff]
        %v3250 = vld [vmem:[%s3248 + $0x8] sm:$0xff]
        %v3251 = vld [vmem:[%s3248 + $0x10] sm:$0xff]
        %v3252 = vld [vmem:[%s3248 + $0x18] sm:$0xff]
        %v3253 = vld [vmem:[%s3248 + $0x20] sm:$0xff]
        %v3254 = vld [vmem:[%s3248 + $0x28] sm:$0xff]
        %v3255 = vld [vmem:[%s3248 + $0x30] sm:$0xff]
        %v3256 = vld [vmem:[%s3248 + $0x38] sm:$0xff]
        %v3257 = vld [vmem:[%s3248 + $0x40] sm:$0xff]
        %v3258 = vld [vmem:[%s3248 + $0x48] sm:$0xff]
        %v3259 = vld [vmem:[%s3248 + $0x50] sm:$0x11]
        %v3260 = vrot.slane %v3148, 1
        %v3272 = vunpack.c.l.b16 %v3249
        %v3273 = vunpack.c.h.b16 %v3249
        %v3274 = vunpack.c.l.b16 %v3250
        %v3275 = vunpack.c.h.b16 %v3250
        %v3276 = vunpack.c.l.b16 %v3251
        %v3277 = vunpack.c.h.b16 %v3251
        %v3278 = vunpack.c.l.b16 %v3252
        %v3279 = vunpack.c.h.b16 %v3252
        %v3280 = vunpack.c.l.b16 %v3253
        %v3281 = vunpack.c.h.b16 %v3253
        %v3282 = vunpack.c.l.b16 %v3254
        %v3283 = vunpack.c.h.b16 %v3254
        %v3284 = vunpack.c.l.b16 %v3255
        %v3285 = vunpack.c.h.b16 %v3255
        %v3286 = vunpack.c.l.b16 %v3256
        %v3287 = vunpack.c.h.b16 %v3256
        %v3288 = vunpack.c.l.b16 %v3257
        %v3289 = vunpack.c.h.b16 %v3257
        %v3290 = vunpack.c.l.b16 %v3258
        %v3291 = vunpack.c.h.b16 %v3258
        %v3292 = vunpack.c.l.b16 %v3259
        %v3293 = vunpack.c.h.b16 %v3259
        %v3294 = vpack.c.b16 %v3274, %v3272
        %v3295 = vpack.c.b16 %v3275, %v3273
        %v3296 = vpack.c.b16 %v3278, %v3276
        %v3297 = vpack.c.b16 %v3279, %v3277
        %v3298 = vpack.c.b16 %v3282, %v3280
        %v3299 = vpack.c.b16 %v3283, %v3281
        %v3300 = vpack.c.b16 %v3286, %v3284
        %v3301 = vpack.c.b16 %v3287, %v3285
        %v3302 = vpack.c.b16 %v3290, %v3288
        %v3303 = vpack.c.b16 %v3291, %v3289
        %v3304 = vpack.c.b16 %v3292, %v3292
        %v3305 = vpack.c.b16 %v3293, %v3293
        %v3317 = vsel %vm3089, %v3260, 0
        %v3320 = vand.u32 %v3304, %v3095
        %v3323 = vand.u32 %v3305, %v3095
        %3325 = vmatpush.bf16.msra.mxu0 0
        %3326 = vmatpush.bf16.msra.mxu0 0
        %3327 = vmatpush.bf16.msra.mxu0 %v3320
        %3328 = vmatpush.bf16.msra.mxu0 %v3302
        %3329 = vmatpush.bf16.msra.mxu0 %v3300
        %3330 = vmatpush.bf16.msra.mxu0 %v3298
        %3331 = vmatpush.bf16.msra.mxu0 %v3296
        %3332 = vmatpush.bf16.msra.mxu0 %v3294
        %3333 = vmatmul.bf16.gmra.mxu0 %v3317
        %v3334 = vpop.f32.mrf.mxu0
        %v3335 = vadd.f32 0.0, %v3334
        %v3336 = vpop.f32.mrf.mxu0
        %3337 = vdwg.mxu0
        %3338 = vmatpush.bf16.msra.mxu0 0
        %3339 = vmatpush.bf16.msra.mxu0 0
        %3340 = vmatpush.bf16.msra.mxu0 %v3323
        %3341 = vmatpush.bf16.msra.mxu0 %v3303
        %3342 = vmatpush.bf16.msra.mxu0 %v3301
        %3343 = vmatpush.bf16.msra.mxu0 %v3299
        %3344 = vmatpush.bf16.msra.mxu0 %v3297
        %3345 = vmatpush.bf16.msra.mxu0 %v3295
        %3346 = vmatmul.bf16.gmra.mxu0 %v3317
        %v3347 = vpop.f32.mrf.mxu0
        %v3348 = vadd.f32 0.0, %v3347
        %v3349 = vpop.f32.mrf.mxu0
        %3350 = vdwg.mxu0
        %v3353 = vrot.slane %v3348, 7
        %v3354 = vsel %vm3093, %v3335, %v3353
        %v3356 = vadd.f32 %v3247, %v3354
        %s3357 = scalar_lea.vmem %s214, 264
        %v3358 = vld [vmem:[%s3357] sm:$0xff]
        %v3359 = vld [vmem:[%s3357 + $0x8] sm:$0xff]
        %v3360 = vld [vmem:[%s3357 + $0x10] sm:$0xff]
        %v3361 = vld [vmem:[%s3357 + $0x18] sm:$0xff]
        %v3362 = vld [vmem:[%s3357 + $0x20] sm:$0xff]
        %v3363 = vld [vmem:[%s3357 + $0x28] sm:$0xff]
        %v3364 = vld [vmem:[%s3357 + $0x30] sm:$0xff]
        %v3365 = vld [vmem:[%s3357 + $0x38] sm:$0xff]
        %v3366 = vld [vmem:[%s3357 + $0x40] sm:$0xff]
        %v3367 = vld [vmem:[%s3357 + $0x48] sm:$0xff]
        %v3368 = vld [vmem:[%s3357 + $0x50] sm:$0x11]
        %v3369 = vrot.slane %v3150, 1
        %v3381 = vunpack.c.l.b16 %v3358
        %v3382 = vunpack.c.h.b16 %v3358
        %v3383 = vunpack.c.l.b16 %v3359
        %v3384 = vunpack.c.h.b16 %v3359
        %v3385 = vunpack.c.l.b16 %v3360
        %v3386 = vunpack.c.h.b16 %v3360
        %v3387 = vunpack.c.l.b16 %v3361
        %v3388 = vunpack.c.h.b16 %v3361
        %v3389 = vunpack.c.l.b16 %v3362
        %v3390 = vunpack.c.h.b16 %v3362
        %v3391 = vunpack.c.l.b16 %v3363
        %v3392 = vunpack.c.h.b16 %v3363
        %v3393 = vunpack.c.l.b16 %v3364
        %v3394 = vunpack.c.h.b16 %v3364
        %v3395 = vunpack.c.l.b16 %v3365
        %v3396 = vunpack.c.h.b16 %v3365
        %v3397 = vunpack.c.l.b16 %v3366
        %v3398 = vunpack.c.h.b16 %v3366
        %v3399 = vunpack.c.l.b16 %v3367
        %v3400 = vunpack.c.h.b16 %v3367
        %v3401 = vunpack.c.l.b16 %v3368
        %v3402 = vunpack.c.h.b16 %v3368
        %v3403 = vpack.c.b16 %v3383, %v3381
        %v3404 = vpack.c.b16 %v3384, %v3382
        %v3405 = vpack.c.b16 %v3387, %v3385
        %v3406 = vpack.c.b16 %v3388, %v3386
        %v3407 = vpack.c.b16 %v3391, %v3389
        %v3408 = vpack.c.b16 %v3392, %v3390
        %v3409 = vpack.c.b16 %v3395, %v3393
        %v3410 = vpack.c.b16 %v3396, %v3394
        %v3411 = vpack.c.b16 %v3399, %v3397
        %v3412 = vpack.c.b16 %v3400, %v3398
        %v3413 = vpack.c.b16 %v3401, %v3401
        %v3414 = vpack.c.b16 %v3402, %v3402
        %v3426 = vsel %vm3089, %v3369, 0
        %v3429 = vand.u32 %v3413, %v3095
        %v3432 = vand.u32 %v3414, %v3095
        %3434 = vmatpush.bf16.msra.mxu0 0
        %3435 = vmatpush.bf16.msra.mxu0 0
        %3436 = vmatpush.bf16.msra.mxu0 %v3429
        %3437 = vmatpush.bf16.msra.mxu0 %v3411
        %3438 = vmatpush.bf16.msra.mxu0 %v3409
        %3439 = vmatpush.bf16.msra.mxu0 %v3407
        %3440 = vmatpush.bf16.msra.mxu0 %v3405
        %3441 = vmatpush.bf16.msra.mxu0 %v3403
        %3442 = vmatmul.bf16.gmra.mxu0 %v3426
        %v3443 = vpop.f32.mrf.mxu0
        %v3444 = vadd.f32 0.0, %v3443
        %v3445 = vpop.f32.mrf.mxu0
        %3446 = vdwg.mxu0
        %3447 = vmatpush.bf16.msra.mxu0 0
        %3448 = vmatpush.bf16.msra.mxu0 0
        %3449 = vmatpush.bf16.msra.mxu0 %v3432
        %3450 = vmatpush.bf16.msra.mxu0 %v3412
        %3451 = vmatpush.bf16.msra.mxu0 %v3410
        %3452 = vmatpush.bf16.msra.mxu0 %v3408
        %3453 = vmatpush.bf16.msra.mxu0 %v3406
        %3454 = vmatpush.bf16.msra.mxu0 %v3404
        %3455 = vmatmul.bf16.gmra.mxu0 %v3426
        %v3456 = vpop.f32.mrf.mxu0
        %v3457 = vadd.f32 0.0, %v3456
        %v3458 = vpop.f32.mrf.mxu0
        %3459 = vdwg.mxu0
        %v3462 = vrot.slane %v3457, 7
        %v3463 = vsel %vm3093, %v3444, %v3462
        %v3465 = vadd.f32 %v3356, %v3463
        %s3466 = scalar_lea.vmem %s214, 352
        %v3467 = vld [vmem:[%s3466] sm:$0xff]
        %v3468 = vld [vmem:[%s3466 + $0x8] sm:$0xff]
        %v3469 = vld [vmem:[%s3466 + $0x10] sm:$0xff]
        %v3470 = vld [vmem:[%s3466 + $0x18] sm:$0xff]
        %v3471 = vld [vmem:[%s3466 + $0x20] sm:$0xff]
        %v3472 = vld [vmem:[%s3466 + $0x28] sm:$0xff]
        %v3473 = vld [vmem:[%s3466 + $0x30] sm:$0xff]
        %v3474 = vld [vmem:[%s3466 + $0x38] sm:$0xff]
        %v3475 = vld [vmem:[%s3466 + $0x40] sm:$0xff]
        %v3476 = vld [vmem:[%s3466 + $0x48] sm:$0xff]
        %v3477 = vld [vmem:[%s3466 + $0x50] sm:$0x11]
        %v3478 = vrot.slane %v3148, 2
        %v3490 = vunpack.c.l.b16 %v3467
        %v3491 = vunpack.c.h.b16 %v3467
        %v3492 = vunpack.c.l.b16 %v3468
        %v3493 = vunpack.c.h.b16 %v3468
        %v3494 = vunpack.c.l.b16 %v3469
        %v3495 = vunpack.c.h.b16 %v3469
        %v3496 = vunpack.c.l.b16 %v3470
        %v3497 = vunpack.c.h.b16 %v3470
        %v3498 = vunpack.c.l.b16 %v3471
        %v3499 = vunpack.c.h.b16 %v3471
        %v3500 = vunpack.c.l.b16 %v3472
        %v3501 = vunpack.c.h.b16 %v3472
        %v3502 = vunpack.c.l.b16 %v3473
        %v3503 = vunpack.c.h.b16 %v3473
        %v3504 = vunpack.c.l.b16 %v3474
        %v3505 = vunpack.c.h.b16 %v3474
        %v3506 = vunpack.c.l.b16 %v3475
        %v3507 = vunpack.c.h.b16 %v3475
        %v3508 = vunpack.c.l.b16 %v3476
        %v3509 = vunpack.c.h.b16 %v3476
        %v3510 = vunpack.c.l.b16 %v3477
        %v3511 = vunpack.c.h.b16 %v3477
        %v3512 = vpack.c.b16 %v3492, %v3490
        %v3513 = vpack.c.b16 %v3493, %v3491
        %v3514 = vpack.c.b16 %v3496, %v3494
        %v3515 = vpack.c.b16 %v3497, %v3495
        %v3516 = vpack.c.b16 %v3500, %v3498
        %v3517 = vpack.c.b16 %v3501, %v3499
        %v3518 = vpack.c.b16 %v3504, %v3502
        %v3519 = vpack.c.b16 %v3505, %v3503
        %v3520 = vpack.c.b16 %v3508, %v3506
        %v3521 = vpack.c.b16 %v3509, %v3507
        %v3522 = vpack.c.b16 %v3510, %v3510
        %v3523 = vpack.c.b16 %v3511, %v3511
        %v3535 = vsel %vm3089, %v3478, 0
        %v3538 = vand.u32 %v3522, %v3095
        %v3541 = vand.u32 %v3523, %v3095
        %3543 = vmatpush.bf16.msra.mxu0 0
        %3544 = vmatpush.bf16.msra.mxu0 0
        %3545 = vmatpush.bf16.msra.mxu0 %v3538
        %3546 = vmatpush.bf16.msra.mxu0 %v3520
        %3547 = vmatpush.bf16.msra.mxu0 %v3518
        %3548 = vmatpush.bf16.msra.mxu0 %v3516
        %3549 = vmatpush.bf16.msra.mxu0 %v3514
        %3550 = vmatpush.bf16.msra.mxu0 %v3512
        %3551 = vmatmul.bf16.gmra.mxu0 %v3535
        %v3552 = vpop.f32.mrf.mxu0
        %v3553 = vadd.f32 0.0, %v3552
        %v3554 = vpop.f32.mrf.mxu0
        %3555 = vdwg.mxu0
        %3556 = vmatpush.bf16.msra.mxu0 0
        %3557 = vmatpush.bf16.msra.mxu0 0
        %3558 = vmatpush.bf16.msra.mxu0 %v3541
        %3559 = vmatpush.bf16.msra.mxu0 %v3521
        %3560 = vmatpush.bf16.msra.mxu0 %v3519
        %3561 = vmatpush.bf16.msra.mxu0 %v3517
        %3562 = vmatpush.bf16.msra.mxu0 %v3515
        %3563 = vmatpush.bf16.msra.mxu0 %v3513
        %3564 = vmatmul.bf16.gmra.mxu0 %v3535
        %v3565 = vpop.f32.mrf.mxu0
        %v3566 = vadd.f32 0.0, %v3565
        %v3567 = vpop.f32.mrf.mxu0
        %3568 = vdwg.mxu0
        %v3571 = vrot.slane %v3566, 7
        %v3572 = vsel %vm3093, %v3553, %v3571
        %v3574 = vadd.f32 %v3465, %v3572
        %s3575 = scalar_lea.vmem %s214, 440
        %v3576 = vld [vmem:[%s3575] sm:$0xff]
        %v3577 = vld [vmem:[%s3575 + $0x8] sm:$0xff]
        %v3578 = vld [vmem:[%s3575 + $0x10] sm:$0xff]
        %v3579 = vld [vmem:[%s3575 + $0x18] sm:$0xff]
        %v3580 = vld [vmem:[%s3575 + $0x20] sm:$0xff]
        %v3581 = vld [vmem:[%s3575 + $0x28] sm:$0xff]
        %v3582 = vld [vmem:[%s3575 + $0x30] sm:$0xff]
        %v3583 = vld [vmem:[%s3575 + $0x38] sm:$0xff]
        %v3584 = vld [vmem:[%s3575 + $0x40] sm:$0xff]
        %v3585 = vld [vmem:[%s3575 + $0x48] sm:$0xff]
        %v3586 = vld [vmem:[%s3575 + $0x50] sm:$0x11]
        %v3587 = vrot.slane %v3150, 2
        %v3599 = vunpack.c.l.b16 %v3576
        %v3600 = vunpack.c.h.b16 %v3576
        %v3601 = vunpack.c.l.b16 %v3577
        %v3602 = vunpack.c.h.b16 %v3577
        %v3603 = vunpack.c.l.b16 %v3578
        %v3604 = vunpack.c.h.b16 %v3578
        %v3605 = vunpack.c.l.b16 %v3579
        %v3606 = vunpack.c.h.b16 %v3579
        %v3607 = vunpack.c.l.b16 %v3580
        %v3608 = vunpack.c.h.b16 %v3580
        %v3609 = vunpack.c.l.b16 %v3581
        %v3610 = vunpack.c.h.b16 %v3581
        %v3611 = vunpack.c.l.b16 %v3582
        %v3612 = vunpack.c.h.b16 %v3582
        %v3613 = vunpack.c.l.b16 %v3583
        %v3614 = vunpack.c.h.b16 %v3583
        %v3615 = vunpack.c.l.b16 %v3584
        %v3616 = vunpack.c.h.b16 %v3584
        %v3617 = vunpack.c.l.b16 %v3585
        %v3618 = vunpack.c.h.b16 %v3585
        %v3619 = vunpack.c.l.b16 %v3586
        %v3620 = vunpack.c.h.b16 %v3586
        %v3621 = vpack.c.b16 %v3601, %v3599
        %v3622 = vpack.c.b16 %v3602, %v3600
        %v3623 = vpack.c.b16 %v3605, %v3603
        %v3624 = vpack.c.b16 %v3606, %v3604
        %v3625 = vpack.c.b16 %v3609, %v3607
        %v3626 = vpack.c.b16 %v3610, %v3608
        %v3627 = vpack.c.b16 %v3613, %v3611
        %v3628 = vpack.c.b16 %v3614, %v3612
        %v3629 = vpack.c.b16 %v3617, %v3615
        %v3630 = vpack.c.b16 %v3618, %v3616
        %v3631 = vpack.c.b16 %v3619, %v3619
        %v3632 = vpack.c.b16 %v3620, %v3620
        %v3644 = vsel %vm3089, %v3587, 0
        %v3647 = vand.u32 %v3631, %v3095
        %v3650 = vand.u32 %v3632, %v3095
        %3652 = vmatpush.bf16.msra.mxu0 0
        %3653 = vmatpush.bf16.msra.mxu0 0
        %3654 = vmatpush.bf16.msra.mxu0 %v3647
        %3655 = vmatpush.bf16.msra.mxu0 %v3629
        %3656 = vmatpush.bf16.msra.mxu0 %v3627
        %3657 = vmatpush.bf16.msra.mxu0 %v3625
        %3658 = vmatpush.bf16.msra.mxu0 %v3623
        %3659 = vmatpush.bf16.msra.mxu0 %v3621
        %3660 = vmatmul.bf16.gmra.mxu0 %v3644
        %v3661 = vpop.f32.mrf.mxu0
        %v3662 = vadd.f32 0.0, %v3661
        %v3663 = vpop.f32.mrf.mxu0
        %3664 = vdwg.mxu0
        %3665 = vmatpush.bf16.msra.mxu0 0
        %3666 = vmatpush.bf16.msra.mxu0 0
        %3667 = vmatpush.bf16.msra.mxu0 %v3650
        %3668 = vmatpush.bf16.msra.mxu0 %v3630
        %3669 = vmatpush.bf16.msra.mxu0 %v3628
        %3670 = vmatpush.bf16.msra.mxu0 %v3626
        %3671 = vmatpush.bf16.msra.mxu0 %v3624
        %3672 = vmatpush.bf16.msra.mxu0 %v3622
        %3673 = vmatmul.bf16.gmra.mxu0 %v3644
        %v3674 = vpop.f32.mrf.mxu0
        %v3675 = vadd.f32 0.0, %v3674
        %v3676 = vpop.f32.mrf.mxu0
        %3677 = vdwg.mxu0
        %v3680 = vrot.slane %v3675, 7
        %v3681 = vsel %vm3093, %v3662, %v3680
        %v3683 = vadd.f32 %v3574, %v3681
        %s3684 = scalar_lea.vmem %s214, 528
        %v3685 = vld [vmem:[%s3684] sm:$0xff]
        %v3686 = vld [vmem:[%s3684 + $0x8] sm:$0xff]
        %v3687 = vld [vmem:[%s3684 + $0x10] sm:$0xff]
        %v3688 = vld [vmem:[%s3684 + $0x18] sm:$0xff]
        %v3689 = vld [vmem:[%s3684 + $0x20] sm:$0xff]
        %v3690 = vld [vmem:[%s3684 + $0x28] sm:$0xff]
        %v3691 = vld [vmem:[%s3684 + $0x30] sm:$0xff]
        %v3692 = vld [vmem:[%s3684 + $0x38] sm:$0xff]
        %v3693 = vld [vmem:[%s3684 + $0x40] sm:$0xff]
        %v3694 = vld [vmem:[%s3684 + $0x48] sm:$0xff]
        %v3695 = vld [vmem:[%s3684 + $0x50] sm:$0x11]
        %v3696 = vrot.slane %v3148, 3
        %v3708 = vunpack.c.l.b16 %v3685
        %v3709 = vunpack.c.h.b16 %v3685
        %v3710 = vunpack.c.l.b16 %v3686
        %v3711 = vunpack.c.h.b16 %v3686
        %v3712 = vunpack.c.l.b16 %v3687
        %v3713 = vunpack.c.h.b16 %v3687
        %v3714 = vunpack.c.l.b16 %v3688
        %v3715 = vunpack.c.h.b16 %v3688
        %v3716 = vunpack.c.l.b16 %v3689
        %v3717 = vunpack.c.h.b16 %v3689
        %v3718 = vunpack.c.l.b16 %v3690
        %v3719 = vunpack.c.h.b16 %v3690
        %v3720 = vunpack.c.l.b16 %v3691
        %v3721 = vunpack.c.h.b16 %v3691
        %v3722 = vunpack.c.l.b16 %v3692
        %v3723 = vunpack.c.h.b16 %v3692
        %v3724 = vunpack.c.l.b16 %v3693
        %v3725 = vunpack.c.h.b16 %v3693
        %v3726 = vunpack.c.l.b16 %v3694
        %v3727 = vunpack.c.h.b16 %v3694
        %v3728 = vunpack.c.l.b16 %v3695
        %v3729 = vunpack.c.h.b16 %v3695
        %v3730 = vpack.c.b16 %v3710, %v3708
        %v3731 = vpack.c.b16 %v3711, %v3709
        %v3732 = vpack.c.b16 %v3714, %v3712
        %v3733 = vpack.c.b16 %v3715, %v3713
        %v3734 = vpack.c.b16 %v3718, %v3716
        %v3735 = vpack.c.b16 %v3719, %v3717
        %v3736 = vpack.c.b16 %v3722, %v3720
        %v3737 = vpack.c.b16 %v3723, %v3721
        %v3738 = vpack.c.b16 %v3726, %v3724
        %v3739 = vpack.c.b16 %v3727, %v3725
        %v3740 = vpack.c.b16 %v3728, %v3728
        %v3741 = vpack.c.b16 %v3729, %v3729
        %v3753 = vsel %vm3089, %v3696, 0
        %v3756 = vand.u32 %v3740, %v3095
        %v3759 = vand.u32 %v3741, %v3095
        %3761 = vmatpush.bf16.msra.mxu0 0
        %3762 = vmatpush.bf16.msra.mxu0 0
        %3763 = vmatpush.bf16.msra.mxu0 %v3756
        %3764 = vmatpush.bf16.msra.mxu0 %v3738
        %3765 = vmatpush.bf16.msra.mxu0 %v3736
        %3766 = vmatpush.bf16.msra.mxu0 %v3734
        %3767 = vmatpush.bf16.msra.mxu0 %v3732
        %3768 = vmatpush.bf16.msra.mxu0 %v3730
        %3769 = vmatmul.bf16.gmra.mxu0 %v3753
        %v3770 = vpop.f32.mrf.mxu0
        %v3771 = vadd.f32 0.0, %v3770
        %v3772 = vpop.f32.mrf.mxu0
        %3773 = vdwg.mxu0
        %3774 = vmatpush.bf16.msra.mxu0 0
        %3775 = vmatpush.bf16.msra.mxu0 0
        %3776 = vmatpush.bf16.msra.mxu0 %v3759
        %3777 = vmatpush.bf16.msra.mxu0 %v3739
        %3778 = vmatpush.bf16.msra.mxu0 %v3737
        %3779 = vmatpush.bf16.msra.mxu0 %v3735
        %3780 = vmatpush.bf16.msra.mxu0 %v3733
        %3781 = vmatpush.bf16.msra.mxu0 %v3731
        %3782 = vmatmul.bf16.gmra.mxu0 %v3753
        %v3783 = vpop.f32.mrf.mxu0
        %v3784 = vadd.f32 0.0, %v3783
        %v3785 = vpop.f32.mrf.mxu0
        %3786 = vdwg.mxu0
        %v3789 = vrot.slane %v3784, 7
        %v3790 = vsel %vm3093, %v3771, %v3789
        %v3792 = vadd.f32 %v3683, %v3790
        %s3793 = scalar_lea.vmem %s214, 616
        %v3794 = vld [vmem:[%s3793] sm:$0xff]
        %v3795 = vld [vmem:[%s3793 + $0x8] sm:$0xff]
        %v3796 = vld [vmem:[%s3793 + $0x10] sm:$0xff]
        %v3797 = vld [vmem:[%s3793 + $0x18] sm:$0xff]
        %v3798 = vld [vmem:[%s3793 + $0x20] sm:$0xff]
        %v3799 = vld [vmem:[%s3793 + $0x28] sm:$0xff]
        %v3800 = vld [vmem:[%s3793 + $0x30] sm:$0xff]
        %v3801 = vld [vmem:[%s3793 + $0x38] sm:$0xff]
        %v3802 = vld [vmem:[%s3793 + $0x40] sm:$0xff]
        %v3803 = vld [vmem:[%s3793 + $0x48] sm:$0xff]
        %v3804 = vld [vmem:[%s3793 + $0x50] sm:$0x11]
        %v3805 = vrot.slane %v3150, 3
        %v3817 = vunpack.c.l.b16 %v3794
        %v3818 = vunpack.c.h.b16 %v3794
        %v3819 = vunpack.c.l.b16 %v3795
        %v3820 = vunpack.c.h.b16 %v3795
        %v3821 = vunpack.c.l.b16 %v3796
        %v3822 = vunpack.c.h.b16 %v3796
        %v3823 = vunpack.c.l.b16 %v3797
        %v3824 = vunpack.c.h.b16 %v3797
        %v3825 = vunpack.c.l.b16 %v3798
        %v3826 = vunpack.c.h.b16 %v3798
        %v3827 = vunpack.c.l.b16 %v3799
        %v3828 = vunpack.c.h.b16 %v3799
        %v3829 = vunpack.c.l.b16 %v3800
        %v3830 = vunpack.c.h.b16 %v3800
        %v3831 = vunpack.c.l.b16 %v3801
        %v3832 = vunpack.c.h.b16 %v3801
        %v3833 = vunpack.c.l.b16 %v3802
        %v3834 = vunpack.c.h.b16 %v3802
        %v3835 = vunpack.c.l.b16 %v3803
        %v3836 = vunpack.c.h.b16 %v3803
        %v3837 = vunpack.c.l.b16 %v3804
        %v3838 = vunpack.c.h.b16 %v3804
        %v3839 = vpack.c.b16 %v3819, %v3817
        %v3840 = vpack.c.b16 %v3820, %v3818
        %v3841 = vpack.c.b16 %v3823, %v3821
        %v3842 = vpack.c.b16 %v3824, %v3822
        %v3843 = vpack.c.b16 %v3827, %v3825
        %v3844 = vpack.c.b16 %v3828, %v3826
        %v3845 = vpack.c.b16 %v3831, %v3829
        %v3846 = vpack.c.b16 %v3832, %v3830
        %v3847 = vpack.c.b16 %v3835, %v3833
        %v3848 = vpack.c.b16 %v3836, %v3834
        %v3849 = vpack.c.b16 %v3837, %v3837
        %v3850 = vpack.c.b16 %v3838, %v3838
        %v3862 = vsel %vm3089, %v3805, 0
        %v3865 = vand.u32 %v3849, %v3095
        %v3868 = vand.u32 %v3850, %v3095
        %3870 = vmatpush.bf16.msra.mxu0 0
        %3871 = vmatpush.bf16.msra.mxu0 0
        %3872 = vmatpush.bf16.msra.mxu0 %v3865
        %3873 = vmatpush.bf16.msra.mxu0 %v3847
        %3874 = vmatpush.bf16.msra.mxu0 %v3845
        %3875 = vmatpush.bf16.msra.mxu0 %v3843
        %3876 = vmatpush.bf16.msra.mxu0 %v3841
        %3877 = vmatpush.bf16.msra.mxu0 %v3839
        %3878 = vmatmul.bf16.gmra.mxu0 %v3862
        %v3879 = vpop.f32.mrf.mxu0
        %v3880 = vadd.f32 0.0, %v3879
        %v3881 = vpop.f32.mrf.mxu0
        %3882 = vdwg.mxu0
        %3883 = vmatpush.bf16.msra.mxu0 0
        %3884 = vmatpush.bf16.msra.mxu0 0
        %3885 = vmatpush.bf16.msra.mxu0 %v3868
        %3886 = vmatpush.bf16.msra.mxu0 %v3848
        %3887 = vmatpush.bf16.msra.mxu0 %v3846
        %3888 = vmatpush.bf16.msra.mxu0 %v3844
        %3889 = vmatpush.bf16.msra.mxu0 %v3842
        %3890 = vmatpush.bf16.msra.mxu0 %v3840
        %3891 = vmatmul.bf16.gmra.mxu0 %v3862
        %v3892 = vpop.f32.mrf.mxu0
        %v3893 = vadd.f32 0.0, %v3892
        %v3894 = vpop.f32.mrf.mxu0
        %3895 = vdwg.mxu0
        %v3898 = vrot.slane %v3893, 7
        %v3899 = vsel %vm3093, %v3880, %v3898
        %v3901 = vadd.f32 %v3792, %v3899
        %s3902 = scalar_lea.vmem %s214, 704
        %v3903 = vld [vmem:[%s3902] sm:$0xff]
        %v3904 = vld [vmem:[%s3902 + $0x8] sm:$0xff]
        %v3905 = vld [vmem:[%s3902 + $0x10] sm:$0xff]
        %v3906 = vld [vmem:[%s3902 + $0x18] sm:$0xff]
        %v3907 = vld [vmem:[%s3902 + $0x20] sm:$0xff]
        %v3908 = vld [vmem:[%s3902 + $0x28] sm:$0xff]
        %v3909 = vld [vmem:[%s3902 + $0x30] sm:$0xff]
        %v3910 = vld [vmem:[%s3902 + $0x38] sm:$0xff]
        %v3911 = vld [vmem:[%s3902 + $0x40] sm:$0xff]
        %v3912 = vld [vmem:[%s3902 + $0x48] sm:$0xff]
        %v3913 = vld [vmem:[%s3902 + $0x50] sm:$0x11]
        %v3925 = vunpack.c.l.b16 %v3903
        %v3926 = vunpack.c.h.b16 %v3903
        %v3927 = vunpack.c.l.b16 %v3904
        %v3928 = vunpack.c.h.b16 %v3904
        %v3929 = vunpack.c.l.b16 %v3905
        %v3930 = vunpack.c.h.b16 %v3905
        %v3931 = vunpack.c.l.b16 %v3906
        %v3932 = vunpack.c.h.b16 %v3906
        %v3933 = vunpack.c.l.b16 %v3907
        %v3934 = vunpack.c.h.b16 %v3907
        %v3935 = vunpack.c.l.b16 %v3908
        %v3936 = vunpack.c.h.b16 %v3908
        %v3937 = vunpack.c.l.b16 %v3909
        %v3938 = vunpack.c.h.b16 %v3909
        %v3939 = vunpack.c.l.b16 %v3910
        %v3940 = vunpack.c.h.b16 %v3910
        %v3941 = vunpack.c.l.b16 %v3911
        %v3942 = vunpack.c.h.b16 %v3911
        %v3943 = vunpack.c.l.b16 %v3912
        %v3944 = vunpack.c.h.b16 %v3912
        %v3945 = vunpack.c.l.b16 %v3913
        %v3946 = vunpack.c.h.b16 %v3913
        %v3947 = vpack.c.b16 %v3927, %v3925
        %v3948 = vpack.c.b16 %v3928, %v3926
        %v3949 = vpack.c.b16 %v3931, %v3929
        %v3950 = vpack.c.b16 %v3932, %v3930
        %v3951 = vpack.c.b16 %v3935, %v3933
        %v3952 = vpack.c.b16 %v3936, %v3934
        %v3953 = vpack.c.b16 %v3939, %v3937
        %v3954 = vpack.c.b16 %v3940, %v3938
        %v3955 = vpack.c.b16 %v3943, %v3941
        %v3956 = vpack.c.b16 %v3944, %v3942
        %v3957 = vpack.c.b16 %v3945, %v3945
        %v3958 = vpack.c.b16 %v3946, %v3946
        %v3970 = vsel %vm3089, %v3021, 0
        %v3973 = vand.u32 %v3957, %v3095
        %v3976 = vand.u32 %v3958, %v3095
        %3978 = vmatpush.bf16.msra.mxu0 0
        %3979 = vmatpush.bf16.msra.mxu0 0
        %3980 = vmatpush.bf16.msra.mxu0 %v3973
        %3981 = vmatpush.bf16.msra.mxu0 %v3955
        %3982 = vmatpush.bf16.msra.mxu0 %v3953
        %3983 = vmatpush.bf16.msra.mxu0 %v3951
        %3984 = vmatpush.bf16.msra.mxu0 %v3949
        %3985 = vmatpush.bf16.msra.mxu0 %v3947
        %3986 = vmatmul.bf16.gmra.mxu0 %v3970
        %v3987 = vpop.f32.mrf.mxu0
        %v3988 = vadd.f32 0.0, %v3987
        %v3989 = vpop.f32.mrf.mxu0
        %3990 = vdwg.mxu0
        %3991 = vmatpush.bf16.msra.mxu0 0
        %3992 = vmatpush.bf16.msra.mxu0 0
        %3993 = vmatpush.bf16.msra.mxu0 %v3976
        %3994 = vmatpush.bf16.msra.mxu0 %v3956
        %3995 = vmatpush.bf16.msra.mxu0 %v3954
        %3996 = vmatpush.bf16.msra.mxu0 %v3952
        %3997 = vmatpush.bf16.msra.mxu0 %v3950
        %3998 = vmatpush.bf16.msra.mxu0 %v3948
        %3999 = vmatmul.bf16.gmra.mxu0 %v3970
        %v4000 = vpop.f32.mrf.mxu0
        %v4001 = vadd.f32 0.0, %v4000
        %v4002 = vpop.f32.mrf.mxu0
        %4003 = vdwg.mxu0
        %v4006 = vrot.slane %v4001, 7
        %v4007 = vsel %vm3093, %v3988, %v4006
        %v4009 = vadd.f32 %v3901, %v4007
        %s4010 = scalar_lea.vmem %s214, 792
        %v4011 = vld [vmem:[%s4010] sm:$0xff]
        %v4012 = vld [vmem:[%s4010 + $0x8] sm:$0xff]
        %v4013 = vld [vmem:[%s4010 + $0x10] sm:$0xff]
        %v4014 = vld [vmem:[%s4010 + $0x18] sm:$0xff]
        %v4015 = vld [vmem:[%s4010 + $0x20] sm:$0xff]
        %v4016 = vld [vmem:[%s4010 + $0x28] sm:$0xff]
        %v4017 = vld [vmem:[%s4010 + $0x30] sm:$0xff]
        %v4018 = vld [vmem:[%s4010 + $0x38] sm:$0xff]
        %v4019 = vld [vmem:[%s4010 + $0x40] sm:$0xff]
        %v4020 = vld [vmem:[%s4010 + $0x48] sm:$0xff]
        %v4021 = vld [vmem:[%s4010 + $0x50] sm:$0x11]
        %v4023 = vunpack.c.l.b16 %v3021
        %v4024 = vpack.c.b16 %v4023, %v4023
        %v4026 = vshrl.u32 %v4024, 16
        %v4039 = vunpack.c.l.b16 %v4011
        %v4040 = vunpack.c.h.b16 %v4011
        %v4041 = vunpack.c.l.b16 %v4012
        %v4042 = vunpack.c.h.b16 %v4012
        %v4043 = vunpack.c.l.b16 %v4013
        %v4044 = vunpack.c.h.b16 %v4013
        %v4045 = vunpack.c.l.b16 %v4014
        %v4046 = vunpack.c.h.b16 %v4014
        %v4047 = vunpack.c.l.b16 %v4015
        %v4048 = vunpack.c.h.b16 %v4015
        %v4049 = vunpack.c.l.b16 %v4016
        %v4050 = vunpack.c.h.b16 %v4016
        %v4051 = vunpack.c.l.b16 %v4017
        %v4052 = vunpack.c.h.b16 %v4017
        %v4053 = vunpack.c.l.b16 %v4018
        %v4054 = vunpack.c.h.b16 %v4018
        %v4055 = vunpack.c.l.b16 %v4019
        %v4056 = vunpack.c.h.b16 %v4019
        %v4057 = vunpack.c.l.b16 %v4020
        %v4058 = vunpack.c.h.b16 %v4020
        %v4059 = vunpack.c.l.b16 %v4021
        %v4060 = vunpack.c.h.b16 %v4021
        %v4061 = vpack.c.b16 %v4041, %v4039
        %v4062 = vpack.c.b16 %v4042, %v4040
        %v4063 = vpack.c.b16 %v4045, %v4043
        %v4064 = vpack.c.b16 %v4046, %v4044
        %v4065 = vpack.c.b16 %v4049, %v4047
        %v4066 = vpack.c.b16 %v4050, %v4048
        %v4067 = vpack.c.b16 %v4053, %v4051
        %v4068 = vpack.c.b16 %v4054, %v4052
        %v4069 = vpack.c.b16 %v4057, %v4055
        %v4070 = vpack.c.b16 %v4058, %v4056
        %v4071 = vpack.c.b16 %v4059, %v4059
        %v4072 = vpack.c.b16 %v4060, %v4060
        %v4084 = vsel %vm3089, %v4026, 0
        %v4087 = vand.u32 %v4071, %v3095
        %v4090 = vand.u32 %v4072, %v3095
        %4092 = vmatpush.bf16.msra.mxu0 0
        %4093 = vmatpush.bf16.msra.mxu0 0
        %4094 = vmatpush.bf16.msra.mxu0 %v4087
        %4095 = vmatpush.bf16.msra.mxu0 %v4069
        %4096 = vmatpush.bf16.msra.mxu0 %v4067
        %4097 = vmatpush.bf16.msra.mxu0 %v4065
        %4098 = vmatpush.bf16.msra.mxu0 %v4063
        %4099 = vmatpush.bf16.msra.mxu0 %v4061
        %4100 = vmatmul.bf16.gmra.mxu0 %v4084
        %v4101 = vpop.f32.mrf.mxu0
        %v4102 = vadd.f32 0.0, %v4101
        %v4103 = vpop.f32.mrf.mxu0
        %4104 = vdwg.mxu0
        %4105 = vmatpush.bf16.msra.mxu0 0
        %4106 = vmatpush.bf16.msra.mxu0 0
        %4107 = vmatpush.bf16.msra.mxu0 %v4090
        %4108 = vmatpush.bf16.msra.mxu0 %v4070
        %4109 = vmatpush.bf16.msra.mxu0 %v4068
        %4110 = vmatpush.bf16.msra.mxu0 %v4066
        %4111 = vmatpush.bf16.msra.mxu0 %v4064
        %4112 = vmatpush.bf16.msra.mxu0 %v4062
        %4113 = vmatmul.bf16.gmra.mxu0 %v4084
        %v4114 = vpop.f32.mrf.mxu0
        %v4115 = vadd.f32 0.0, %v4114
        %v4116 = vpop.f32.mrf.mxu0
        %4117 = vdwg.mxu0
        %v4120 = vrot.slane %v4115, 7
        %v4121 = vsel %vm3093, %v4102, %v4120
        %v4123 = vadd.f32 %v4009, %v4121
        %s4124 = scalar_lea.vmem %s214, 880
        %v4125 = vld [vmem:[%s4124] sm:$0xff]
        %v4126 = vld [vmem:[%s4124 + $0x8] sm:$0xff]
        %v4127 = vld [vmem:[%s4124 + $0x10] sm:$0xff]
        %v4128 = vld [vmem:[%s4124 + $0x18] sm:$0xff]
        %v4129 = vld [vmem:[%s4124 + $0x20] sm:$0xff]
        %v4130 = vld [vmem:[%s4124 + $0x28] sm:$0xff]
        %v4131 = vld [vmem:[%s4124 + $0x30] sm:$0xff]
        %v4132 = vld [vmem:[%s4124 + $0x38] sm:$0xff]
        %v4133 = vld [vmem:[%s4124 + $0x40] sm:$0xff]
        %v4134 = vld [vmem:[%s4124 + $0x48] sm:$0xff]
        %v4135 = vld [vmem:[%s4124 + $0x50] sm:$0x11]
        %v4136 = vrot.slane %v4024, 1
        %v4148 = vunpack.c.l.b16 %v4125
        %v4149 = vunpack.c.h.b16 %v4125
        %v4150 = vunpack.c.l.b16 %v4126
        %v4151 = vunpack.c.h.b16 %v4126
        %v4152 = vunpack.c.l.b16 %v4127
        %v4153 = vunpack.c.h.b16 %v4127
        %v4154 = vunpack.c.l.b16 %v4128
        %v4155 = vunpack.c.h.b16 %v4128
        %v4156 = vunpack.c.l.b16 %v4129
        %v4157 = vunpack.c.h.b16 %v4129
        %v4158 = vunpack.c.l.b16 %v4130
        %v4159 = vunpack.c.h.b16 %v4130
        %v4160 = vunpack.c.l.b16 %v4131
        %v4161 = vunpack.c.h.b16 %v4131
        %v4162 = vunpack.c.l.b16 %v4132
        %v4163 = vunpack.c.h.b16 %v4132
        %v4164 = vunpack.c.l.b16 %v4133
        %v4165 = vunpack.c.h.b16 %v4133
        %v4166 = vunpack.c.l.b16 %v4134
        %v4167 = vunpack.c.h.b16 %v4134
        %v4168 = vunpack.c.l.b16 %v4135
        %v4169 = vunpack.c.h.b16 %v4135
        %v4170 = vpack.c.b16 %v4150, %v4148
        %v4171 = vpack.c.b16 %v4151, %v4149
        %v4172 = vpack.c.b16 %v4154, %v4152
        %v4173 = vpack.c.b16 %v4155, %v4153
        %v4174 = vpack.c.b16 %v4158, %v4156
        %v4175 = vpack.c.b16 %v4159, %v4157
        %v4176 = vpack.c.b16 %v4162, %v4160
        %v4177 = vpack.c.b16 %v4163, %v4161
        %v4178 = vpack.c.b16 %v4166, %v4164
        %v4179 = vpack.c.b16 %v4167, %v4165
        %v4180 = vpack.c.b16 %v4168, %v4168
        %v4181 = vpack.c.b16 %v4169, %v4169
        %v4193 = vsel %vm3089, %v4136, 0
        %v4196 = vand.u32 %v4180, %v3095
        %v4199 = vand.u32 %v4181, %v3095
        %4201 = vmatpush.bf16.msra.mxu0 0
        %4202 = vmatpush.bf16.msra.mxu0 0
        %4203 = vmatpush.bf16.msra.mxu0 %v4196
        %4204 = vmatpush.bf16.msra.mxu0 %v4178
        %4205 = vmatpush.bf16.msra.mxu0 %v4176
        %4206 = vmatpush.bf16.msra.mxu0 %v4174
        %4207 = vmatpush.bf16.msra.mxu0 %v4172
        %4208 = vmatpush.bf16.msra.mxu0 %v4170
        %4209 = vmatmul.bf16.gmra.mxu0 %v4193
        %v4210 = vpop.f32.mrf.mxu0
        %v4211 = vadd.f32 0.0, %v4210
        %v4212 = vpop.f32.mrf.mxu0
        %4213 = vdwg.mxu0
        %4214 = vmatpush.bf16.msra.mxu0 0
        %4215 = vmatpush.bf16.msra.mxu0 0
        %4216 = vmatpush.bf16.msra.mxu0 %v4199
        %4217 = vmatpush.bf16.msra.mxu0 %v4179
        %4218 = vmatpush.bf16.msra.mxu0 %v4177
        %4219 = vmatpush.bf16.msra.mxu0 %v4175
        %4220 = vmatpush.bf16.msra.mxu0 %v4173
        %4221 = vmatpush.bf16.msra.mxu0 %v4171
        %4222 = vmatmul.bf16.gmra.mxu0 %v4193
        %v4223 = vpop.f32.mrf.mxu0
        %v4224 = vadd.f32 0.0, %v4223
        %v4225 = vpop.f32.mrf.mxu0
        %4226 = vdwg.mxu0
        %v4229 = vrot.slane %v4224, 7
        %v4230 = vsel %vm3093, %v4211, %v4229
        %v4232 = vadd.f32 %v4123, %v4230
        %s4233 = scalar_lea.vmem %s214, 968
        %v4234 = vld [vmem:[%s4233] sm:$0xff]
        %v4235 = vld [vmem:[%s4233 + $0x8] sm:$0xff]
        %v4236 = vld [vmem:[%s4233 + $0x10] sm:$0xff]
        %v4237 = vld [vmem:[%s4233 + $0x18] sm:$0xff]
        %v4238 = vld [vmem:[%s4233 + $0x20] sm:$0xff]
        %v4239 = vld [vmem:[%s4233 + $0x28] sm:$0xff]
        %v4240 = vld [vmem:[%s4233 + $0x30] sm:$0xff]
        %v4241 = vld [vmem:[%s4233 + $0x38] sm:$0xff]
        %v4242 = vld [vmem:[%s4233 + $0x40] sm:$0xff]
        %v4243 = vld [vmem:[%s4233 + $0x48] sm:$0xff]
        %v4244 = vld [vmem:[%s4233 + $0x50] sm:$0x11]
        %v4245 = vrot.slane %v4026, 1
        %v4257 = vunpack.c.l.b16 %v4234
        %v4258 = vunpack.c.h.b16 %v4234
        %v4259 = vunpack.c.l.b16 %v4235
        %v4260 = vunpack.c.h.b16 %v4235
        %v4261 = vunpack.c.l.b16 %v4236
        %v4262 = vunpack.c.h.b16 %v4236
        %v4263 = vunpack.c.l.b16 %v4237
        %v4264 = vunpack.c.h.b16 %v4237
        %v4265 = vunpack.c.l.b16 %v4238
        %v4266 = vunpack.c.h.b16 %v4238
        %v4267 = vunpack.c.l.b16 %v4239
        %v4268 = vunpack.c.h.b16 %v4239
        %v4269 = vunpack.c.l.b16 %v4240
        %v4270 = vunpack.c.h.b16 %v4240
        %v4271 = vunpack.c.l.b16 %v4241
        %v4272 = vunpack.c.h.b16 %v4241
        %v4273 = vunpack.c.l.b16 %v4242
        %v4274 = vunpack.c.h.b16 %v4242
        %v4275 = vunpack.c.l.b16 %v4243
        %v4276 = vunpack.c.h.b16 %v4243
        %v4277 = vunpack.c.l.b16 %v4244
        %v4278 = vunpack.c.h.b16 %v4244
        %v4279 = vpack.c.b16 %v4259, %v4257
        %v4280 = vpack.c.b16 %v4260, %v4258
        %v4281 = vpack.c.b16 %v4263, %v4261
        %v4282 = vpack.c.b16 %v4264, %v4262
        %v4283 = vpack.c.b16 %v4267, %v4265
        %v4284 = vpack.c.b16 %v4268, %v4266
        %v4285 = vpack.c.b16 %v4271, %v4269
        %v4286 = vpack.c.b16 %v4272, %v4270
        %v4287 = vpack.c.b16 %v4275, %v4273
        %v4288 = vpack.c.b16 %v4276, %v4274
        %v4289 = vpack.c.b16 %v4277, %v4277
        %v4290 = vpack.c.b16 %v4278, %v4278
        %v4302 = vsel %vm3089, %v4245, 0
        %v4305 = vand.u32 %v4289, %v3095
        %v4308 = vand.u32 %v4290, %v3095
        %4310 = vmatpush.bf16.msra.mxu0 0
        %4311 = vmatpush.bf16.msra.mxu0 0
        %4312 = vmatpush.bf16.msra.mxu0 %v4305
        %4313 = vmatpush.bf16.msra.mxu0 %v4287
        %4314 = vmatpush.bf16.msra.mxu0 %v4285
        %4315 = vmatpush.bf16.msra.mxu0 %v4283
        %4316 = vmatpush.bf16.msra.mxu0 %v4281
        %4317 = vmatpush.bf16.msra.mxu0 %v4279
        %4318 = vmatmul.bf16.gmra.mxu0 %v4302
        %v4319 = vpop.f32.mrf.mxu0
        %v4320 = vadd.f32 0.0, %v4319
        %v4321 = vpop.f32.mrf.mxu0
        %4322 = vdwg.mxu0
        %4323 = vmatpush.bf16.msra.mxu0 0
        %4324 = vmatpush.bf16.msra.mxu0 0
        %4325 = vmatpush.bf16.msra.mxu0 %v4308
        %4326 = vmatpush.bf16.msra.mxu0 %v4288
        %4327 = vmatpush.bf16.msra.mxu0 %v4286
        %4328 = vmatpush.bf16.msra.mxu0 %v4284
        %4329 = vmatpush.bf16.msra.mxu0 %v4282
        %4330 = vmatpush.bf16.msra.mxu0 %v4280
        %4331 = vmatmul.bf16.gmra.mxu0 %v4302
        %v4332 = vpop.f32.mrf.mxu0
        %v4333 = vadd.f32 0.0, %v4332
        %v4334 = vpop.f32.mrf.mxu0
        %4335 = vdwg.mxu0
        %v4338 = vrot.slane %v4333, 7
        %v4339 = vsel %vm3093, %v4320, %v4338
        %v4341 = vadd.f32 %v4232, %v4339
        %s4342 = scalar_lea.vmem %s214, 1056
        %v4343 = vld [vmem:[%s4342] sm:$0xff]
        %v4344 = vld [vmem:[%s4342 + $0x8] sm:$0xff]
        %v4345 = vld [vmem:[%s4342 + $0x10] sm:$0xff]
        %v4346 = vld [vmem:[%s4342 + $0x18] sm:$0xff]
        %v4347 = vld [vmem:[%s4342 + $0x20] sm:$0xff]
        %v4348 = vld [vmem:[%s4342 + $0x28] sm:$0xff]
        %v4349 = vld [vmem:[%s4342 + $0x30] sm:$0xff]
        %v4350 = vld [vmem:[%s4342 + $0x38] sm:$0xff]
        %v4351 = vld [vmem:[%s4342 + $0x40] sm:$0xff]
        %v4352 = vld [vmem:[%s4342 + $0x48] sm:$0xff]
        %v4353 = vld [vmem:[%s4342 + $0x50] sm:$0x11]
        %v4354 = vrot.slane %v4024, 2
        %v4366 = vunpack.c.l.b16 %v4343
        %v4367 = vunpack.c.h.b16 %v4343
        %v4368 = vunpack.c.l.b16 %v4344
        %v4369 = vunpack.c.h.b16 %v4344
        %v4370 = vunpack.c.l.b16 %v4345
        %v4371 = vunpack.c.h.b16 %v4345
        %v4372 = vunpack.c.l.b16 %v4346
        %v4373 = vunpack.c.h.b16 %v4346
        %v4374 = vunpack.c.l.b16 %v4347
        %v4375 = vunpack.c.h.b16 %v4347
        %v4376 = vunpack.c.l.b16 %v4348
        %v4377 = vunpack.c.h.b16 %v4348
        %v4378 = vunpack.c.l.b16 %v4349
        %v4379 = vunpack.c.h.b16 %v4349
        %v4380 = vunpack.c.l.b16 %v4350
        %v4381 = vunpack.c.h.b16 %v4350
        %v4382 = vunpack.c.l.b16 %v4351
        %v4383 = vunpack.c.h.b16 %v4351
        %v4384 = vunpack.c.l.b16 %v4352
        %v4385 = vunpack.c.h.b16 %v4352
        %v4386 = vunpack.c.l.b16 %v4353
        %v4387 = vunpack.c.h.b16 %v4353
        %v4388 = vpack.c.b16 %v4368, %v4366
        %v4389 = vpack.c.b16 %v4369, %v4367
        %v4390 = vpack.c.b16 %v4372, %v4370
        %v4391 = vpack.c.b16 %v4373, %v4371
        %v4392 = vpack.c.b16 %v4376, %v4374
        %v4393 = vpack.c.b16 %v4377, %v4375
        %v4394 = vpack.c.b16 %v4380, %v4378
        %v4395 = vpack.c.b16 %v4381, %v4379
        %v4396 = vpack.c.b16 %v4384, %v4382
        %v4397 = vpack.c.b16 %v4385, %v4383
        %v4398 = vpack.c.b16 %v4386, %v4386
        %v4399 = vpack.c.b16 %v4387, %v4387
        %v4411 = vsel %vm3089, %v4354, 0
        %v4414 = vand.u32 %v4398, %v3095
        %v4417 = vand.u32 %v4399, %v3095
        %4419 = vmatpush.bf16.msra.mxu0 0
        %4420 = vmatpush.bf16.msra.mxu0 0
        %4421 = vmatpush.bf16.msra.mxu0 %v4414
        %4422 = vmatpush.bf16.msra.mxu0 %v4396
        %4423 = vmatpush.bf16.msra.mxu0 %v4394
        %4424 = vmatpush.bf16.msra.mxu0 %v4392
        %4425 = vmatpush.bf16.msra.mxu0 %v4390
        %4426 = vmatpush.bf16.msra.mxu0 %v4388
        %4427 = vmatmul.bf16.gmra.mxu0 %v4411
        %v4428 = vpop.f32.mrf.mxu0
        %v4429 = vadd.f32 0.0, %v4428
        %v4430 = vpop.f32.mrf.mxu0
        %4431 = vdwg.mxu0
        %4432 = vmatpush.bf16.msra.mxu0 0
        %4433 = vmatpush.bf16.msra.mxu0 0
        %4434 = vmatpush.bf16.msra.mxu0 %v4417
        %4435 = vmatpush.bf16.msra.mxu0 %v4397
        %4436 = vmatpush.bf16.msra.mxu0 %v4395
        %4437 = vmatpush.bf16.msra.mxu0 %v4393
        %4438 = vmatpush.bf16.msra.mxu0 %v4391
        %4439 = vmatpush.bf16.msra.mxu0 %v4389
        %4440 = vmatmul.bf16.gmra.mxu0 %v4411
        %v4441 = vpop.f32.mrf.mxu0
        %v4442 = vadd.f32 0.0, %v4441
        %v4443 = vpop.f32.mrf.mxu0
        %4444 = vdwg.mxu0
        %v4447 = vrot.slane %v4442, 7
        %v4448 = vsel %vm3093, %v4429, %v4447
        %v4450 = vadd.f32 %v4341, %v4448
        %s4451 = scalar_lea.vmem %s214, 1144
        %v4452 = vld [vmem:[%s4451] sm:$0xff]
        %v4453 = vld [vmem:[%s4451 + $0x8] sm:$0xff]
        %v4454 = vld [vmem:[%s4451 + $0x10] sm:$0xff]
        %v4455 = vld [vmem:[%s4451 + $0x18] sm:$0xff]
        %v4456 = vld [vmem:[%s4451 + $0x20] sm:$0xff]
        %v4457 = vld [vmem:[%s4451 + $0x28] sm:$0xff]
        %v4458 = vld [vmem:[%s4451 + $0x30] sm:$0xff]
        %v4459 = vld [vmem:[%s4451 + $0x38] sm:$0xff]
        %v4460 = vld [vmem:[%s4451 + $0x40] sm:$0xff]
        %v4461 = vld [vmem:[%s4451 + $0x48] sm:$0xff]
        %v4462 = vld [vmem:[%s4451 + $0x50] sm:$0x11]
        %v4463 = vrot.slane %v4026, 2
        %v4475 = vunpack.c.l.b16 %v4452
        %v4476 = vunpack.c.h.b16 %v4452
        %v4477 = vunpack.c.l.b16 %v4453
        %v4478 = vunpack.c.h.b16 %v4453
        %v4479 = vunpack.c.l.b16 %v4454
        %v4480 = vunpack.c.h.b16 %v4454
        %v4481 = vunpack.c.l.b16 %v4455
        %v4482 = vunpack.c.h.b16 %v4455
        %v4483 = vunpack.c.l.b16 %v4456
        %v4484 = vunpack.c.h.b16 %v4456
        %v4485 = vunpack.c.l.b16 %v4457
        %v4486 = vunpack.c.h.b16 %v4457
        %v4487 = vunpack.c.l.b16 %v4458
        %v4488 = vunpack.c.h.b16 %v4458
        %v4489 = vunpack.c.l.b16 %v4459
        %v4490 = vunpack.c.h.b16 %v4459
        %v4491 = vunpack.c.l.b16 %v4460
        %v4492 = vunpack.c.h.b16 %v4460
        %v4493 = vunpack.c.l.b16 %v4461
        %v4494 = vunpack.c.h.b16 %v4461
        %v4495 = vunpack.c.l.b16 %v4462
        %v4496 = vunpack.c.h.b16 %v4462
        %v4497 = vpack.c.b16 %v4477, %v4475
        %v4498 = vpack.c.b16 %v4478, %v4476
        %v4499 = vpack.c.b16 %v4481, %v4479
        %v4500 = vpack.c.b16 %v4482, %v4480
        %v4501 = vpack.c.b16 %v4485, %v4483
        %v4502 = vpack.c.b16 %v4486, %v4484
        %v4503 = vpack.c.b16 %v4489, %v4487
        %v4504 = vpack.c.b16 %v4490, %v4488
        %v4505 = vpack.c.b16 %v4493, %v4491
        %v4506 = vpack.c.b16 %v4494, %v4492
        %v4507 = vpack.c.b16 %v4495, %v4495
        %v4508 = vpack.c.b16 %v4496, %v4496
        %v4520 = vsel %vm3089, %v4463, 0
        %v4523 = vand.u32 %v4507, %v3095
        %v4526 = vand.u32 %v4508, %v3095
        %4528 = vmatpush.bf16.msra.mxu0 0
        %4529 = vmatpush.bf16.msra.mxu0 0
        %4530 = vmatpush.bf16.msra.mxu0 %v4523
        %4531 = vmatpush.bf16.msra.mxu0 %v4505
        %4532 = vmatpush.bf16.msra.mxu0 %v4503
        %4533 = vmatpush.bf16.msra.mxu0 %v4501
        %4534 = vmatpush.bf16.msra.mxu0 %v4499
        %4535 = vmatpush.bf16.msra.mxu0 %v4497
        %4536 = vmatmul.bf16.gmra.mxu0 %v4520
        %v4537 = vpop.f32.mrf.mxu0
        %v4538 = vadd.f32 0.0, %v4537
        %v4539 = vpop.f32.mrf.mxu0
        %4540 = vdwg.mxu0
        %4541 = vmatpush.bf16.msra.mxu0 0
        %4542 = vmatpush.bf16.msra.mxu0 0
        %4543 = vmatpush.bf16.msra.mxu0 %v4526
        %4544 = vmatpush.bf16.msra.mxu0 %v4506
        %4545 = vmatpush.bf16.msra.mxu0 %v4504
        %4546 = vmatpush.bf16.msra.mxu0 %v4502
        %4547 = vmatpush.bf16.msra.mxu0 %v4500
        %4548 = vmatpush.bf16.msra.mxu0 %v4498
        %4549 = vmatmul.bf16.gmra.mxu0 %v4520
        %v4550 = vpop.f32.mrf.mxu0
        %v4551 = vadd.f32 0.0, %v4550
        %v4552 = vpop.f32.mrf.mxu0
        %4553 = vdwg.mxu0
        %v4556 = vrot.slane %v4551, 7
        %v4557 = vsel %vm3093, %v4538, %v4556
        %v4559 = vadd.f32 %v4450, %v4557
        %s4560 = scalar_lea.vmem %s214, 1232
        %v4561 = vld [vmem:[%s4560] sm:$0xff]
        %v4562 = vld [vmem:[%s4560 + $0x8] sm:$0xff]
        %v4563 = vld [vmem:[%s4560 + $0x10] sm:$0xff]
        %v4564 = vld [vmem:[%s4560 + $0x18] sm:$0xff]
        %v4565 = vld [vmem:[%s4560 + $0x20] sm:$0xff]
        %v4566 = vld [vmem:[%s4560 + $0x28] sm:$0xff]
        %v4567 = vld [vmem:[%s4560 + $0x30] sm:$0xff]
        %v4568 = vld [vmem:[%s4560 + $0x38] sm:$0xff]
        %v4569 = vld [vmem:[%s4560 + $0x40] sm:$0xff]
        %v4570 = vld [vmem:[%s4560 + $0x48] sm:$0xff]
        %v4571 = vld [vmem:[%s4560 + $0x50] sm:$0x11]
        %v4572 = vrot.slane %v4024, 3
        %v4584 = vunpack.c.l.b16 %v4561
        %v4585 = vunpack.c.h.b16 %v4561
        %v4586 = vunpack.c.l.b16 %v4562
        %v4587 = vunpack.c.h.b16 %v4562
        %v4588 = vunpack.c.l.b16 %v4563
        %v4589 = vunpack.c.h.b16 %v4563
        %v4590 = vunpack.c.l.b16 %v4564
        %v4591 = vunpack.c.h.b16 %v4564
        %v4592 = vunpack.c.l.b16 %v4565
        %v4593 = vunpack.c.h.b16 %v4565
        %v4594 = vunpack.c.l.b16 %v4566
        %v4595 = vunpack.c.h.b16 %v4566
        %v4596 = vunpack.c.l.b16 %v4567
        %v4597 = vunpack.c.h.b16 %v4567
        %v4598 = vunpack.c.l.b16 %v4568
        %v4599 = vunpack.c.h.b16 %v4568
        %v4600 = vunpack.c.l.b16 %v4569
        %v4601 = vunpack.c.h.b16 %v4569
        %v4602 = vunpack.c.l.b16 %v4570
        %v4603 = vunpack.c.h.b16 %v4570
        %v4604 = vunpack.c.l.b16 %v4571
        %v4605 = vunpack.c.h.b16 %v4571
        %v4606 = vpack.c.b16 %v4586, %v4584
        %v4607 = vpack.c.b16 %v4587, %v4585
        %v4608 = vpack.c.b16 %v4590, %v4588
        %v4609 = vpack.c.b16 %v4591, %v4589
        %v4610 = vpack.c.b16 %v4594, %v4592
        %v4611 = vpack.c.b16 %v4595, %v4593
        %v4612 = vpack.c.b16 %v4598, %v4596
        %v4613 = vpack.c.b16 %v4599, %v4597
        %v4614 = vpack.c.b16 %v4602, %v4600
        %v4615 = vpack.c.b16 %v4603, %v4601
        %v4616 = vpack.c.b16 %v4604, %v4604
        %v4617 = vpack.c.b16 %v4605, %v4605
        %v4629 = vsel %vm3089, %v4572, 0
        %v4632 = vand.u32 %v4616, %v3095
        %v4635 = vand.u32 %v4617, %v3095
        %4637 = vmatpush.bf16.msra.mxu0 0
        %4638 = vmatpush.bf16.msra.mxu0 0
        %4639 = vmatpush.bf16.msra.mxu0 %v4632
        %4640 = vmatpush.bf16.msra.mxu0 %v4614
        %4641 = vmatpush.bf16.msra.mxu0 %v4612
        %4642 = vmatpush.bf16.msra.mxu0 %v4610
        %4643 = vmatpush.bf16.msra.mxu0 %v4608
        %4644 = vmatpush.bf16.msra.mxu0 %v4606
        %4645 = vmatmul.bf16.gmra.mxu0 %v4629
        %v4646 = vpop.f32.mrf.mxu0
        %v4647 = vadd.f32 0.0, %v4646
        %v4648 = vpop.f32.mrf.mxu0
        %4649 = vdwg.mxu0
        %4650 = vmatpush.bf16.msra.mxu0 0
        %4651 = vmatpush.bf16.msra.mxu0 0
        %4652 = vmatpush.bf16.msra.mxu0 %v4635
        %4653 = vmatpush.bf16.msra.mxu0 %v4615
        %4654 = vmatpush.bf16.msra.mxu0 %v4613
        %4655 = vmatpush.bf16.msra.mxu0 %v4611
        %4656 = vmatpush.bf16.msra.mxu0 %v4609
        %4657 = vmatpush.bf16.msra.mxu0 %v4607
        %4658 = vmatmul.bf16.gmra.mxu0 %v4629
        %v4659 = vpop.f32.mrf.mxu0
        %v4660 = vadd.f32 0.0, %v4659
        %v4661 = vpop.f32.mrf.mxu0
        %4662 = vdwg.mxu0
        %v4665 = vrot.slane %v4660, 7
        %v4666 = vsel %vm3093, %v4647, %v4665
        %v4668 = vadd.f32 %v4559, %v4666
        %s4669 = scalar_lea.vmem %s214, 1320
        %v4670 = vld [vmem:[%s4669] sm:$0xff]
        %v4671 = vld [vmem:[%s4669 + $0x8] sm:$0xff]
        %v4672 = vld [vmem:[%s4669 + $0x10] sm:$0xff]
        %v4673 = vld [vmem:[%s4669 + $0x18] sm:$0xff]
        %v4674 = vld [vmem:[%s4669 + $0x20] sm:$0xff]
        %v4675 = vld [vmem:[%s4669 + $0x28] sm:$0xff]
        %v4676 = vld [vmem:[%s4669 + $0x30] sm:$0xff]
        %v4677 = vld [vmem:[%s4669 + $0x38] sm:$0xff]
        %v4678 = vld [vmem:[%s4669 + $0x40] sm:$0xff]
        %v4679 = vld [vmem:[%s4669 + $0x48] sm:$0xff]
        %v4680 = vld [vmem:[%s4669 + $0x50] sm:$0x11]
        %v4681 = vrot.slane %v4026, 3
        %v4693 = vunpack.c.l.b16 %v4670
        %v4694 = vunpack.c.h.b16 %v4670
        %v4695 = vunpack.c.l.b16 %v4671
        %v4696 = vunpack.c.h.b16 %v4671
        %v4697 = vunpack.c.l.b16 %v4672
        %v4698 = vunpack.c.h.b16 %v4672
        %v4699 = vunpack.c.l.b16 %v4673
        %v4700 = vunpack.c.h.b16 %v4673
        %v4701 = vunpack.c.l.b16 %v4674
        %v4702 = vunpack.c.h.b16 %v4674
        %v4703 = vunpack.c.l.b16 %v4675
        %v4704 = vunpack.c.h.b16 %v4675
        %v4705 = vunpack.c.l.b16 %v4676
        %v4706 = vunpack.c.h.b16 %v4676
        %v4707 = vunpack.c.l.b16 %v4677
        %v4708 = vunpack.c.h.b16 %v4677
        %v4709 = vunpack.c.l.b16 %v4678
        %v4710 = vunpack.c.h.b16 %v4678
        %v4711 = vunpack.c.l.b16 %v4679
        %v4712 = vunpack.c.h.b16 %v4679
        %v4713 = vunpack.c.l.b16 %v4680
        %v4714 = vunpack.c.h.b16 %v4680
        %v4715 = vpack.c.b16 %v4695, %v4693
        %v4716 = vpack.c.b16 %v4696, %v4694
        %v4717 = vpack.c.b16 %v4699, %v4697
        %v4718 = vpack.c.b16 %v4700, %v4698
        %v4719 = vpack.c.b16 %v4703, %v4701
        %v4720 = vpack.c.b16 %v4704, %v4702
        %v4721 = vpack.c.b16 %v4707, %v4705
        %v4722 = vpack.c.b16 %v4708, %v4706
        %v4723 = vpack.c.b16 %v4711, %v4709
        %v4724 = vpack.c.b16 %v4712, %v4710
        %v4725 = vpack.c.b16 %v4713, %v4713
        %v4726 = vpack.c.b16 %v4714, %v4714
        %v4738 = vsel %vm3089, %v4681, 0
        %v4741 = vand.u32 %v4725, %v3095
        %v4744 = vand.u32 %v4726, %v3095
        %4746 = vmatpush.bf16.msra.mxu0 0
        %4747 = vmatpush.bf16.msra.mxu0 0
        %4748 = vmatpush.bf16.msra.mxu0 %v4741
        %4749 = vmatpush.bf16.msra.mxu0 %v4723
        %4750 = vmatpush.bf16.msra.mxu0 %v4721
        %4751 = vmatpush.bf16.msra.mxu0 %v4719
        %4752 = vmatpush.bf16.msra.mxu0 %v4717
        %4753 = vmatpush.bf16.msra.mxu0 %v4715
        %4754 = vmatmul.bf16.gmra.mxu0 %v4738
        %v4755 = vpop.f32.mrf.mxu0
        %v4756 = vadd.f32 0.0, %v4755
        %v4757 = vpop.f32.mrf.mxu0
        %4758 = vdwg.mxu0
        %4759 = vmatpush.bf16.msra.mxu0 0
        %4760 = vmatpush.bf16.msra.mxu0 0
        %4761 = vmatpush.bf16.msra.mxu0 %v4744
        %4762 = vmatpush.bf16.msra.mxu0 %v4724
        %4763 = vmatpush.bf16.msra.mxu0 %v4722
        %4764 = vmatpush.bf16.msra.mxu0 %v4720
        %4765 = vmatpush.bf16.msra.mxu0 %v4718
        %4766 = vmatpush.bf16.msra.mxu0 %v4716
        %4767 = vmatmul.bf16.gmra.mxu0 %v4738
        %v4768 = vpop.f32.mrf.mxu0
        %v4769 = vadd.f32 0.0, %v4768
        %v4770 = vpop.f32.mrf.mxu0
        %4771 = vdwg.mxu0
        %v4774 = vrot.slane %v4769, 7
        %v4775 = vsel %vm3093, %v4756, %v4774
        %v4777 = vadd.f32 %v4668, %v4775
        %v4778 = vlaneseq
        %vm4779 = vcmp.ge.s32.totalorder %v4778, 0
        %vm4780 = vcmp.lt.s32.totalorder %v4778, 256
        %vm4781 = vmand %vm4779, %vm4780
        %4782 = vst.msk [vmem:[#allocation3] sm:$0x3] %vm4781, %v4777
        %p4783 = scmp.eq.s32.totalorder %s17, 1
        // Predicated region
        $region45: #{policy_cnn_forward.1} parent=39 // pred_check
          %p4784 = pneg %p4783
        $region46: #{policy_cnn_forward.1} parent=39 // pred_check_branch
          %4786 = sbr.rel (%p4784) target = $region48
        $region47: #{policy_cnn_forward.1} parent=39 // pred_region
          %v4787 = vld [vmem:[%s3] ss:$2 sm:$0x3]
          %v4788 = vld [vmem:[%s3 + $0x1] sm:$0x1]
          %v4789 = vadd.f32 %v4777, %v4787
          %v4790 = vmax.f32 %v4789, 0.0
          %v4792 = vperm.slane %v4790, 0
          %v4793 = vperm.slane %v4790, 1
          %v4796 = vpack.c.bf16 %v4792, %v4792
          %v4797 = vpack.c.bf16 %v4793, %v4793
          %v4798 = vld [vmem:[%s1 + $0x30] sm:$0xff]
          %v4799 = vld [vmem:[%s1 + $0x38] sm:$0xff]
          %v4800 = vld [vmem:[%s1 + $0x40] sm:$0xff]
          %v4801 = vld [vmem:[%s1 + $0x48] sm:$0xff]
          %v4802 = vld [vmem:[%s1 + $0x50] sm:$0xff]
          %v4803 = vld [vmem:[%s1 + $0x58] sm:$0xff]
          %v4804 = vld [vmem:[%s1 + $0x60] sm:$0xff]
          %v4805 = vld [vmem:[%s1 + $0x68] sm:$0xff]
          %v4806 = vld [vmem:[%s1 + $0x70] sm:$0xff]
          %v4807 = vld [vmem:[%s1 + $0x78] sm:$0xff]
          %v4808 = vld [vmem:[%s1 + $0x80] sm:$0xff]
          %v4809 = vld [vmem:[%s1 + $0x88] sm:$0xff]
          %v4810 = vld [vmem:[%s1 + $0x90] sm:$0xff]
          %v4811 = vld [vmem:[%s1 + $0x98] sm:$0xff]
          %v4812 = vld [vmem:[%s1 + $0xa0] sm:$0xff]
          %v4813 = vld [vmem:[%s1 + $0xa8] sm:$0xff]
          %v4830 = vunpack.c.l.b16 %v4798
          %v4831 = vunpack.c.h.b16 %v4798
          %v4832 = vunpack.c.l.b16 %v4799
          %v4833 = vunpack.c.h.b16 %v4799
          %v4834 = vunpack.c.l.b16 %v4800
          %v4835 = vunpack.c.h.b16 %v4800
          %v4836 = vunpack.c.l.b16 %v4801
          %v4837 = vunpack.c.h.b16 %v4801
          %v4838 = vunpack.c.l.b16 %v4802
          %v4839 = vunpack.c.h.b16 %v4802
          %v4840 = vunpack.c.l.b16 %v4803
          %v4841 = vunpack.c.h.b16 %v4803
          %v4842 = vunpack.c.l.b16 %v4804
          %v4843 = vunpack.c.h.b16 %v4804
          %v4844 = vunpack.c.l.b16 %v4805
          %v4845 = vunpack.c.h.b16 %v4805
          %v4846 = vunpack.c.l.b16 %v4806
          %v4847 = vunpack.c.h.b16 %v4806
          %v4848 = vunpack.c.l.b16 %v4807
          %v4849 = vunpack.c.h.b16 %v4807
          %v4850 = vunpack.c.l.b16 %v4808
          %v4851 = vunpack.c.h.b16 %v4808
          %v4852 = vunpack.c.l.b16 %v4809
          %v4853 = vunpack.c.h.b16 %v4809
          %v4854 = vunpack.c.l.b16 %v4810
          %v4855 = vunpack.c.h.b16 %v4810
          %v4856 = vunpack.c.l.b16 %v4811
          %v4857 = vunpack.c.h.b16 %v4811
          %v4858 = vunpack.c.l.b16 %v4812
          %v4859 = vunpack.c.h.b16 %v4812
          %v4860 = vunpack.c.l.b16 %v4813
          %v4861 = vunpack.c.h.b16 %v4813
          %v4862 = vpack.c.b16 %v4832, %v4830
          %v4863 = vpack.c.b16 %v4833, %v4831
          %v4864 = vpack.c.b16 %v4836, %v4834
          %v4865 = vpack.c.b16 %v4837, %v4835
          %v4866 = vpack.c.b16 %v4840, %v4838
          %v4867 = vpack.c.b16 %v4841, %v4839
          %v4868 = vpack.c.b16 %v4844, %v4842
          %v4869 = vpack.c.b16 %v4845, %v4843
          %v4870 = vpack.c.b16 %v4848, %v4846
          %v4871 = vpack.c.b16 %v4849, %v4847
          %v4872 = vpack.c.b16 %v4852, %v4850
          %v4873 = vpack.c.b16 %v4853, %v4851
          %v4874 = vpack.c.b16 %v4856, %v4854
          %v4875 = vpack.c.b16 %v4857, %v4855
          %v4876 = vpack.c.b16 %v4860, %v4858
          %v4877 = vpack.c.b16 %v4861, %v4859
          %4894 = vmatpush.bf16.xpose.msra.mxu0 %v4876
          %4895 = vmatpush.bf16.xpose.msra.mxu0 %v4874
          %4896 = vmatpush.bf16.xpose.msra.mxu0 %v4872
          %4897 = vmatpush.bf16.xpose.msra.mxu0 %v4870
          %4898 = vmatpush.bf16.xpose.msra.mxu0 %v4868
          %4899 = vmatpush.bf16.xpose.msra.mxu0 %v4866
          %4900 = vmatpush.bf16.xpose.msra.mxu0 %v4864
          %4901 = vmatpush.bf16.xpose.msra.mxu0 %v4862
          %4902 = vmatmul.bf16.gmra.mxu0 %v4796
          %v4903 = vpop.f32.mrf.mxu0
          %v4904 = vadd.f32 %v4788, %v4903
          %v4905 = vpop.f32.mrf.mxu0
          %4906 = vdwg.mxu0
          %4907 = vmatpush.bf16.xpose.msra.mxu0 %v4877
          %4908 = vmatpush.bf16.xpose.msra.mxu0 %v4875
          %4909 = vmatpush.bf16.xpose.msra.mxu0 %v4873
          %4910 = vmatpush.bf16.xpose.msra.mxu0 %v4871
          %4911 = vmatpush.bf16.xpose.msra.mxu0 %v4869
          %4912 = vmatpush.bf16.xpose.msra.mxu0 %v4867
          %4913 = vmatpush.bf16.xpose.msra.mxu0 %v4865
          %4914 = vmatpush.bf16.xpose.msra.mxu0 %v4863
          %4915 = vmatmul.bf16.gmra.mxu0 %v4797
          %v4916 = vpop.f32.mrf.mxu0
          %v4917 = vadd.f32 %v4904, %v4916
          %v4918 = vpop.f32.mrf.mxu0
          %4919 = vdwg.mxu0
          %4920 = vst [vmem:[#allocation4] sm:$0x1] %v4917
        $region48: #{policy_cnn_forward.1} parent=39 // pred_fallthru
          _
        // Predicated region
        $region49: #{policy_cnn_forward.1} parent=39 // pred_check
          %p4921 = pneg %p140
        $region50: #{policy_cnn_forward.1} parent=39 // pred_check_branch
          %4923 = sbr.rel (%p4921) target = $region52
        $region51: #{policy_cnn_forward.1} parent=39 // pred_region
          %4925 = vsyncadd [#allocation5], 0
          %s4927 = sshll.u32 [#allocation4], 4
          %s4928 = int_to_ptr.vmem [resolvable:$true] %s4927
          %s4929 = sshll.u32 %s5, 4
          %s4930 = int_to_ptr.hbm [resolvable:$true] %s4929
          %4932 = dma.vmem_to_hbm [thread:$0]  %s4928, 16, %s4930, [#allocation5]
        $region52: #{policy_cnn_forward.1} parent=39 // pred_fallthru
          _
        // Predicated region
        $region53: #{policy_cnn_forward.1} parent=39 // pred_check
          %p4933 = pneg %p140
        $region54: #{policy_cnn_forward.1} parent=39 // pred_check_branch
          %4935 = sbr.rel (%p4933) target = $region56
        $region55: #{policy_cnn_forward.1} parent=39 // pred_region
          %4937 = dma.done [#allocation5], 16
        $region56: #{policy_cnn_forward.1} parent=39 // pred_fallthru
          _
      $region40: #{policy_cnn_forward.1} parent=5 // pred_fallthru
        _
      %p4938 = scmp.le.s32.totalorder 2, %s12
      // Predicated region
      $region57: #{policy_cnn_forward.1} parent=5 // pred_check
        %p4939 = pneg %p4938
      $region58: #{policy_cnn_forward.1} parent=5 // pred_check_branch
        %4941 = sbr.rel (%p4939) target = $region60
      $region59: #{policy_cnn_forward.1} parent=5 // pred_region
        %s4942 = ssub.s32 %s12, 2
      $region60: #{policy_cnn_forward.1} parent=5 // pred_fallthru
        _
    $region6: #{policy_cnn_forward.1} parent=1 // loop_footer
      %s16 = sadd.s32 1, %s12
    $region7: #{policy_cnn_forward.1} parent=1 // loop_footer_branch
      %11 = sbr.rel target = $region3
    $region8: #{policy_cnn_forward.1} parent=1 // loop_exit
      _
    %4943 = vsyncpa [#allocation5], 1
    %s4944 = scalar_lea.sflag [#allocation5], 1
    %4945 = vsyncpa %s4944, 1

</llo_original>
